<compile_context>
chip_gen: v7x
topology: tpu7x:2x2x1
jax: 0.10.0
libtpu: 0.0.40
codegen_flags: <defaults>
</compile_context>

<pallas_src>
import math
import jax
import jax.numpy as jnp
from jax.experimental import pallas as pl
from jax.experimental.pallas import tpu as pltpu

IN_RAW = 28 * 28          # 784 (divisible by 8; full lane extent of the flattened x)
HID = 512
OUT_RAW = 10
OUT_PAD = 128             # one full lane width -> unmasked final store
MAX_TM = 512              # batch-tile cap: safe across v5e / v6e / v7x VMEM budgets


def _round_up(a, b):
    return -(-a // b) * b


def _choose_tm(n):
    """Adaptive batch tile: amortize per-grid-step overhead without padded-row
    waste at small N, and keep >= 2 grid steps (v7x dual-TC) when possible."""
    n128 = _round_up(n, 128)
    if n128 <= 128:
        return 128
    half = (n128 // 2) // 128 * 128   # largest 128-multiple still giving >= 2 steps
    return max(128, min(MAX_TM, half))


def mlp_kernel(x_ref, w1_ref, b1_ref, w2_ref, b2_ref, w3_ref, b3_ref, out_ref):
    # x_ref: (TM, 784) f32    w1: (784, 512) bf16   b1: (1, 512) f32
    # w2: (512, 512) bf16  b2: (1, 512) f32   w3: (512, 128) bf16  b3: (1, 128) f32
    x = x_ref[...].astype(jnp.bfloat16)            # fused cast (VPU, hidden under MXU)
    h1 = jnp.dot(x, w1_ref[...], preferred_element_type=jnp.float32) + b1_ref[...]
    h1 = jnp.maximum(h1, 0.0).astype(jnp.bfloat16)
    h2 = jnp.dot(h1, w2_ref[...], preferred_element_type=jnp.float32) + b2_ref[...]
    h2 = jnp.maximum(h2, 0.0).astype(jnp.bfloat16)
    logits = jnp.dot(h2, w3_ref[...], preferred_element_type=jnp.float32) + b3_ref[...]
    out_ref[...] = logits.astype(out_ref.dtype)


def neural_network_forward(x_nchw, params):
    """x_nchw: (N, 1, 28, 28) float32 -> logits (N, 10) float32."""
    w1, b1, w2, b2, w3, b3 = params
    n = x_nchw.shape[0]

    # nn.Flatten(): (N, 784) row-major. Only row-pad to a multiple of TM; the
    # bf16 cast happens inside the kernel (no extra HBM pass, no K padding).
    x_flat = x_nchw.reshape(n, IN_RAW).astype(jnp.float32)
    tm = _choose_tm(n)
    n_pad = _round_up(n, tm)
    if n_pad != n:
        x_flat = jnp.pad(x_flat, ((0, n_pad - n), (0, 0)))

    grid = (n_pad // tm,)

    flops = 2 * n_pad * (IN_RAW * HID + HID * HID + HID * OUT_PAD)
    bytes_accessed = (
        (IN_RAW * HID + HID * HID + HID * OUT_PAD) * 2          # bf16 weights
        + (HID + HID + OUT_PAD) * 4                             # f32 biases
        + n_pad * IN_RAW * 4                                    # f32 x
        + n_pad * OUT_PAD * 4                                   # f32 out
    )

    logits_pad = pl.pallas_call(
        mlp_kernel,
        out_shape=jax.ShapeDtypeStruct((n_pad, OUT_PAD), jnp.float32),
        grid=grid,
        in_specs=[
            pl.BlockSpec((tm, IN_RAW), lambda i: (i, 0)),       # x tile: streams per step
            pl.BlockSpec((IN_RAW, HID), lambda i: (0, 0)),      # weights/biases: resident
            pl.BlockSpec((1, HID), lambda i: (0, 0)),
            pl.BlockSpec((HID, HID), lambda i: (0, 0)),
            pl.BlockSpec((1, HID), lambda i: (0, 0)),
            pl.BlockSpec((HID, OUT_PAD), lambda i: (0, 0)),
            pl.BlockSpec((1, OUT_PAD), lambda i: (0, 0)),
        ],
        out_specs=pl.BlockSpec((tm, OUT_PAD), lambda i: (i, 0)),
        compiler_params=pltpu.CompilerParams(
            dimension_semantics=("parallel",),
            vmem_limit_bytes=32 << 20,
        ),
        cost_estimate=pl.CostEstimate(
            flops=flops, transcendentals=0, bytes_accessed=bytes_accessed
        ),
    )(x_flat, w1, b1, w2, b2, w3, b3)

    # Padded batch rows are garbage and are sliced off here; never feed them downstream.
    return logits_pad[:n, :OUT_RAW]


def init_params(key):
    """Deterministic init mirroring nn.Linear's U(-1/sqrt(fan_in), 1/sqrt(fan_in)).

    Returns kernel-ready params:
      w1 (784, 512) bf16,  b1 (1, 512) f32
      w2 (512, 512) bf16,  b2 (1, 512) f32
      w3 (512, 128) bf16 (cols >= 10 zero),  b3 (1, 128) f32 (cols >= 10 zero)
    """
    dims = [(IN_RAW, HID), (HID, HID), (HID, OUT_RAW)]
    raw = []
    for (fan_in, fan_out) in dims:
        key, kw, kb = jax.random.split(key, 3)
        bound = 1.0 / math.sqrt(fan_in)
        w = jax.random.uniform(kw, (fan_in, fan_out), jnp.float32, -bound, bound)
        b = jax.random.uniform(kb, (1, fan_out), jnp.float32, -bound, bound)
        raw += [w, b]
    w1, b1, w2, b2, w3, b3 = raw

    w1p = w1.astype(jnp.bfloat16)
    w2p = w2.astype(jnp.bfloat16)
    w3p = jnp.pad(w3, ((0, 0), (0, OUT_PAD - OUT_RAW))).astype(jnp.bfloat16)
    b3p = jnp.pad(b3, ((0, 0), (0, OUT_PAD - OUT_RAW)))
    return (w1p, b1, w2p, b2, w3p, b3p)


def _ref_forward(x_nchw, params):
    """Plain-JAX reference using identical bf16-input / f32-accumulation numerics."""
    w1, b1, w2, b2, w3, b3 = params
    xf = x_nchw.reshape(x_nchw.shape[0], IN_RAW).astype(jnp.bfloat16)
    h = jnp.maximum(jnp.dot(xf, w1, preferred_element_type=jnp.float32) + b1, 0.0)
    h = h.astype(jnp.bfloat16)
    h = jnp.maximum(jnp.dot(h, w2, preferred_element_type=jnp.float32) + b2, 0.0)
    h = h.astype(jnp.bfloat16)
    return (jnp.dot(h, w3, preferred_element_type=jnp.float32) + b3)[:, :OUT_RAW]


if __name__ == "__main__":
    key = jax.random.PRNGKey(0)
    k_x, k_x2, k_p = jax.random.split(key, 3)
    params = init_params(k_p)

    # Small inference-style batch (TM adapts to 128, single grid step).
    N1 = 8
    x1 = jax.random.normal(k_x, (N1, 1, 28, 28), jnp.float32)
    logits1 = jax.block_until_ready(neural_network_forward(x1, params))
    assert logits1.shape == (N1, OUT_RAW)
    assert jnp.allclose(logits1, _ref_forward(x1, params), atol=1e-2, rtol=1e-2)

    # Larger batch exercising the multi-step grid (adaptive TM, resident weights).
    N2 = 300
    x2 = jax.random.normal(k_x2, (N2, 1, 28, 28), jnp.float32)
    logits2 = jax.block_until_ready(neural_network_forward(x2, params))
    assert logits2.shape == (N2, OUT_RAW)
    assert jnp.allclose(logits2, _ref_forward(x2, params), atol=1e-2, rtol=1e-2)

    print("KERNEL_OK")
</pallas_src>

<mosaic_0001>
module attributes {stable_mosaic.version = 11 : i64} {
  func.func @mlp_kernel(%arg0: i32, %arg1: memref<128x784xf32, #tpu.memory_space<vmem>>, %arg2: memref<784x512xbf16, #tpu.memory_space<vmem>>, %arg3: memref<1x512xf32, #tpu.memory_space<vmem>>, %arg4: memref<512x512xbf16, #tpu.memory_space<vmem>>, %arg5: memref<1x512xf32, #tpu.memory_space<vmem>>, %arg6: memref<512x128xbf16, #tpu.memory_space<vmem>>, %arg7: memref<1x128xf32, #tpu.memory_space<vmem>>, %arg8: memref<128x128xf32, #tpu.memory_space<vmem>>) attributes {dimension_semantics = [#tpu.dimension_semantics<parallel>], iteration_bounds = array<i64: 1>, scalar_prefetch = 0 : i64, scratch_operands = 0 : i64, tpu.core_type = #tpu.core_type<tc>, window_params = [{transform_indices = @transform_0, window_bounds = array<i64: 128, 784>}, {pipeline_mode = #tpu.pipeline_mode<synchronous>, transform_indices = @transform_1, window_bounds = array<i64: 784, 512>}, {pipeline_mode = #tpu.pipeline_mode<synchronous>, transform_indices = @transform_2, window_bounds = array<i64: 1, 512>}, {pipeline_mode = #tpu.pipeline_mode<synchronous>, transform_indices = @transform_3, window_bounds = array<i64: 512, 512>}, {pipeline_mode = #tpu.pipeline_mode<synchronous>, transform_indices = @transform_4, window_bounds = array<i64: 1, 512>}, {pipeline_mode = #tpu.pipeline_mode<synchronous>, transform_indices = @transform_5, window_bounds = array<i64: 512, 128>}, {pipeline_mode = #tpu.pipeline_mode<synchronous>, transform_indices = @transform_6, window_bounds = array<i64: 1, 128>}, {transform_indices = @transform_7, window_bounds = array<i64: 128, 128>}]} {
    %c0 = arith.constant 0 : index
    %c0_0 = arith.constant 0 : index
    %0 = vector.load %arg1[%c0, %c0_0] : memref<128x784xf32, #tpu.memory_space<vmem>>, vector<128x784xf32>
    %1 = arith.truncf %0 : vector<128x784xf32> to vector<128x784xbf16>
    %c0_1 = arith.constant 0 : index
    %c0_2 = arith.constant 0 : index
    %2 = vector.load %arg2[%c0_1, %c0_2] : memref<784x512xbf16, #tpu.memory_space<vmem>>, vector<784x512xbf16>
    %cst = arith.constant dense<0.000000e+00> : vector<128x512xf32>
    %3 = tpu.matmul %1, %2, %cst {dimension_numbers = #tpu.dot_dimension_numbers<[1], [0], [0], [1], [0, 0, 1, 1], [], []>} : vector<128x784xbf16>, vector<784x512xbf16>, vector<128x512xf32> -> vector<128x512xf32>
    %c0_3 = arith.constant 0 : index
    %c0_4 = arith.constant 0 : index
    %4 = vector.load %arg3[%c0_3, %c0_4] : memref<1x512xf32, #tpu.memory_space<vmem>>, vector<1x512xf32>
    %5 = vector.broadcast %4 : vector<1x512xf32> to vector<128x512xf32>
    %6 = arith.addf %3, %5 : vector<128x512xf32>
    %cst_5 = arith.constant 0.000000e+00 : f32
    %7 = vector.broadcast %cst_5 : f32 to vector<128x512xf32>
    %8 = arith.maximumf %6, %7 : vector<128x512xf32>
    %9 = arith.truncf %8 : vector<128x512xf32> to vector<128x512xbf16>
    %c0_6 = arith.constant 0 : index
    %c0_7 = arith.constant 0 : index
    %10 = vector.load %arg4[%c0_6, %c0_7] : memref<512x512xbf16, #tpu.memory_space<vmem>>, vector<512x512xbf16>
    %cst_8 = arith.constant dense<0.000000e+00> : vector<128x512xf32>
    %11 = tpu.matmul %9, %10, %cst_8 {dimension_numbers = #tpu.dot_dimension_numbers<[1], [0], [0], [1], [0, 0, 1, 1], [], []>} : vector<128x512xbf16>, vector<512x512xbf16>, vector<128x512xf32> -> vector<128x512xf32>
    %c0_9 = arith.constant 0 : index
    %c0_10 = arith.constant 0 : index
    %12 = vector.load %arg5[%c0_9, %c0_10] : memref<1x512xf32, #tpu.memory_space<vmem>>, vector<1x512xf32>
    %13 = vector.broadcast %12 : vector<1x512xf32> to vector<128x512xf32>
    %14 = arith.addf %11, %13 : vector<128x512xf32>
    %cst_11 = arith.constant 0.000000e+00 : f32
    %15 = vector.broadcast %cst_11 : f32 to vector<128x512xf32>
    %16 = arith.maximumf %14, %15 : vector<128x512xf32>
    %17 = arith.truncf %16 : vector<128x512xf32> to vector<128x512xbf16>
    %c0_12 = arith.constant 0 : index
    %c0_13 = arith.constant 0 : index
    %18 = vector.load %arg6[%c0_12, %c0_13] : memref<512x128xbf16, #tpu.memory_space<vmem>>, vector<512x128xbf16>
    %cst_14 = arith.constant dense<0.000000e+00> : vector<128x128xf32>
    %19 = tpu.matmul %17, %18, %cst_14 {dimension_numbers = #tpu.dot_dimension_numbers<[1], [0], [0], [1], [0, 0, 1, 1], [], []>} : vector<128x512xbf16>, vector<512x128xbf16>, vector<128x128xf32> -> vector<128x128xf32>
    %c0_15 = arith.constant 0 : index
    %c0_16 = arith.constant 0 : index
    %20 = vector.load %arg7[%c0_15, %c0_16] : memref<1x128xf32, #tpu.memory_space<vmem>>, vector<1x128xf32>
    %21 = vector.broadcast %20 : vector<1x128xf32> to vector<128x128xf32>
    %22 = arith.addf %19, %21 : vector<128x128xf32>
    %c0_17 = arith.constant 0 : index
    %c0_18 = arith.constant 0 : index
    %23 = vector.load %arg8[%c0_17, %c0_18] : memref<128x128xf32, #tpu.memory_space<vmem>>, vector<128x128xf32>
    tpu.vector_store %arg8[%c0_17, %c0_18], %22 {strides = array<i32>} : memref<128x128xf32, #tpu.memory_space<vmem>>, vector<128x128xf32>,
    return
  }
  func.func @transform_0(%arg0: i32) -> (i32, i32) {
    %c0_i32 = arith.constant 0 : i32
    %c0_i32_0 = arith.constant 0 : i32
    return %arg0, %c0_i32 : i32, i32
  }
  func.func @transform_1(%arg0: i32) -> (i32, i32) {
    %c0_i32 = arith.constant 0 : i32
    %c0_i32_0 = arith.constant 0 : i32
    %c0_i32_1 = arith.constant 0 : i32
    return %c0_i32, %c0_i32_0 : i32, i32
  }
  func.func @transform_2(%arg0: i32) -> (i32, i32) {
    %c0_i32 = arith.constant 0 : i32
    %c0_i32_0 = arith.constant 0 : i32
    %c0_i32_1 = arith.constant 0 : i32
    return %c0_i32, %c0_i32_0 : i32, i32
  }
  func.func @transform_3(%arg0: i32) -> (i32, i32) {
    %c0_i32 = arith.constant 0 : i32
    %c0_i32_0 = arith.constant 0 : i32
    %c0_i32_1 = arith.constant 0 : i32
    return %c0_i32, %c0_i32_0 : i32, i32
  }
  func.func @transform_4(%arg0: i32) -> (i32, i32) {
    %c0_i32 = arith.constant 0 : i32
    %c0_i32_0 = arith.constant 0 : i32
    %c0_i32_1 = arith.constant 0 : i32
    return %c0_i32, %c0_i32_0 : i32, i32
  }
  func.func @transform_5(%arg0: i32) -> (i32, i32) {
    %c0_i32 = arith.constant 0 : i32
    %c0_i32_0 = arith.constant 0 : i32
    %c0_i32_1 = arith.constant 0 : i32
    return %c0_i32, %c0_i32_0 : i32, i32
  }
  func.func @transform_6(%arg0: i32) -> (i32, i32) {
    %c0_i32 = arith.constant 0 : i32
    %c0_i32_0 = arith.constant 0 : i32
    %c0_i32_1 = arith.constant 0 : i32
    return %c0_i32, %c0_i32_0 : i32, i32
  }
  func.func @transform_7(%arg0: i32) -> (i32, i32) {
    %c0_i32 = arith.constant 0 : i32
    %c0_i32_0 = arith.constant 0 : i32
    return %arg0, %c0_i32 : i32, i32
  }
}

</mosaic_0001>

<llo_original>
// kernel: tpu_custom_call.1
$region0: #{tpu_custom_call.1}
  #allocation0 [shape = 'u32[]', space=smem, size = 0x4, offset = 0x4, fixed_abs, tag = 'smem constant byte address 0x4 - core index']
  #allocation1 [shape = 'u32[144,128]{1,0:T(1,128)}', space=vmem, size = 0x12000, scoped, tag = 'internal scratch']
  %s0 = inlined_call_operand.vmem [shape: f32[128,784], index: 0, kind: input, shape index: {}]
  %s1 = inlined_call_operand.vmem [shape: bf16[784,512], index: 1, kind: input, shape index: {}]
  %s2 = inlined_call_operand.vmem [shape: f32[1,512], index: 2, kind: input, shape index: {}]
  %s3 = inlined_call_operand.hbm [shape: bf16[512,512], index: 3, kind: input, shape index: {}]
  %s4 = inlined_call_operand.vmem [shape: f32[1,512], index: 4, kind: input, shape index: {}]
  %s5 = inlined_call_operand.hbm [shape: bf16[512,128], index: 5, kind: input, shape index: {}]
  %s6 = inlined_call_operand.vmem [shape: f32[1,128], index: 6, kind: input, shape index: {}]
  %s7 = inlined_call_operand.hbm [shape: f32[128,128], index: 7, kind: output, shape index: {}]
  %s8 = sld [smem:[#allocation0]]
  $region46: #{tpu_custom_call.1} parent=0
    _
  %s10 = ssub.s32 1, %s8
  %s11 = scalar_select 0, %s10, %s8
  $region1: #{tpu_custom_call.1} parent=0
    #allocation2 [shape = 'u8[524288]{0}', space=vmem, size = 0x80000, scoped, tag = 'input window, operand 3, single buffered']
    #allocation3 [shape = 's32[1]{0}', space=sflag, size = 0x4, scoped, tag = 'scoped memory for tpu_custom_call.1']
    #allocation4 [shape = 's32[1]{0}', space=sflag, size = 0x4, scoped, tag = 'scoped memory for tpu_custom_call.1']
    #allocation5 [shape = 'u8[131072]{0}', space=vmem, size = 0x20000, scoped, tag = 'input window, operand 5, single buffered']
    #allocation6 [shape = 's32[1]{0}', space=sflag, size = 0x4, scoped, tag = 'scoped memory for tpu_custom_call.1']
    #allocation7 [shape = 'u8[65536]{0}', space=vmem, size = 0x10000, scoped, tag = 'output window, operand 0, single buffered']
    %12 = vsyncpa [#allocation3], 0
    %13 = vsyncpa [#allocation6], 0
    %14 = vsyncpa [#allocation4], 0
    // Predicated region
    $region2: #{tpu_custom_call.1} parent=1 // pred_check
      _
    $region3: #{tpu_custom_call.1} parent=1 // pred_check_branch
      %16 = sbr.rel (0) target = $region5
    $region4: #{tpu_custom_call.1} parent=1 // pred_region
      _
    $region5: #{tpu_custom_call.1} parent=1 // pred_fallthru
      _
    // Predicated region
    $region6: #{tpu_custom_call.1} parent=1 // pred_check
      _
    $region7: #{tpu_custom_call.1} parent=1 // pred_check_branch
      %18 = sbr.rel (0) target = $region9
    $region8: #{tpu_custom_call.1} parent=1 // pred_region
      _
    $region9: #{tpu_custom_call.1} parent=1 // pred_fallthru
      _
    // Predicated region
    $region10: #{tpu_custom_call.1} parent=1 // pred_check
      _
    $region11: #{tpu_custom_call.1} parent=1 // pred_check_branch
      %20 = sbr.rel (0) target = $region13
    $region12: #{tpu_custom_call.1} parent=1 // pred_region
      _
    $region13: #{tpu_custom_call.1} parent=1 // pred_fallthru
      _
    // Predicated region
    $region14: #{tpu_custom_call.1} parent=1 // pred_check
      _
    $region15: #{tpu_custom_call.1} parent=1 // pred_check_branch
      %22 = sbr.rel (0) target = $region17
    $region16: #{tpu_custom_call.1} parent=1 // pred_region
      %s24 = ssub.s32 16384, 16384
      %25 = vsyncadd [#allocation3], %s24
      %s26 = sshll.u32 [#allocation2], 4
      %s27 = int_to_ptr.vmem [resolvable:$true] %s26
      %32 = dma.hbm_to_vmem [thread:$0]  %s3, 16384, %s27, [#allocation3], 256, 256, 16
    $region17: #{tpu_custom_call.1} parent=1 // pred_fallthru
      _
    // Predicated region
    $region18: #{tpu_custom_call.1} parent=1 // pred_check
      _
    $region19: #{tpu_custom_call.1} parent=1 // pred_check_branch
      %34 = sbr.rel (0) target = $region21
    $region20: #{tpu_custom_call.1} parent=1 // pred_region
      _
    $region21: #{tpu_custom_call.1} parent=1 // pred_fallthru
      _
    // Predicated region
    $region22: #{tpu_custom_call.1} parent=1 // pred_check
      _
    $region23: #{tpu_custom_call.1} parent=1 // pred_check_branch
      %36 = sbr.rel (0) target = $region25
    $region24: #{tpu_custom_call.1} parent=1 // pred_region
      %s38 = ssub.s32 4096, 4096
      %39 = vsyncadd [#allocation6], %s38
      %s40 = sshll.u32 [#allocation5], 4
      %s41 = int_to_ptr.vmem [resolvable:$true] %s40
      %46 = dma.hbm_to_vmem [thread:$0]  %s5, 4096, %s41, [#allocation6], 64, 64, 4
    $region25: #{tpu_custom_call.1} parent=1 // pred_fallthru
      _
    // Predicated region
    $region26: #{tpu_custom_call.1} parent=1 // pred_check
      _
    $region27: #{tpu_custom_call.1} parent=1 // pred_check_branch
      %48 = sbr.rel (0) target = $region29
    $region28: #{tpu_custom_call.1} parent=1 // pred_region
      _
    $region29: #{tpu_custom_call.1} parent=1 // pred_fallthru
      _
    // Predicated region
    $region30: #{tpu_custom_call.1} parent=1 // pred_check
      _
    $region31: #{tpu_custom_call.1} parent=1 // pred_check_branch
      %50 = sbr.rel (0) target = $region33
    $region32: #{tpu_custom_call.1} parent=1 // pred_region
      %51 = dma.done [#allocation3], 16384
    $region33: #{tpu_custom_call.1} parent=1 // pred_fallthru
      _
    // Predicated region
    $region34: #{tpu_custom_call.1} parent=1 // pred_check
      _
    $region35: #{tpu_custom_call.1} parent=1 // pred_check_branch
      %53 = sbr.rel (0) target = $region37
    $region36: #{tpu_custom_call.1} parent=1 // pred_region
      %54 = dma.done [#allocation6], 4096
    $region37: #{tpu_custom_call.1} parent=1 // pred_fallthru
      _
    %v56 = vld [vmem:[%s0] sm:$0xff]
    %v57 = vld [vmem:[%s0 + $0x8] sm:$0xff]
    %v58 = vld [vmem:[%s0 + $0x10] sm:$0xff]
    %v59 = vld [vmem:[%s0 + $0x18] sm:$0xff]
    %v60 = vld [vmem:[%s0 + $0x20] sm:$0xff]
    %v61 = vld [vmem:[%s0 + $0x28] sm:$0xff]
    %v62 = vld [vmem:[%s0 + $0x30] sm:$0xff]
    %v63 = vld [vmem:[%s0 + $0x38] sm:$0xff]
    %v64 = vld [vmem:[%s0 + $0x40] sm:$0xff]
    %v65 = vld [vmem:[%s0 + $0x48] sm:$0xff]
    %v66 = vld [vmem:[%s0 + $0x50] sm:$0xff]
    %v67 = vld [vmem:[%s0 + $0x58] sm:$0xff]
    %v68 = vld [vmem:[%s0 + $0x60] sm:$0xff]
    %v69 = vld [vmem:[%s0 + $0x68] sm:$0xff]
    %v70 = vld [vmem:[%s0 + $0x70] sm:$0xff]
    %v71 = vld [vmem:[%s0 + $0x78] sm:$0xff]
    %v72 = vld [vmem:[%s0 + $0x80] sm:$0xff]
    %v73 = vld [vmem:[%s0 + $0x88] sm:$0xff]
    %v74 = vld [vmem:[%s0 + $0x90] sm:$0xff]
    %v75 = vld [vmem:[%s0 + $0x98] sm:$0xff]
    %v76 = vld [vmem:[%s0 + $0xa0] sm:$0xff]
    %v77 = vld [vmem:[%s0 + $0xa8] sm:$0xff]
    %v78 = vld [vmem:[%s0 + $0xb0] sm:$0xff]
    %v79 = vld [vmem:[%s0 + $0xb8] sm:$0xff]
    %v80 = vld [vmem:[%s0 + $0xc0] sm:$0xff]
    %v81 = vld [vmem:[%s0 + $0xc8] sm:$0xff]
    %v82 = vld [vmem:[%s0 + $0xd0] sm:$0xff]
    %v83 = vld [vmem:[%s0 + $0xd8] sm:$0xff]
    %v84 = vld [vmem:[%s0 + $0xe0] sm:$0xff]
    %v85 = vld [vmem:[%s0 + $0xe8] sm:$0xff]
    %v86 = vld [vmem:[%s0 + $0xf0] sm:$0xff]
    %v87 = vld [vmem:[%s0 + $0xf8] sm:$0xff]
    %v88 = vld [vmem:[%s0 + $0x100] sm:$0xff]
    %v89 = vld [vmem:[%s0 + $0x108] sm:$0xff]
    %v90 = vld [vmem:[%s0 + $0x110] sm:$0xff]
    %v91 = vld [vmem:[%s0 + $0x118] sm:$0xff]
    %v92 = vld [vmem:[%s0 + $0x120] sm:$0xff]
    %v93 = vld [vmem:[%s0 + $0x128] sm:$0xff]
    %v94 = vld [vmem:[%s0 + $0x130] sm:$0xff]
    %v95 = vld [vmem:[%s0 + $0x138] sm:$0xff]
    %v96 = vld [vmem:[%s0 + $0x140] sm:$0xff]
    %v97 = vld [vmem:[%s0 + $0x148] sm:$0xff]
    %v98 = vld [vmem:[%s0 + $0x150] sm:$0xff]
    %v99 = vld [vmem:[%s0 + $0x158] sm:$0xff]
    %v100 = vld [vmem:[%s0 + $0x160] sm:$0xff]
    %v101 = vld [vmem:[%s0 + $0x168] sm:$0xff]
    %v102 = vld [vmem:[%s0 + $0x170] sm:$0xff]
    %v103 = vld [vmem:[%s0 + $0x178] sm:$0xff]
    %v104 = vld [vmem:[%s0 + $0x180] sm:$0xff]
    %v105 = vld [vmem:[%s0 + $0x188] sm:$0xff]
    %v106 = vld [vmem:[%s0 + $0x190] sm:$0xff]
    %v107 = vld [vmem:[%s0 + $0x198] sm:$0xff]
    %v108 = vld [vmem:[%s0 + $0x1a0] sm:$0xff]
    %v109 = vld [vmem:[%s0 + $0x1a8] sm:$0xff]
    %v110 = vld [vmem:[%s0 + $0x1b0] sm:$0xff]
    %v111 = vld [vmem:[%s0 + $0x1b8] sm:$0xff]
    %v112 = vld [vmem:[%s0 + $0x1c0] sm:$0xff]
    %v113 = vld [vmem:[%s0 + $0x1c8] sm:$0xff]
    %v114 = vld [vmem:[%s0 + $0x1d0] sm:$0xff]
    %v115 = vld [vmem:[%s0 + $0x1d8] sm:$0xff]
    %v116 = vld [vmem:[%s0 + $0x1e0] sm:$0xff]
    %v117 = vld [vmem:[%s0 + $0x1e8] sm:$0xff]
    %v118 = vld [vmem:[%s0 + $0x1f0] sm:$0xff]
    %v119 = vld [vmem:[%s0 + $0x1f8] sm:$0xff]
    %v120 = vld [vmem:[%s0 + $0x200] sm:$0xff]
    %v121 = vld [vmem:[%s0 + $0x208] sm:$0xff]
    %v122 = vld [vmem:[%s0 + $0x210] sm:$0xff]
    %v123 = vld [vmem:[%s0 + $0x218] sm:$0xff]
    %v124 = vld [vmem:[%s0 + $0x220] sm:$0xff]
    %v125 = vld [vmem:[%s0 + $0x228] sm:$0xff]
    %v126 = vld [vmem:[%s0 + $0x230] sm:$0xff]
    %v127 = vld [vmem:[%s0 + $0x238] sm:$0xff]
    %v128 = vld [vmem:[%s0 + $0x240] sm:$0xff]
    %v129 = vld [vmem:[%s0 + $0x248] sm:$0xff]
    %v130 = vld [vmem:[%s0 + $0x250] sm:$0xff]
    %v131 = vld [vmem:[%s0 + $0x258] sm:$0xff]
    %v132 = vld [vmem:[%s0 + $0x260] sm:$0xff]
    %v133 = vld [vmem:[%s0 + $0x268] sm:$0xff]
    %v134 = vld [vmem:[%s0 + $0x270] sm:$0xff]
    %v135 = vld [vmem:[%s0 + $0x278] sm:$0xff]
    %v136 = vld [vmem:[%s0 + $0x280] sm:$0xff]
    %v137 = vld [vmem:[%s0 + $0x288] sm:$0xff]
    %v138 = vld [vmem:[%s0 + $0x290] sm:$0xff]
    %v139 = vld [vmem:[%s0 + $0x298] sm:$0xff]
    %v140 = vld [vmem:[%s0 + $0x2a0] sm:$0xff]
    %v141 = vld [vmem:[%s0 + $0x2a8] sm:$0xff]
    %v142 = vld [vmem:[%s0 + $0x2b0] sm:$0xff]
    %v143 = vld [vmem:[%s0 + $0x2b8] sm:$0xff]
    %v144 = vld [vmem:[%s0 + $0x2c0] sm:$0xff]
    %v145 = vld [vmem:[%s0 + $0x2c8] sm:$0xff]
    %v146 = vld [vmem:[%s0 + $0x2d0] sm:$0xff]
    %v147 = vld [vmem:[%s0 + $0x2d8] sm:$0xff]
    %v148 = vld [vmem:[%s0 + $0x2e0] sm:$0xff]
    %v149 = vld [vmem:[%s0 + $0x2e8] sm:$0xff]
    %v150 = vld [vmem:[%s0 + $0x2f0] sm:$0xff]
    %v151 = vld [vmem:[%s0 + $0x2f8] sm:$0xff]
    %v152 = vld [vmem:[%s0 + $0x300] sm:$0xff]
    %v153 = vld [vmem:[%s0 + $0x308] sm:$0xff]
    %v154 = vld [vmem:[%s0 + $0x310] sm:$0xff]
    %v155 = vld [vmem:[%s0 + $0x318] sm:$0xff]
    %v156 = vld [vmem:[%s0 + $0x320] sm:$0xff]
    %v157 = vld [vmem:[%s0 + $0x328] sm:$0xff]
    %v158 = vld [vmem:[%s0 + $0x330] sm:$0xff]
    %v159 = vld [vmem:[%s0 + $0x338] sm:$0xff]
    %v160 = vld [vmem:[%s0 + $0x340] sm:$0xff]
    %v161 = vld [vmem:[%s0 + $0x348] sm:$0xff]
    %v162 = vld [vmem:[%s0 + $0x350] sm:$0xff]
    %v163 = vld [vmem:[%s0 + $0x358] sm:$0xff]
    %v164 = vld [vmem:[%s0 + $0x360] sm:$0xff]
    %v165 = vld [vmem:[%s0 + $0x368] sm:$0xff]
    %v166 = vld [vmem:[%s0 + $0x370] sm:$0xff]
    %v167 = vld [vmem:[%s0 + $0x378] sm:$0xff]
    %v168 = vpack.c.bf16 %v63, %v56
    %v169 = vpack.c.bf16 %v64, %v57
    %v170 = vpack.c.bf16 %v65, %v58
    %v171 = vpack.c.bf16 %v66, %v59
    %v172 = vpack.c.bf16 %v67, %v60
    %v173 = vpack.c.bf16 %v68, %v61
    %v174 = vpack.c.bf16 %v69, %v62
    %v175 = vpack.c.bf16 %v77, %v70
    %v176 = vpack.c.bf16 %v78, %v71
    %v177 = vpack.c.bf16 %v79, %v72
    %v178 = vpack.c.bf16 %v80, %v73
    %v179 = vpack.c.bf16 %v81, %v74
    %v180 = vpack.c.bf16 %v82, %v75
    %v181 = vpack.c.bf16 %v83, %v76
    %v182 = vpack.c.bf16 %v91, %v84
    %v183 = vpack.c.bf16 %v92, %v85
    %v184 = vpack.c.bf16 %v93, %v86
    %v185 = vpack.c.bf16 %v94, %v87
    %v186 = vpack.c.bf16 %v95, %v88
    %v187 = vpack.c.bf16 %v96, %v89
    %v188 = vpack.c.bf16 %v97, %v90
    %v189 = vpack.c.bf16 %v105, %v98
    %v190 = vpack.c.bf16 %v106, %v99
    %v191 = vpack.c.bf16 %v107, %v100
    %v192 = vpack.c.bf16 %v108, %v101
    %v193 = vpack.c.bf16 %v109, %v102
    %v194 = vpack.c.bf16 %v110, %v103
    %v195 = vpack.c.bf16 %v111, %v104
    %v196 = vpack.c.bf16 %v119, %v112
    %v197 = vpack.c.bf16 %v120, %v113
    %v198 = vpack.c.bf16 %v121, %v114
    %v199 = vpack.c.bf16 %v122, %v115
    %v200 = vpack.c.bf16 %v123, %v116
    %v201 = vpack.c.bf16 %v124, %v117
    %v202 = vpack.c.bf16 %v125, %v118
    %v203 = vpack.c.bf16 %v133, %v126
    %v204 = vpack.c.bf16 %v134, %v127
    %v205 = vpack.c.bf16 %v135, %v128
    %v206 = vpack.c.bf16 %v136, %v129
    %v207 = vpack.c.bf16 %v137, %v130
    %v208 = vpack.c.bf16 %v138, %v131
    %v209 = vpack.c.bf16 %v139, %v132
    %v210 = vpack.c.bf16 %v147, %v140
    %v211 = vpack.c.bf16 %v148, %v141
    %v212 = vpack.c.bf16 %v149, %v142
    %v213 = vpack.c.bf16 %v150, %v143
    %v214 = vpack.c.bf16 %v151, %v144
    %v215 = vpack.c.bf16 %v152, %v145
    %v216 = vpack.c.bf16 %v153, %v146
    %v217 = vpack.c.bf16 %v161, %v154
    %v218 = vpack.c.bf16 %v162, %v155
    %v219 = vpack.c.bf16 %v163, %v156
    %v220 = vpack.c.bf16 %v164, %v157
    %v221 = vpack.c.bf16 %v165, %v158
    %v222 = vpack.c.bf16 %v166, %v159
    %v223 = vpack.c.bf16 %v167, %v160
    %v224 = vld [vmem:[%s1] sm:$0xff]
    %v225 = vld [vmem:[%s1 + $0x8] sm:$0xff]
    %v226 = vld [vmem:[%s1 + $0x10] sm:$0xff]
    %v227 = vld [vmem:[%s1 + $0x18] sm:$0xff]
    %v228 = vld [vmem:[%s1 + $0x20] sm:$0xff]
    %v229 = vld [vmem:[%s1 + $0x28] sm:$0xff]
    %v230 = vld [vmem:[%s1 + $0x30] sm:$0xff]
    %v231 = vld [vmem:[%s1 + $0x38] sm:$0xff]
    %v232 = vld [vmem:[%s1 + $0x40] sm:$0xff]
    %v233 = vld [vmem:[%s1 + $0x48] sm:$0xff]
    %v234 = vld [vmem:[%s1 + $0x50] sm:$0xff]
    %v235 = vld [vmem:[%s1 + $0x58] sm:$0xff]
    %v236 = vld [vmem:[%s1 + $0x60] sm:$0xff]
    %v237 = vld [vmem:[%s1 + $0x68] sm:$0xff]
    %v238 = vld [vmem:[%s1 + $0x70] sm:$0xff]
    %v239 = vld [vmem:[%s1 + $0x78] sm:$0xff]
    %v240 = vld [vmem:[%s1 + $0x80] sm:$0xff]
    %v241 = vld [vmem:[%s1 + $0x88] sm:$0xff]
    %v242 = vld [vmem:[%s1 + $0x90] sm:$0xff]
    %v243 = vld [vmem:[%s1 + $0x98] sm:$0xff]
    %v244 = vld [vmem:[%s1 + $0xa0] sm:$0xff]
    %v245 = vld [vmem:[%s1 + $0xa8] sm:$0xff]
    %v246 = vld [vmem:[%s1 + $0xb0] sm:$0xff]
    %v247 = vld [vmem:[%s1 + $0xb8] sm:$0xff]
    %v248 = vld [vmem:[%s1 + $0xc0] sm:$0xff]
    %v249 = vld [vmem:[%s1 + $0xc8] sm:$0xff]
    %v250 = vld [vmem:[%s1 + $0xd0] sm:$0xff]
    %v251 = vld [vmem:[%s1 + $0xd8] sm:$0xff]
    %v252 = vld [vmem:[%s1 + $0xe0] sm:$0xff]
    %v253 = vld [vmem:[%s1 + $0xe8] sm:$0xff]
    %v254 = vld [vmem:[%s1 + $0xf0] sm:$0xff]
    %v255 = vld [vmem:[%s1 + $0xf8] sm:$0xff]
    %v256 = vld [vmem:[%s1 + $0x100] sm:$0xff]
    %v257 = vld [vmem:[%s1 + $0x108] sm:$0xff]
    %v258 = vld [vmem:[%s1 + $0x110] sm:$0xff]
    %v259 = vld [vmem:[%s1 + $0x118] sm:$0xff]
    %v260 = vld [vmem:[%s1 + $0x120] sm:$0xff]
    %v261 = vld [vmem:[%s1 + $0x128] sm:$0xff]
    %v262 = vld [vmem:[%s1 + $0x130] sm:$0xff]
    %v263 = vld [vmem:[%s1 + $0x138] sm:$0xff]
    %v264 = vld [vmem:[%s1 + $0x140] sm:$0xff]
    %v265 = vld [vmem:[%s1 + $0x148] sm:$0xff]
    %v266 = vld [vmem:[%s1 + $0x150] sm:$0xff]
    %v267 = vld [vmem:[%s1 + $0x158] sm:$0xff]
    %v268 = vld [vmem:[%s1 + $0x160] sm:$0xff]
    %v269 = vld [vmem:[%s1 + $0x168] sm:$0xff]
    %v270 = vld [vmem:[%s1 + $0x170] sm:$0xff]
    %v271 = vld [vmem:[%s1 + $0x178] sm:$0xff]
    %v272 = vld [vmem:[%s1 + $0x180] sm:$0xff]
    %v273 = vld [vmem:[%s1 + $0x188] sm:$0xff]
    %v274 = vld [vmem:[%s1 + $0x190] sm:$0xff]
    %v275 = vld [vmem:[%s1 + $0x198] sm:$0xff]
    %v276 = vld [vmem:[%s1 + $0x1a0] sm:$0xff]
    %v277 = vld [vmem:[%s1 + $0x1a8] sm:$0xff]
    %v278 = vld [vmem:[%s1 + $0x1b0] sm:$0xff]
    %v279 = vld [vmem:[%s1 + $0x1b8] sm:$0xff]
    %v280 = vld [vmem:[%s1 + $0x1c0] sm:$0xff]
    %v281 = vld [vmem:[%s1 + $0x1c8] sm:$0xff]
    %v282 = vld [vmem:[%s1 + $0x1d0] sm:$0xff]
    %v283 = vld [vmem:[%s1 + $0x1d8] sm:$0xff]
    %v284 = vld [vmem:[%s1 + $0x1e0] sm:$0xff]
    %v285 = vld [vmem:[%s1 + $0x1e8] sm:$0xff]
    %v286 = vld [vmem:[%s1 + $0x1f0] sm:$0xff]
    %v287 = vld [vmem:[%s1 + $0x1f8] sm:$0xff]
    %v288 = vld [vmem:[%s1 + $0x200] sm:$0xff]
    %v289 = vld [vmem:[%s1 + $0x208] sm:$0xff]
    %v290 = vld [vmem:[%s1 + $0x210] sm:$0xff]
    %v291 = vld [vmem:[%s1 + $0x218] sm:$0xff]
    %v292 = vld [vmem:[%s1 + $0x220] sm:$0xff]
    %v293 = vld [vmem:[%s1 + $0x228] sm:$0xff]
    %v294 = vld [vmem:[%s1 + $0x230] sm:$0xff]
    %v295 = vld [vmem:[%s1 + $0x238] sm:$0xff]
    %v296 = vld [vmem:[%s1 + $0x240] sm:$0xff]
    %v297 = vld [vmem:[%s1 + $0x248] sm:$0xff]
    %v298 = vld [vmem:[%s1 + $0x250] sm:$0xff]
    %v299 = vld [vmem:[%s1 + $0x258] sm:$0xff]
    %v300 = vld [vmem:[%s1 + $0x260] sm:$0xff]
    %v301 = vld [vmem:[%s1 + $0x268] sm:$0xff]
    %v302 = vld [vmem:[%s1 + $0x270] sm:$0xff]
    %v303 = vld [vmem:[%s1 + $0x278] sm:$0xff]
    %v304 = vld [vmem:[%s1 + $0x280] sm:$0xff]
    %v305 = vld [vmem:[%s1 + $0x288] sm:$0xff]
    %v306 = vld [vmem:[%s1 + $0x290] sm:$0xff]
    %v307 = vld [vmem:[%s1 + $0x298] sm:$0xff]
    %v308 = vld [vmem:[%s1 + $0x2a0] sm:$0xff]
    %v309 = vld [vmem:[%s1 + $0x2a8] sm:$0xff]
    %v310 = vld [vmem:[%s1 + $0x2b0] sm:$0xff]
    %v311 = vld [vmem:[%s1 + $0x2b8] sm:$0xff]
    %v312 = vld [vmem:[%s1 + $0x2c0] sm:$0xff]
    %v313 = vld [vmem:[%s1 + $0x2c8] sm:$0xff]
    %v314 = vld [vmem:[%s1 + $0x2d0] sm:$0xff]
    %v315 = vld [vmem:[%s1 + $0x2d8] sm:$0xff]
    %v316 = vld [vmem:[%s1 + $0x2e0] sm:$0xff]
    %v317 = vld [vmem:[%s1 + $0x2e8] sm:$0xff]
    %v318 = vld [vmem:[%s1 + $0x2f0] sm:$0xff]
    %v319 = vld [vmem:[%s1 + $0x2f8] sm:$0xff]
    %v320 = vld [vmem:[%s1 + $0x300] sm:$0xff]
    %v321 = vld [vmem:[%s1 + $0x308] sm:$0xff]
    %v322 = vld [vmem:[%s1 + $0x310] sm:$0xff]
    %v323 = vld [vmem:[%s1 + $0x318] sm:$0xff]
    %v324 = vld [vmem:[%s1 + $0x320] sm:$0xff]
    %v325 = vld [vmem:[%s1 + $0x328] sm:$0xff]
    %v326 = vld [vmem:[%s1 + $0x330] sm:$0xff]
    %v327 = vld [vmem:[%s1 + $0x338] sm:$0xff]
    %v328 = vld [vmem:[%s1 + $0x340] sm:$0xff]
    %v329 = vld [vmem:[%s1 + $0x348] sm:$0xff]
    %v330 = vld [vmem:[%s1 + $0x350] sm:$0xff]
    %v331 = vld [vmem:[%s1 + $0x358] sm:$0xff]
    %v332 = vld [vmem:[%s1 + $0x360] sm:$0xff]
    %v333 = vld [vmem:[%s1 + $0x368] sm:$0xff]
    %v334 = vld [vmem:[%s1 + $0x370] sm:$0xff]
    %v335 = vld [vmem:[%s1 + $0x378] sm:$0xff]
    %v336 = vld [vmem:[%s1 + $0x380] sm:$0xff]
    %v337 = vld [vmem:[%s1 + $0x388] sm:$0xff]
    %v338 = vld [vmem:[%s1 + $0x390] sm:$0xff]
    %v339 = vld [vmem:[%s1 + $0x398] sm:$0xff]
    %v340 = vld [vmem:[%s1 + $0x3a0] sm:$0xff]
    %v341 = vld [vmem:[%s1 + $0x3a8] sm:$0xff]
    %v342 = vld [vmem:[%s1 + $0x3b0] sm:$0xff]
    %v343 = vld [vmem:[%s1 + $0x3b8] sm:$0xff]
    %v344 = vld [vmem:[%s1 + $0x3c0] sm:$0xff]
    %v345 = vld [vmem:[%s1 + $0x3c8] sm:$0xff]
    %v346 = vld [vmem:[%s1 + $0x3d0] sm:$0xff]
    %v347 = vld [vmem:[%s1 + $0x3d8] sm:$0xff]
    %v348 = vld [vmem:[%s1 + $0x3e0] sm:$0xff]
    %v349 = vld [vmem:[%s1 + $0x3e8] sm:$0xff]
    %v350 = vld [vmem:[%s1 + $0x3f0] sm:$0xff]
    %v351 = vld [vmem:[%s1 + $0x3f8] sm:$0xff]
    %v352 = vld [vmem:[%s1 + $0x400] sm:$0xff]
    %v353 = vld [vmem:[%s1 + $0x408] sm:$0xff]
    %v354 = vld [vmem:[%s1 + $0x410] sm:$0xff]
    %v355 = vld [vmem:[%s1 + $0x418] sm:$0xff]
    %v356 = vld [vmem:[%s1 + $0x420] sm:$0xff]
    %v357 = vld [vmem:[%s1 + $0x428] sm:$0xff]
    %v358 = vld [vmem:[%s1 + $0x430] sm:$0xff]
    %v359 = vld [vmem:[%s1 + $0x438] sm:$0xff]
    %v360 = vld [vmem:[%s1 + $0x440] sm:$0xff]
    %v361 = vld [vmem:[%s1 + $0x448] sm:$0xff]
    %v362 = vld [vmem:[%s1 + $0x450] sm:$0xff]
    %v363 = vld [vmem:[%s1 + $0x458] sm:$0xff]
    %v364 = vld [vmem:[%s1 + $0x460] sm:$0xff]
    %v365 = vld [vmem:[%s1 + $0x468] sm:$0xff]
    %v366 = vld [vmem:[%s1 + $0x470] sm:$0xff]
    %v367 = vld [vmem:[%s1 + $0x478] sm:$0xff]
    %v368 = vld [vmem:[%s1 + $0x480] sm:$0xff]
    %v369 = vld [vmem:[%s1 + $0x488] sm:$0xff]
    %v370 = vld [vmem:[%s1 + $0x490] sm:$0xff]
    %v371 = vld [vmem:[%s1 + $0x498] sm:$0xff]
    %v372 = vld [vmem:[%s1 + $0x4a0] sm:$0xff]
    %v373 = vld [vmem:[%s1 + $0x4a8] sm:$0xff]
    %v374 = vld [vmem:[%s1 + $0x4b0] sm:$0xff]
    %v375 = vld [vmem:[%s1 + $0x4b8] sm:$0xff]
    %v376 = vld [vmem:[%s1 + $0x4c0] sm:$0xff]
    %v377 = vld [vmem:[%s1 + $0x4c8] sm:$0xff]
    %v378 = vld [vmem:[%s1 + $0x4d0] sm:$0xff]
    %v379 = vld [vmem:[%s1 + $0x4d8] sm:$0xff]
    %v380 = vld [vmem:[%s1 + $0x4e0] sm:$0xff]
    %v381 = vld [vmem:[%s1 + $0x4e8] sm:$0xff]
    %v382 = vld [vmem:[%s1 + $0x4f0] sm:$0xff]
    %v383 = vld [vmem:[%s1 + $0x4f8] sm:$0xff]
    %v384 = vld [vmem:[%s1 + $0x500] sm:$0xff]
    %v385 = vld [vmem:[%s1 + $0x508] sm:$0xff]
    %v386 = vld [vmem:[%s1 + $0x510] sm:$0xff]
    %v387 = vld [vmem:[%s1 + $0x518] sm:$0xff]
    %v388 = vld [vmem:[%s1 + $0x520] sm:$0xff]
    %v389 = vld [vmem:[%s1 + $0x528] sm:$0xff]
    %v390 = vld [vmem:[%s1 + $0x530] sm:$0xff]
    %v391 = vld [vmem:[%s1 + $0x538] sm:$0xff]
    %v392 = vld [vmem:[%s1 + $0x540] sm:$0xff]
    %v393 = vld [vmem:[%s1 + $0x548] sm:$0xff]
    %v394 = vld [vmem:[%s1 + $0x550] sm:$0xff]
    %v395 = vld [vmem:[%s1 + $0x558] sm:$0xff]
    %v396 = vld [vmem:[%s1 + $0x560] sm:$0xff]
    %v397 = vld [vmem:[%s1 + $0x568] sm:$0xff]
    %v398 = vld [vmem:[%s1 + $0x570] sm:$0xff]
    %v399 = vld [vmem:[%s1 + $0x578] sm:$0xff]
    %v400 = vld [vmem:[%s1 + $0x580] sm:$0xff]
    %v401 = vld [vmem:[%s1 + $0x588] sm:$0xff]
    %v402 = vld [vmem:[%s1 + $0x590] sm:$0xff]
    %v403 = vld [vmem:[%s1 + $0x598] sm:$0xff]
    %v404 = vld [vmem:[%s1 + $0x5a0] sm:$0xff]
    %v405 = vld [vmem:[%s1 + $0x5a8] sm:$0xff]
    %v406 = vld [vmem:[%s1 + $0x5b0] sm:$0xff]
    %v407 = vld [vmem:[%s1 + $0x5b8] sm:$0xff]
    %v408 = vld [vmem:[%s1 + $0x5c0] sm:$0xff]
    %v409 = vld [vmem:[%s1 + $0x5c8] sm:$0xff]
    %v410 = vld [vmem:[%s1 + $0x5d0] sm:$0xff]
    %v411 = vld [vmem:[%s1 + $0x5d8] sm:$0xff]
    %v412 = vld [vmem:[%s1 + $0x5e0] sm:$0xff]
    %v413 = vld [vmem:[%s1 + $0x5e8] sm:$0xff]
    %v414 = vld [vmem:[%s1 + $0x5f0] sm:$0xff]
    %v415 = vld [vmem:[%s1 + $0x5f8] sm:$0xff]
    %v416 = vld [vmem:[%s1 + $0x600] sm:$0xff]
    %v417 = vld [vmem:[%s1 + $0x608] sm:$0xff]
    %v418 = vld [vmem:[%s1 + $0x610] sm:$0xff]
    %v419 = vld [vmem:[%s1 + $0x618] sm:$0xff]
    %v420 = vld [vmem:[%s2] sm:$0xf]
    %v422 = vlaneseq
    %v423 = vshrl.u32 %v422, 7
    %v424 = vsub.s32 0, %v423
    %v425 = vrot.slane %v420, %v424
    %v426 = vlaneseq
    %v427 = vshrl.u32 %v426, 7
    %v428 = vsub.s32 1, %v427
    %v429 = vrot.slane %v420, %v428
    %v430 = vlaneseq
    %v431 = vshrl.u32 %v430, 7
    %v432 = vsub.s32 2, %v431
    %v433 = vrot.slane %v420, %v432
    %v434 = vlaneseq
    %v435 = vshrl.u32 %v434, 7
    %v436 = vsub.s32 3, %v435
    %v437 = vrot.slane %v420, %v436
    %v638 = vunpack.c.l.b16 %v224
    %v639 = vunpack.c.h.b16 %v224
    %v640 = vunpack.c.l.b16 %v225
    %v641 = vunpack.c.h.b16 %v225
    %v642 = vunpack.c.l.b16 %v226
    %v643 = vunpack.c.h.b16 %v226
    %v644 = vunpack.c.l.b16 %v227
    %v645 = vunpack.c.h.b16 %v227
    %v646 = vunpack.c.l.b16 %v228
    %v647 = vunpack.c.h.b16 %v228
    %v648 = vunpack.c.l.b16 %v229
    %v649 = vunpack.c.h.b16 %v229
    %v650 = vunpack.c.l.b16 %v230
    %v651 = vunpack.c.h.b16 %v230
    %v652 = vunpack.c.l.b16 %v231
    %v653 = vunpack.c.h.b16 %v231
    %v654 = vunpack.c.l.b16 %v232
    %v655 = vunpack.c.h.b16 %v232
    %v656 = vunpack.c.l.b16 %v233
    %v657 = vunpack.c.h.b16 %v233
    %v658 = vunpack.c.l.b16 %v234
    %v659 = vunpack.c.h.b16 %v234
    %v660 = vunpack.c.l.b16 %v235
    %v661 = vunpack.c.h.b16 %v235
    %v662 = vunpack.c.l.b16 %v236
    %v663 = vunpack.c.h.b16 %v236
    %v664 = vunpack.c.l.b16 %v237
    %v665 = vunpack.c.h.b16 %v237
    %v666 = vunpack.c.l.b16 %v238
    %v667 = vunpack.c.h.b16 %v238
    %v668 = vunpack.c.l.b16 %v239
    %v669 = vunpack.c.h.b16 %v239
    %v670 = vunpack.c.l.b16 %v240
    %v671 = vunpack.c.h.b16 %v240
    %v672 = vunpack.c.l.b16 %v241
    %v673 = vunpack.c.h.b16 %v241
    %v674 = vunpack.c.l.b16 %v242
    %v675 = vunpack.c.h.b16 %v242
    %v676 = vunpack.c.l.b16 %v243
    %v677 = vunpack.c.h.b16 %v243
    %v678 = vunpack.c.l.b16 %v244
    %v679 = vunpack.c.h.b16 %v244
    %v680 = vunpack.c.l.b16 %v245
    %v681 = vunpack.c.h.b16 %v245
    %v682 = vunpack.c.l.b16 %v246
    %v683 = vunpack.c.h.b16 %v246
    %v684 = vunpack.c.l.b16 %v247
    %v685 = vunpack.c.h.b16 %v247
    %v686 = vunpack.c.l.b16 %v248
    %v687 = vunpack.c.h.b16 %v248
    %v688 = vunpack.c.l.b16 %v249
    %v689 = vunpack.c.h.b16 %v249
    %v690 = vunpack.c.l.b16 %v250
    %v691 = vunpack.c.h.b16 %v250
    %v692 = vunpack.c.l.b16 %v251
    %v693 = vunpack.c.h.b16 %v251
    %v694 = vunpack.c.l.b16 %v252
    %v695 = vunpack.c.h.b16 %v252
    %v696 = vunpack.c.l.b16 %v253
    %v697 = vunpack.c.h.b16 %v253
    %v698 = vunpack.c.l.b16 %v254
    %v699 = vunpack.c.h.b16 %v254
    %v700 = vunpack.c.l.b16 %v255
    %v701 = vunpack.c.h.b16 %v255
    %v702 = vunpack.c.l.b16 %v256
    %v703 = vunpack.c.h.b16 %v256
    %v704 = vunpack.c.l.b16 %v257
    %v705 = vunpack.c.h.b16 %v257
    %v706 = vunpack.c.l.b16 %v258
    %v707 = vunpack.c.h.b16 %v258
    %v708 = vunpack.c.l.b16 %v259
    %v709 = vunpack.c.h.b16 %v259
    %v710 = vunpack.c.l.b16 %v260
    %v711 = vunpack.c.h.b16 %v260
    %v712 = vunpack.c.l.b16 %v261
    %v713 = vunpack.c.h.b16 %v261
    %v714 = vunpack.c.l.b16 %v262
    %v715 = vunpack.c.h.b16 %v262
    %v716 = vunpack.c.l.b16 %v263
    %v717 = vunpack.c.h.b16 %v263
    %v718 = vunpack.c.l.b16 %v264
    %v719 = vunpack.c.h.b16 %v264
    %v720 = vunpack.c.l.b16 %v265
    %v721 = vunpack.c.h.b16 %v265
    %v722 = vunpack.c.l.b16 %v266
    %v723 = vunpack.c.h.b16 %v266
    %v724 = vunpack.c.l.b16 %v267
    %v725 = vunpack.c.h.b16 %v267
    %v726 = vunpack.c.l.b16 %v268
    %v727 = vunpack.c.h.b16 %v268
    %v728 = vunpack.c.l.b16 %v269
    %v729 = vunpack.c.h.b16 %v269
    %v730 = vunpack.c.l.b16 %v270
    %v731 = vunpack.c.h.b16 %v270
    %v732 = vunpack.c.l.b16 %v271
    %v733 = vunpack.c.h.b16 %v271
    %v734 = vunpack.c.l.b16 %v272
    %v735 = vunpack.c.h.b16 %v272
    %v736 = vunpack.c.l.b16 %v273
    %v737 = vunpack.c.h.b16 %v273
    %v738 = vunpack.c.l.b16 %v274
    %v739 = vunpack.c.h.b16 %v274
    %v740 = vunpack.c.l.b16 %v275
    %v741 = vunpack.c.h.b16 %v275
    %v742 = vunpack.c.l.b16 %v276
    %v743 = vunpack.c.h.b16 %v276
    %v744 = vunpack.c.l.b16 %v277
    %v745 = vunpack.c.h.b16 %v277
    %v746 = vunpack.c.l.b16 %v278
    %v747 = vunpack.c.h.b16 %v278
    %v748 = vunpack.c.l.b16 %v279
    %v749 = vunpack.c.h.b16 %v279
    %v750 = vunpack.c.l.b16 %v280
    %v751 = vunpack.c.h.b16 %v280
    %v752 = vunpack.c.l.b16 %v281
    %v753 = vunpack.c.h.b16 %v281
    %v754 = vunpack.c.l.b16 %v282
    %v755 = vunpack.c.h.b16 %v282
    %v756 = vunpack.c.l.b16 %v283
    %v757 = vunpack.c.h.b16 %v283
    %v758 = vunpack.c.l.b16 %v284
    %v759 = vunpack.c.h.b16 %v284
    %v760 = vunpack.c.l.b16 %v285
    %v761 = vunpack.c.h.b16 %v285
    %v762 = vunpack.c.l.b16 %v286
    %v763 = vunpack.c.h.b16 %v286
    %v764 = vunpack.c.l.b16 %v287
    %v765 = vunpack.c.h.b16 %v287
    %v766 = vunpack.c.l.b16 %v288
    %v767 = vunpack.c.h.b16 %v288
    %v768 = vunpack.c.l.b16 %v289
    %v769 = vunpack.c.h.b16 %v289
    %v770 = vunpack.c.l.b16 %v290
    %v771 = vunpack.c.h.b16 %v290
    %v772 = vunpack.c.l.b16 %v291
    %v773 = vunpack.c.h.b16 %v291
    %v774 = vunpack.c.l.b16 %v292
    %v775 = vunpack.c.h.b16 %v292
    %v776 = vunpack.c.l.b16 %v293
    %v777 = vunpack.c.h.b16 %v293
    %v778 = vunpack.c.l.b16 %v294
    %v779 = vunpack.c.h.b16 %v294
    %v780 = vunpack.c.l.b16 %v295
    %v781 = vunpack.c.h.b16 %v295
    %v782 = vunpack.c.l.b16 %v296
    %v783 = vunpack.c.h.b16 %v296
    %v784 = vunpack.c.l.b16 %v297
    %v785 = vunpack.c.h.b16 %v297
    %v786 = vunpack.c.l.b16 %v298
    %v787 = vunpack.c.h.b16 %v298
    %v788 = vunpack.c.l.b16 %v299
    %v789 = vunpack.c.h.b16 %v299
    %v790 = vunpack.c.l.b16 %v300
    %v791 = vunpack.c.h.b16 %v300
    %v792 = vunpack.c.l.b16 %v301
    %v793 = vunpack.c.h.b16 %v301
    %v794 = vunpack.c.l.b16 %v302
    %v795 = vunpack.c.h.b16 %v302
    %v796 = vunpack.c.l.b16 %v303
    %v797 = vunpack.c.h.b16 %v303
    %v798 = vunpack.c.l.b16 %v304
    %v799 = vunpack.c.h.b16 %v304
    %v800 = vunpack.c.l.b16 %v305
    %v801 = vunpack.c.h.b16 %v305
    %v802 = vunpack.c.l.b16 %v306
    %v803 = vunpack.c.h.b16 %v306
    %v804 = vunpack.c.l.b16 %v307
    %v805 = vunpack.c.h.b16 %v307
    %v806 = vunpack.c.l.b16 %v308
    %v807 = vunpack.c.h.b16 %v308
    %v808 = vunpack.c.l.b16 %v309
    %v809 = vunpack.c.h.b16 %v309
    %v810 = vunpack.c.l.b16 %v310
    %v811 = vunpack.c.h.b16 %v310
    %v812 = vunpack.c.l.b16 %v311
    %v813 = vunpack.c.h.b16 %v311
    %v814 = vunpack.c.l.b16 %v312
    %v815 = vunpack.c.h.b16 %v312
    %v816 = vunpack.c.l.b16 %v313
    %v817 = vunpack.c.h.b16 %v313
    %v818 = vunpack.c.l.b16 %v314
    %v819 = vunpack.c.h.b16 %v314
    %v820 = vunpack.c.l.b16 %v315
    %v821 = vunpack.c.h.b16 %v315
    %v822 = vunpack.c.l.b16 %v316
    %v823 = vunpack.c.h.b16 %v316
    %v824 = vunpack.c.l.b16 %v317
    %v825 = vunpack.c.h.b16 %v317
    %v826 = vunpack.c.l.b16 %v318
    %v827 = vunpack.c.h.b16 %v318
    %v828 = vunpack.c.l.b16 %v319
    %v829 = vunpack.c.h.b16 %v319
    %v830 = vunpack.c.l.b16 %v320
    %v831 = vunpack.c.h.b16 %v320
    %v832 = vunpack.c.l.b16 %v321
    %v833 = vunpack.c.h.b16 %v321
    %v834 = vunpack.c.l.b16 %v322
    %v835 = vunpack.c.h.b16 %v322
    %v836 = vunpack.c.l.b16 %v323
    %v837 = vunpack.c.h.b16 %v323
    %v838 = vunpack.c.l.b16 %v324
    %v839 = vunpack.c.h.b16 %v324
    %v840 = vunpack.c.l.b16 %v325
    %v841 = vunpack.c.h.b16 %v325
    %v842 = vunpack.c.l.b16 %v326
    %v843 = vunpack.c.h.b16 %v326
    %v844 = vunpack.c.l.b16 %v327
    %v845 = vunpack.c.h.b16 %v327
    %v846 = vunpack.c.l.b16 %v328
    %v847 = vunpack.c.h.b16 %v328
    %v848 = vunpack.c.l.b16 %v329
    %v849 = vunpack.c.h.b16 %v329
    %v850 = vunpack.c.l.b16 %v330
    %v851 = vunpack.c.h.b16 %v330
    %v852 = vunpack.c.l.b16 %v331
    %v853 = vunpack.c.h.b16 %v331
    %v854 = vunpack.c.l.b16 %v332
    %v855 = vunpack.c.h.b16 %v332
    %v856 = vunpack.c.l.b16 %v333
    %v857 = vunpack.c.h.b16 %v333
    %v858 = vunpack.c.l.b16 %v334
    %v859 = vunpack.c.h.b16 %v334
    %v860 = vunpack.c.l.b16 %v335
    %v861 = vunpack.c.h.b16 %v335
    %v862 = vunpack.c.l.b16 %v336
    %v863 = vunpack.c.h.b16 %v336
    %v864 = vunpack.c.l.b16 %v337
    %v865 = vunpack.c.h.b16 %v337
    %v866 = vunpack.c.l.b16 %v338
    %v867 = vunpack.c.h.b16 %v338
    %v868 = vunpack.c.l.b16 %v339
    %v869 = vunpack.c.h.b16 %v339
    %v870 = vunpack.c.l.b16 %v340
    %v871 = vunpack.c.h.b16 %v340
    %v872 = vunpack.c.l.b16 %v341
    %v873 = vunpack.c.h.b16 %v341
    %v874 = vunpack.c.l.b16 %v342
    %v875 = vunpack.c.h.b16 %v342
    %v876 = vunpack.c.l.b16 %v343
    %v877 = vunpack.c.h.b16 %v343
    %v878 = vunpack.c.l.b16 %v344
    %v879 = vunpack.c.h.b16 %v344
    %v880 = vunpack.c.l.b16 %v345
    %v881 = vunpack.c.h.b16 %v345
    %v882 = vunpack.c.l.b16 %v346
    %v883 = vunpack.c.h.b16 %v346
    %v884 = vunpack.c.l.b16 %v347
    %v885 = vunpack.c.h.b16 %v347
    %v886 = vunpack.c.l.b16 %v348
    %v887 = vunpack.c.h.b16 %v348
    %v888 = vunpack.c.l.b16 %v349
    %v889 = vunpack.c.h.b16 %v349
    %v890 = vunpack.c.l.b16 %v350
    %v891 = vunpack.c.h.b16 %v350
    %v892 = vunpack.c.l.b16 %v351
    %v893 = vunpack.c.h.b16 %v351
    %v894 = vunpack.c.l.b16 %v352
    %v895 = vunpack.c.h.b16 %v352
    %v896 = vunpack.c.l.b16 %v353
    %v897 = vunpack.c.h.b16 %v353
    %v898 = vunpack.c.l.b16 %v354
    %v899 = vunpack.c.h.b16 %v354
    %v900 = vunpack.c.l.b16 %v355
    %v901 = vunpack.c.h.b16 %v355
    %v902 = vunpack.c.l.b16 %v356
    %v903 = vunpack.c.h.b16 %v356
    %v904 = vunpack.c.l.b16 %v357
    %v905 = vunpack.c.h.b16 %v357
    %v906 = vunpack.c.l.b16 %v358
    %v907 = vunpack.c.h.b16 %v358
    %v908 = vunpack.c.l.b16 %v359
    %v909 = vunpack.c.h.b16 %v359
    %v910 = vunpack.c.l.b16 %v360
    %v911 = vunpack.c.h.b16 %v360
    %v912 = vunpack.c.l.b16 %v361
    %v913 = vunpack.c.h.b16 %v361
    %v914 = vunpack.c.l.b16 %v362
    %v915 = vunpack.c.h.b16 %v362
    %v916 = vunpack.c.l.b16 %v363
    %v917 = vunpack.c.h.b16 %v363
    %v918 = vunpack.c.l.b16 %v364
    %v919 = vunpack.c.h.b16 %v364
    %v920 = vunpack.c.l.b16 %v365
    %v921 = vunpack.c.h.b16 %v365
    %v922 = vunpack.c.l.b16 %v366
    %v923 = vunpack.c.h.b16 %v366
    %v924 = vunpack.c.l.b16 %v367
    %v925 = vunpack.c.h.b16 %v367
    %v926 = vunpack.c.l.b16 %v368
    %v927 = vunpack.c.h.b16 %v368
    %v928 = vunpack.c.l.b16 %v369
    %v929 = vunpack.c.h.b16 %v369
    %v930 = vunpack.c.l.b16 %v370
    %v931 = vunpack.c.h.b16 %v370
    %v932 = vunpack.c.l.b16 %v371
    %v933 = vunpack.c.h.b16 %v371
    %v934 = vunpack.c.l.b16 %v372
    %v935 = vunpack.c.h.b16 %v372
    %v936 = vunpack.c.l.b16 %v373
    %v937 = vunpack.c.h.b16 %v373
    %v938 = vunpack.c.l.b16 %v374
    %v939 = vunpack.c.h.b16 %v374
    %v940 = vunpack.c.l.b16 %v375
    %v941 = vunpack.c.h.b16 %v375
    %v942 = vunpack.c.l.b16 %v376
    %v943 = vunpack.c.h.b16 %v376
    %v944 = vunpack.c.l.b16 %v377
    %v945 = vunpack.c.h.b16 %v377
    %v946 = vunpack.c.l.b16 %v378
    %v947 = vunpack.c.h.b16 %v378
    %v948 = vunpack.c.l.b16 %v379
    %v949 = vunpack.c.h.b16 %v379
    %v950 = vunpack.c.l.b16 %v380
    %v951 = vunpack.c.h.b16 %v380
    %v952 = vunpack.c.l.b16 %v381
    %v953 = vunpack.c.h.b16 %v381
    %v954 = vunpack.c.l.b16 %v382
    %v955 = vunpack.c.h.b16 %v382
    %v956 = vunpack.c.l.b16 %v383
    %v957 = vunpack.c.h.b16 %v383
    %v958 = vunpack.c.l.b16 %v384
    %v959 = vunpack.c.h.b16 %v384
    %v960 = vunpack.c.l.b16 %v385
    %v961 = vunpack.c.h.b16 %v385
    %v962 = vunpack.c.l.b16 %v386
    %v963 = vunpack.c.h.b16 %v386
    %v964 = vunpack.c.l.b16 %v387
    %v965 = vunpack.c.h.b16 %v387
    %v966 = vunpack.c.l.b16 %v388
    %v967 = vunpack.c.h.b16 %v388
    %v968 = vunpack.c.l.b16 %v389
    %v969 = vunpack.c.h.b16 %v389
    %v970 = vunpack.c.l.b16 %v390
    %v971 = vunpack.c.h.b16 %v390
    %v972 = vunpack.c.l.b16 %v391
    %v973 = vunpack.c.h.b16 %v391
    %v974 = vunpack.c.l.b16 %v392
    %v975 = vunpack.c.h.b16 %v392
    %v976 = vunpack.c.l.b16 %v393
    %v977 = vunpack.c.h.b16 %v393
    %v978 = vunpack.c.l.b16 %v394
    %v979 = vunpack.c.h.b16 %v394
    %v980 = vunpack.c.l.b16 %v395
    %v981 = vunpack.c.h.b16 %v395
    %v982 = vunpack.c.l.b16 %v396
    %v983 = vunpack.c.h.b16 %v396
    %v984 = vunpack.c.l.b16 %v397
    %v985 = vunpack.c.h.b16 %v397
    %v986 = vunpack.c.l.b16 %v398
    %v987 = vunpack.c.h.b16 %v398
    %v988 = vunpack.c.l.b16 %v399
    %v989 = vunpack.c.h.b16 %v399
    %v990 = vunpack.c.l.b16 %v400
    %v991 = vunpack.c.h.b16 %v400
    %v992 = vunpack.c.l.b16 %v401
    %v993 = vunpack.c.h.b16 %v401
    %v994 = vunpack.c.l.b16 %v402
    %v995 = vunpack.c.h.b16 %v402
    %v996 = vunpack.c.l.b16 %v403
    %v997 = vunpack.c.h.b16 %v403
    %v998 = vunpack.c.l.b16 %v404
    %v999 = vunpack.c.h.b16 %v404
    %v1000 = vunpack.c.l.b16 %v405
    %v1001 = vunpack.c.h.b16 %v405
    %v1002 = vunpack.c.l.b16 %v406
    %v1003 = vunpack.c.h.b16 %v406
    %v1004 = vunpack.c.l.b16 %v407
    %v1005 = vunpack.c.h.b16 %v407
    %v1006 = vunpack.c.l.b16 %v408
    %v1007 = vunpack.c.h.b16 %v408
    %v1008 = vunpack.c.l.b16 %v409
    %v1009 = vunpack.c.h.b16 %v409
    %v1010 = vunpack.c.l.b16 %v410
    %v1011 = vunpack.c.h.b16 %v410
    %v1012 = vunpack.c.l.b16 %v411
    %v1013 = vunpack.c.h.b16 %v411
    %v1014 = vunpack.c.l.b16 %v412
    %v1015 = vunpack.c.h.b16 %v412
    %v1016 = vunpack.c.l.b16 %v413
    %v1017 = vunpack.c.h.b16 %v413
    %v1018 = vunpack.c.l.b16 %v414
    %v1019 = vunpack.c.h.b16 %v414
    %v1020 = vunpack.c.l.b16 %v415
    %v1021 = vunpack.c.h.b16 %v415
    %v1022 = vunpack.c.l.b16 %v416
    %v1023 = vunpack.c.h.b16 %v416
    %v1024 = vunpack.c.l.b16 %v417
    %v1025 = vunpack.c.h.b16 %v417
    %v1026 = vunpack.c.l.b16 %v418
    %v1027 = vunpack.c.h.b16 %v418
    %v1028 = vunpack.c.l.b16 %v419
    %v1029 = vunpack.c.h.b16 %v419
    %v1030 = vpack.c.b16 %v642, %v638
    %v1031 = vpack.c.b16 %v643, %v639
    %v1032 = vpack.c.b16 %v644, %v640
    %v1033 = vpack.c.b16 %v645, %v641
    %v1034 = vpack.c.b16 %v650, %v646
    %v1035 = vpack.c.b16 %v651, %v647
    %v1036 = vpack.c.b16 %v652, %v648
    %v1037 = vpack.c.b16 %v653, %v649
    %v1038 = vpack.c.b16 %v658, %v654
    %v1039 = vpack.c.b16 %v659, %v655
    %v1040 = vpack.c.b16 %v660, %v656
    %v1041 = vpack.c.b16 %v661, %v657
    %v1042 = vpack.c.b16 %v666, %v662
    %v1043 = vpack.c.b16 %v667, %v663
    %v1044 = vpack.c.b16 %v668, %v664
    %v1045 = vpack.c.b16 %v669, %v665
    %v1046 = vpack.c.b16 %v674, %v670
    %v1047 = vpack.c.b16 %v675, %v671
    %v1048 = vpack.c.b16 %v676, %v672
    %v1049 = vpack.c.b16 %v677, %v673
    %v1050 = vpack.c.b16 %v682, %v678
    %v1051 = vpack.c.b16 %v683, %v679
    %v1052 = vpack.c.b16 %v684, %v680
    %v1053 = vpack.c.b16 %v685, %v681
    %v1054 = vpack.c.b16 %v690, %v686
    %v1055 = vpack.c.b16 %v691, %v687
    %v1056 = vpack.c.b16 %v692, %v688
    %v1057 = vpack.c.b16 %v693, %v689
    %v1058 = vpack.c.b16 %v698, %v694
    %v1059 = vpack.c.b16 %v699, %v695
    %v1060 = vpack.c.b16 %v700, %v696
    %v1061 = vpack.c.b16 %v701, %v697
    %v1062 = vpack.c.b16 %v706, %v702
    %v1063 = vpack.c.b16 %v707, %v703
    %v1064 = vpack.c.b16 %v708, %v704
    %v1065 = vpack.c.b16 %v709, %v705
    %v1066 = vpack.c.b16 %v714, %v710
    %v1067 = vpack.c.b16 %v715, %v711
    %v1068 = vpack.c.b16 %v716, %v712
    %v1069 = vpack.c.b16 %v717, %v713
    %v1070 = vpack.c.b16 %v722, %v718
    %v1071 = vpack.c.b16 %v723, %v719
    %v1072 = vpack.c.b16 %v724, %v720
    %v1073 = vpack.c.b16 %v725, %v721
    %v1074 = vpack.c.b16 %v730, %v726
    %v1075 = vpack.c.b16 %v731, %v727
    %v1076 = vpack.c.b16 %v732, %v728
    %v1077 = vpack.c.b16 %v733, %v729
    %v1078 = vpack.c.b16 %v738, %v734
    %v1079 = vpack.c.b16 %v739, %v735
    %v1080 = vpack.c.b16 %v740, %v736
    %v1081 = vpack.c.b16 %v741, %v737
    %v1082 = vpack.c.b16 %v746, %v742
    %v1083 = vpack.c.b16 %v747, %v743
    %v1084 = vpack.c.b16 %v748, %v744
    %v1085 = vpack.c.b16 %v749, %v745
    %v1086 = vpack.c.b16 %v754, %v750
    %v1087 = vpack.c.b16 %v755, %v751
    %v1088 = vpack.c.b16 %v756, %v752
    %v1089 = vpack.c.b16 %v757, %v753
    %v1090 = vpack.c.b16 %v762, %v758
    %v1091 = vpack.c.b16 %v763, %v759
    %v1092 = vpack.c.b16 %v764, %v760
    %v1093 = vpack.c.b16 %v765, %v761
    %v1094 = vpack.c.b16 %v770, %v766
    %v1095 = vpack.c.b16 %v771, %v767
    %v1096 = vpack.c.b16 %v772, %v768
    %v1097 = vpack.c.b16 %v773, %v769
    %v1098 = vpack.c.b16 %v778, %v774
    %v1099 = vpack.c.b16 %v779, %v775
    %v1100 = vpack.c.b16 %v780, %v776
    %v1101 = vpack.c.b16 %v781, %v777
    %v1102 = vpack.c.b16 %v786, %v782
    %v1103 = vpack.c.b16 %v787, %v783
    %v1104 = vpack.c.b16 %v788, %v784
    %v1105 = vpack.c.b16 %v789, %v785
    %v1106 = vpack.c.b16 %v794, %v790
    %v1107 = vpack.c.b16 %v795, %v791
    %v1108 = vpack.c.b16 %v796, %v792
    %v1109 = vpack.c.b16 %v797, %v793
    %v1110 = vpack.c.b16 %v802, %v798
    %v1111 = vpack.c.b16 %v803, %v799
    %v1112 = vpack.c.b16 %v804, %v800
    %v1113 = vpack.c.b16 %v805, %v801
    %v1114 = vpack.c.b16 %v810, %v806
    %v1115 = vpack.c.b16 %v811, %v807
    %v1116 = vpack.c.b16 %v812, %v808
    %v1117 = vpack.c.b16 %v813, %v809
    %v1118 = vpack.c.b16 %v818, %v814
    %v1119 = vpack.c.b16 %v819, %v815
    %v1120 = vpack.c.b16 %v820, %v816
    %v1121 = vpack.c.b16 %v821, %v817
    %v1122 = vpack.c.b16 %v826, %v822
    %v1123 = vpack.c.b16 %v827, %v823
    %v1124 = vpack.c.b16 %v828, %v824
    %v1125 = vpack.c.b16 %v829, %v825
    %v1126 = vpack.c.b16 %v834, %v830
    %v1127 = vpack.c.b16 %v835, %v831
    %v1128 = vpack.c.b16 %v836, %v832
    %v1129 = vpack.c.b16 %v837, %v833
    %v1130 = vpack.c.b16 %v842, %v838
    %v1131 = vpack.c.b16 %v843, %v839
    %v1132 = vpack.c.b16 %v844, %v840
    %v1133 = vpack.c.b16 %v845, %v841
    %v1134 = vpack.c.b16 %v850, %v846
    %v1135 = vpack.c.b16 %v851, %v847
    %v1136 = vpack.c.b16 %v852, %v848
    %v1137 = vpack.c.b16 %v853, %v849
    %v1138 = vpack.c.b16 %v858, %v854
    %v1139 = vpack.c.b16 %v859, %v855
    %v1140 = vpack.c.b16 %v860, %v856
    %v1141 = vpack.c.b16 %v861, %v857
    %v1142 = vpack.c.b16 %v866, %v862
    %v1143 = vpack.c.b16 %v867, %v863
    %v1144 = vpack.c.b16 %v868, %v864
    %v1145 = vpack.c.b16 %v869, %v865
    %v1146 = vpack.c.b16 %v874, %v870
    %v1147 = vpack.c.b16 %v875, %v871
    %v1148 = vpack.c.b16 %v876, %v872
    %v1149 = vpack.c.b16 %v877, %v873
    %v1150 = vpack.c.b16 %v882, %v878
    %v1151 = vpack.c.b16 %v883, %v879
    %v1152 = vpack.c.b16 %v884, %v880
    %v1153 = vpack.c.b16 %v885, %v881
    %v1154 = vpack.c.b16 %v890, %v886
    %v1155 = vpack.c.b16 %v891, %v887
    %v1156 = vpack.c.b16 %v892, %v888
    %v1157 = vpack.c.b16 %v893, %v889
    %v1158 = vpack.c.b16 %v898, %v894
    %v1159 = vpack.c.b16 %v899, %v895
    %v1160 = vpack.c.b16 %v900, %v896
    %v1161 = vpack.c.b16 %v901, %v897
    %v1162 = vpack.c.b16 %v906, %v902
    %v1163 = vpack.c.b16 %v907, %v903
    %v1164 = vpack.c.b16 %v908, %v904
    %v1165 = vpack.c.b16 %v909, %v905
    %v1166 = vpack.c.b16 %v914, %v910
    %v1167 = vpack.c.b16 %v915, %v911
    %v1168 = vpack.c.b16 %v916, %v912
    %v1169 = vpack.c.b16 %v917, %v913
    %v1170 = vpack.c.b16 %v922, %v918
    %v1171 = vpack.c.b16 %v923, %v919
    %v1172 = vpack.c.b16 %v924, %v920
    %v1173 = vpack.c.b16 %v925, %v921
    %v1174 = vpack.c.b16 %v930, %v926
    %v1175 = vpack.c.b16 %v931, %v927
    %v1176 = vpack.c.b16 %v932, %v928
    %v1177 = vpack.c.b16 %v933, %v929
    %v1178 = vpack.c.b16 %v938, %v934
    %v1179 = vpack.c.b16 %v939, %v935
    %v1180 = vpack.c.b16 %v940, %v936
    %v1181 = vpack.c.b16 %v941, %v937
    %v1182 = vpack.c.b16 %v946, %v942
    %v1183 = vpack.c.b16 %v947, %v943
    %v1184 = vpack.c.b16 %v948, %v944
    %v1185 = vpack.c.b16 %v949, %v945
    %v1186 = vpack.c.b16 %v954, %v950
    %v1187 = vpack.c.b16 %v955, %v951
    %v1188 = vpack.c.b16 %v956, %v952
    %v1189 = vpack.c.b16 %v957, %v953
    %v1190 = vpack.c.b16 %v962, %v958
    %v1191 = vpack.c.b16 %v963, %v959
    %v1192 = vpack.c.b16 %v964, %v960
    %v1193 = vpack.c.b16 %v965, %v961
    %v1194 = vpack.c.b16 %v970, %v966
    %v1195 = vpack.c.b16 %v971, %v967
    %v1196 = vpack.c.b16 %v972, %v968
    %v1197 = vpack.c.b16 %v973, %v969
    %v1198 = vpack.c.b16 %v978, %v974
    %v1199 = vpack.c.b16 %v979, %v975
    %v1200 = vpack.c.b16 %v980, %v976
    %v1201 = vpack.c.b16 %v981, %v977
    %v1202 = vpack.c.b16 %v986, %v982
    %v1203 = vpack.c.b16 %v987, %v983
    %v1204 = vpack.c.b16 %v988, %v984
    %v1205 = vpack.c.b16 %v989, %v985
    %v1206 = vpack.c.b16 %v994, %v990
    %v1207 = vpack.c.b16 %v995, %v991
    %v1208 = vpack.c.b16 %v996, %v992
    %v1209 = vpack.c.b16 %v997, %v993
    %v1210 = vpack.c.b16 %v1002, %v998
    %v1211 = vpack.c.b16 %v1003, %v999
    %v1212 = vpack.c.b16 %v1004, %v1000
    %v1213 = vpack.c.b16 %v1005, %v1001
    %v1214 = vpack.c.b16 %v1010, %v1006
    %v1215 = vpack.c.b16 %v1011, %v1007
    %v1216 = vpack.c.b16 %v1012, %v1008
    %v1217 = vpack.c.b16 %v1013, %v1009
    %v1218 = vpack.c.b16 %v1018, %v1014
    %v1219 = vpack.c.b16 %v1019, %v1015
    %v1220 = vpack.c.b16 %v1020, %v1016
    %v1221 = vpack.c.b16 %v1021, %v1017
    %v1222 = vpack.c.b16 %v1026, %v1022
    %v1223 = vpack.c.b16 %v1027, %v1023
    %v1224 = vpack.c.b16 %v1028, %v1024
    %v1225 = vpack.c.b16 %v1029, %v1025
    %vm1422 = vcmask 130048
    %v1424 = vsel %vm1422, %v174, 0
    %v1427 = vsel %vm1422, %v181, 0
    %v1430 = vsel %vm1422, %v188, 0
    %v1433 = vsel %vm1422, %v195, 0
    %v1436 = vsel %vm1422, %v202, 0
    %v1439 = vsel %vm1422, %v209, 0
    %v1442 = vsel %vm1422, %v216, 0
    %v1445 = vsel %vm1422, %v223, 0
    %1447 = vmatprep.subr.bf16.mxu0 %v1031
    %1448 = vmatpush1.bf16.msra.mxu0 %v1030
    %1449 = vmatprep.subr.bf16.mxu0 %v1035
    %1450 = vmatpush1.bf16.msra.mxu0 %v1034
    %1451 = vmatprep.subr.bf16.mxu0 %v1039
    %1452 = vmatpush1.bf16.msra.mxu0 %v1038
    %1453 = vmatprep.subr.bf16.mxu0 %v1043
    %1454 = vmatpush1.bf16.msra.mxu0 %v1042
    %1455 = vmatprep.subr.bf16.mxu0 %v1047
    %1456 = vmatpush1.bf16.msra.mxu0 %v1046
    %1457 = vmatprep.subr.bf16.mxu0 %v1051
    %1458 = vmatpush1.bf16.msra.mxu0 %v1050
    %1459 = vmatprep.subr.bf16.mxu0 %v1055
    %1460 = vmatpush1.bf16.msra.mxu0 %v1054
    %1461 = vmatprep.subr.bf16.mxu0 %v1059
    %1462 = vmatpush1.bf16.msra.mxu0 %v1058
    %1463 = vmatprep.subr.bf16.mxu0 %v1063
    %1464 = vmatpush1.bf16.msra.mxu0 %v1062
    %1465 = vmatprep.subr.bf16.mxu0 %v1067
    %1466 = vmatpush1.bf16.msra.mxu0 %v1066
    %1467 = vmatprep.subr.bf16.mxu0 %v1071
    %1468 = vmatpush1.bf16.msra.mxu0 %v1070
    %1469 = vmatprep.subr.bf16.mxu0 %v1075
    %1470 = vmatpush1.bf16.msra.mxu0 %v1074
    %1471 = vmatprep.subr.bf16.mxu0 %v1079
    %1472 = vmatpush1.bf16.msra.mxu0 %v1078
    %1473 = vmatprep.subr.bf16.mxu0 %v1083
    %1474 = vmatpush1.bf16.msra.mxu0 %v1082
    %1475 = vmatprep.subr.bf16.mxu0 %v1087
    %1476 = vmatpush1.bf16.msra.mxu0 %v1086
    %1477 = vmatprep.subr.bf16.mxu0 %v1091
    %1478 = vmatpush1.bf16.msra.mxu0 %v1090
    %1479 = vmatprep.mubr.bf16.mxu0 %v169
    %1480 = vmatmul.mubr.bf16.gmra.mrb[0].mxu0 %v168
    %v1481 = vpop.f32.mrb[0].mxu0
    %v1482 = vadd.f32 %v425, %v1481
    %v1483 = vpop.f32.mrb[0].mxu0
    %v1484 = vadd.f32 %v429, %v1483
    %v1485 = vpop.f32.mrb[0].mxu0
    %v1486 = vadd.f32 %v425, %v1485
    %v1487 = vpop.f32.mrb[0].mxu0
    %v1488 = vadd.f32 %v429, %v1487
    %1489 = vmatprep.mubr.bf16.mxu0 %v176
    %1490 = vmatmul.mubr.bf16.gmra.mrb[0].mxu0 %v175
    %v1491 = vpop.f32.mrb[0].mxu0
    %v1492 = vadd.f32 %v425, %v1491
    %v1493 = vpop.f32.mrb[0].mxu0
    %v1494 = vadd.f32 %v429, %v1493
    %v1495 = vpop.f32.mrb[0].mxu0
    %v1496 = vadd.f32 %v425, %v1495
    %v1497 = vpop.f32.mrb[0].mxu0
    %v1498 = vadd.f32 %v429, %v1497
    %1499 = vmatprep.mubr.bf16.mxu0 %v183
    %1500 = vmatmul.mubr.bf16.gmra.mrb[0].mxu0 %v182
    %v1501 = vpop.f32.mrb[0].mxu0
    %v1502 = vadd.f32 %v425, %v1501
    %v1503 = vpop.f32.mrb[0].mxu0
    %v1504 = vadd.f32 %v429, %v1503
    %v1505 = vpop.f32.mrb[0].mxu0
    %v1506 = vadd.f32 %v425, %v1505
    %v1507 = vpop.f32.mrb[0].mxu0
    %v1508 = vadd.f32 %v429, %v1507
    %1509 = vmatprep.mubr.bf16.mxu0 %v190
    %1510 = vmatmul.mubr.bf16.gmra.mrb[0].mxu0 %v189
    %v1511 = vpop.f32.mrb[0].mxu0
    %v1512 = vadd.f32 %v425, %v1511
    %v1513 = vpop.f32.mrb[0].mxu0
    %v1514 = vadd.f32 %v429, %v1513
    %v1515 = vpop.f32.mrb[0].mxu0
    %v1516 = vadd.f32 %v425, %v1515
    %v1517 = vpop.f32.mrb[0].mxu0
    %v1518 = vadd.f32 %v429, %v1517
    %1519 = vmatprep.mubr.bf16.mxu0 %v197
    %1520 = vmatmul.mubr.bf16.gmra.mrb[0].mxu0 %v196
    %v1521 = vpop.f32.mrb[0].mxu0
    %v1522 = vadd.f32 %v425, %v1521
    %v1523 = vpop.f32.mrb[0].mxu0
    %v1524 = vadd.f32 %v429, %v1523
    %v1525 = vpop.f32.mrb[0].mxu0
    %v1526 = vadd.f32 %v425, %v1525
    %v1527 = vpop.f32.mrb[0].mxu0
    %v1528 = vadd.f32 %v429, %v1527
    %1529 = vmatprep.mubr.bf16.mxu0 %v204
    %1530 = vmatmul.mubr.bf16.gmra.mrb[0].mxu0 %v203
    %v1531 = vpop.f32.mrb[0].mxu0
    %v1532 = vadd.f32 %v425, %v1531
    %v1533 = vpop.f32.mrb[0].mxu0
    %v1534 = vadd.f32 %v429, %v1533
    %v1535 = vpop.f32.mrb[0].mxu0
    %v1536 = vadd.f32 %v425, %v1535
    %v1537 = vpop.f32.mrb[0].mxu0
    %v1538 = vadd.f32 %v429, %v1537
    %1539 = vmatprep.mubr.bf16.mxu0 %v211
    %1540 = vmatmul.mubr.bf16.gmra.mrb[0].mxu0 %v210
    %v1541 = vpop.f32.mrb[0].mxu0
    %v1542 = vadd.f32 %v425, %v1541
    %v1543 = vpop.f32.mrb[0].mxu0
    %v1544 = vadd.f32 %v429, %v1543
    %v1545 = vpop.f32.mrb[0].mxu0
    %v1546 = vadd.f32 %v425, %v1545
    %v1547 = vpop.f32.mrb[0].mxu0
    %v1548 = vadd.f32 %v429, %v1547
    %1549 = vmatprep.mubr.bf16.mxu0 %v218
    %1550 = vmatmul.mubr.bf16.gmra.mrb[0].mxu0 %v217
    %v1551 = vpop.f32.mrb[0].mxu0
    %v1552 = vadd.f32 %v425, %v1551
    %v1553 = vpop.f32.mrb[0].mxu0
    %v1554 = vadd.f32 %v429, %v1553
    %v1555 = vpop.f32.mrb[0].mxu0
    %v1556 = vadd.f32 %v425, %v1555
    %v1557 = vpop.f32.mrb[0].mxu0
    %v1558 = vadd.f32 %v429, %v1557
    %1559 = vdwg.mxu0
    %1560 = vmatprep.subr.bf16.mxu0 %v1095
    %1561 = vmatpush1.bf16.msra.mxu0 %v1094
    %1562 = vmatprep.subr.bf16.mxu0 %v1099
    %1563 = vmatpush1.bf16.msra.mxu0 %v1098
    %1564 = vmatprep.subr.bf16.mxu0 %v1103
    %1565 = vmatpush1.bf16.msra.mxu0 %v1102
    %1566 = vmatprep.subr.bf16.mxu0 %v1107
    %1567 = vmatpush1.bf16.msra.mxu0 %v1106
    %1568 = vmatprep.subr.bf16.mxu0 %v1111
    %1569 = vmatpush1.bf16.msra.mxu0 %v1110
    %1570 = vmatprep.subr.bf16.mxu0 %v1115
    %1571 = vmatpush1.bf16.msra.mxu0 %v1114
    %1572 = vmatprep.subr.bf16.mxu0 %v1119
    %1573 = vmatpush1.bf16.msra.mxu0 %v1118
    %1574 = vmatprep.subr.bf16.mxu0 %v1123
    %1575 = vmatpush1.bf16.msra.mxu0 %v1122
    %1576 = vmatprep.subr.bf16.mxu0 %v1127
    %1577 = vmatpush1.bf16.msra.mxu0 %v1126
    %1578 = vmatprep.subr.bf16.mxu0 %v1131
    %1579 = vmatpush1.bf16.msra.mxu0 %v1130
    %1580 = vmatprep.subr.bf16.mxu0 %v1135
    %1581 = vmatpush1.bf16.msra.mxu0 %v1134
    %1582 = vmatprep.subr.bf16.mxu0 %v1139
    %1583 = vmatpush1.bf16.msra.mxu0 %v1138
    %1584 = vmatprep.subr.bf16.mxu0 %v1143
    %1585 = vmatpush1.bf16.msra.mxu0 %v1142
    %1586 = vmatprep.subr.bf16.mxu0 %v1147
    %1587 = vmatpush1.bf16.msra.mxu0 %v1146
    %1588 = vmatprep.subr.bf16.mxu0 %v1151
    %1589 = vmatpush1.bf16.msra.mxu0 %v1150
    %1590 = vmatprep.subr.bf16.mxu0 %v1155
    %1591 = vmatpush1.bf16.msra.mxu0 %v1154
    %1592 = vmatprep.mubr.bf16.mxu0 %v171
    %1593 = vmatmul.mubr.bf16.gmra.mrb[0].mxu0 %v170
    %v1594 = vpop.f32.mrb[0].mxu0
    %v1595 = vadd.f32 %v1482, %v1594
    %v1596 = vpop.f32.mrb[0].mxu0
    %v1597 = vadd.f32 %v1484, %v1596
    %v1598 = vpop.f32.mrb[0].mxu0
    %v1599 = vadd.f32 %v1486, %v1598
    %v1600 = vpop.f32.mrb[0].mxu0
    %v1601 = vadd.f32 %v1488, %v1600
    %1602 = vmatprep.mubr.bf16.mxu0 %v178
    %1603 = vmatmul.mubr.bf16.gmra.mrb[0].mxu0 %v177
    %v1604 = vpop.f32.mrb[0].mxu0
    %v1605 = vadd.f32 %v1492, %v1604
    %v1606 = vpop.f32.mrb[0].mxu0
    %v1607 = vadd.f32 %v1494, %v1606
    %v1608 = vpop.f32.mrb[0].mxu0
    %v1609 = vadd.f32 %v1496, %v1608
    %v1610 = vpop.f32.mrb[0].mxu0
    %v1611 = vadd.f32 %v1498, %v1610
    %1612 = vmatprep.mubr.bf16.mxu0 %v185
    %1613 = vmatmul.mubr.bf16.gmra.mrb[0].mxu0 %v184
    %v1614 = vpop.f32.mrb[0].mxu0
    %v1615 = vadd.f32 %v1502, %v1614
    %v1616 = vpop.f32.mrb[0].mxu0
    %v1617 = vadd.f32 %v1504, %v1616
    %v1618 = vpop.f32.mrb[0].mxu0
    %v1619 = vadd.f32 %v1506, %v1618
    %v1620 = vpop.f32.mrb[0].mxu0
    %v1621 = vadd.f32 %v1508, %v1620
    %1622 = vmatprep.mubr.bf16.mxu0 %v192
    %1623 = vmatmul.mubr.bf16.gmra.mrb[0].mxu0 %v191
    %v1624 = vpop.f32.mrb[0].mxu0
    %v1625 = vadd.f32 %v1512, %v1624
    %v1626 = vpop.f32.mrb[0].mxu0
    %v1627 = vadd.f32 %v1514, %v1626
    %v1628 = vpop.f32.mrb[0].mxu0
    %v1629 = vadd.f32 %v1516, %v1628
    %v1630 = vpop.f32.mrb[0].mxu0
    %v1631 = vadd.f32 %v1518, %v1630
    %1632 = vmatprep.mubr.bf16.mxu0 %v199
    %1633 = vmatmul.mubr.bf16.gmra.mrb[0].mxu0 %v198
    %v1634 = vpop.f32.mrb[0].mxu0
    %v1635 = vadd.f32 %v1522, %v1634
    %v1636 = vpop.f32.mrb[0].mxu0
    %v1637 = vadd.f32 %v1524, %v1636
    %v1638 = vpop.f32.mrb[0].mxu0
    %v1639 = vadd.f32 %v1526, %v1638
    %v1640 = vpop.f32.mrb[0].mxu0
    %v1641 = vadd.f32 %v1528, %v1640
    %1642 = vmatprep.mubr.bf16.mxu0 %v206
    %1643 = vmatmul.mubr.bf16.gmra.mrb[0].mxu0 %v205
    %v1644 = vpop.f32.mrb[0].mxu0
    %v1645 = vadd.f32 %v1532, %v1644
    %v1646 = vpop.f32.mrb[0].mxu0
    %v1647 = vadd.f32 %v1534, %v1646
    %v1648 = vpop.f32.mrb[0].mxu0
    %v1649 = vadd.f32 %v1536, %v1648
    %v1650 = vpop.f32.mrb[0].mxu0
    %v1651 = vadd.f32 %v1538, %v1650
    %1652 = vmatprep.mubr.bf16.mxu0 %v213
    %1653 = vmatmul.mubr.bf16.gmra.mrb[0].mxu0 %v212
    %v1654 = vpop.f32.mrb[0].mxu0
    %v1655 = vadd.f32 %v1542, %v1654
    %v1656 = vpop.f32.mrb[0].mxu0
    %v1657 = vadd.f32 %v1544, %v1656
    %v1658 = vpop.f32.mrb[0].mxu0
    %v1659 = vadd.f32 %v1546, %v1658
    %v1660 = vpop.f32.mrb[0].mxu0
    %v1661 = vadd.f32 %v1548, %v1660
    %1662 = vmatprep.mubr.bf16.mxu0 %v220
    %1663 = vmatmul.mubr.bf16.gmra.mrb[0].mxu0 %v219
    %v1664 = vpop.f32.mrb[0].mxu0
    %v1665 = vadd.f32 %v1552, %v1664
    %v1666 = vpop.f32.mrb[0].mxu0
    %v1667 = vadd.f32 %v1554, %v1666
    %v1668 = vpop.f32.mrb[0].mxu0
    %v1669 = vadd.f32 %v1556, %v1668
    %v1670 = vpop.f32.mrb[0].mxu0
    %v1671 = vadd.f32 %v1558, %v1670
    %1672 = vdwg.mxu0
    %1673 = vmatprep.subr.bf16.mxu0 %v1159
    %1674 = vmatpush1.bf16.msra.mxu0 %v1158
    %1675 = vmatprep.subr.bf16.mxu0 %v1163
    %1676 = vmatpush1.bf16.msra.mxu0 %v1162
    %1677 = vmatprep.subr.bf16.mxu0 %v1167
    %1678 = vmatpush1.bf16.msra.mxu0 %v1166
    %1679 = vmatprep.subr.bf16.mxu0 %v1171
    %1680 = vmatpush1.bf16.msra.mxu0 %v1170
    %1681 = vmatprep.subr.bf16.mxu0 %v1175
    %1682 = vmatpush1.bf16.msra.mxu0 %v1174
    %1683 = vmatprep.subr.bf16.mxu0 %v1179
    %1684 = vmatpush1.bf16.msra.mxu0 %v1178
    %1685 = vmatprep.subr.bf16.mxu0 %v1183
    %1686 = vmatpush1.bf16.msra.mxu0 %v1182
    %1687 = vmatprep.subr.bf16.mxu0 %v1187
    %1688 = vmatpush1.bf16.msra.mxu0 %v1186
    %1689 = vmatprep.subr.bf16.mxu0 %v1191
    %1690 = vmatpush1.bf16.msra.mxu0 %v1190
    %1691 = vmatprep.subr.bf16.mxu0 %v1195
    %1692 = vmatpush1.bf16.msra.mxu0 %v1194
    %1693 = vmatprep.subr.bf16.mxu0 %v1199
    %1694 = vmatpush1.bf16.msra.mxu0 %v1198
    %1695 = vmatprep.subr.bf16.mxu0 %v1203
    %1696 = vmatpush1.bf16.msra.mxu0 %v1202
    %1697 = vmatprep.subr.bf16.mxu0 %v1207
    %1698 = vmatpush1.bf16.msra.mxu0 %v1206
    %1699 = vmatprep.subr.bf16.mxu0 %v1211
    %1700 = vmatpush1.bf16.msra.mxu0 %v1210
    %1701 = vmatprep.subr.bf16.mxu0 %v1215
    %1702 = vmatpush1.bf16.msra.mxu0 %v1214
    %1703 = vmatprep.subr.bf16.mxu0 %v1219
    %1704 = vmatpush1.bf16.msra.mxu0 %v1218
    %1705 = vmatprep.mubr.bf16.mxu0 %v173
    %1706 = vmatmul.mubr.bf16.gmra.mrb[0].mxu0 %v172
    %v1707 = vpop.f32.mrb[0].mxu0
    %v1708 = vadd.f32 %v1595, %v1707
    %v1709 = vpop.f32.mrb[0].mxu0
    %v1710 = vadd.f32 %v1597, %v1709
    %v1711 = vpop.f32.mrb[0].mxu0
    %v1712 = vadd.f32 %v1599, %v1711
    %v1713 = vpop.f32.mrb[0].mxu0
    %v1714 = vadd.f32 %v1601, %v1713
    %1715 = vmatprep.mubr.bf16.mxu0 %v180
    %1716 = vmatmul.mubr.bf16.gmra.mrb[0].mxu0 %v179
    %v1717 = vpop.f32.mrb[0].mxu0
    %v1718 = vadd.f32 %v1605, %v1717
    %v1719 = vpop.f32.mrb[0].mxu0
    %v1720 = vadd.f32 %v1607, %v1719
    %v1721 = vpop.f32.mrb[0].mxu0
    %v1722 = vadd.f32 %v1609, %v1721
    %v1723 = vpop.f32.mrb[0].mxu0
    %v1724 = vadd.f32 %v1611, %v1723
    %1725 = vmatprep.mubr.bf16.mxu0 %v187
    %1726 = vmatmul.mubr.bf16.gmra.mrb[0].mxu0 %v186
    %v1727 = vpop.f32.mrb[0].mxu0
    %v1728 = vadd.f32 %v1615, %v1727
    %v1729 = vpop.f32.mrb[0].mxu0
    %v1730 = vadd.f32 %v1617, %v1729
    %v1731 = vpop.f32.mrb[0].mxu0
    %v1732 = vadd.f32 %v1619, %v1731
    %v1733 = vpop.f32.mrb[0].mxu0
    %v1734 = vadd.f32 %v1621, %v1733
    %1735 = vmatprep.mubr.bf16.mxu0 %v194
    %1736 = vmatmul.mubr.bf16.gmra.mrb[0].mxu0 %v193
    %v1737 = vpop.f32.mrb[0].mxu0
    %v1738 = vadd.f32 %v1625, %v1737
    %v1739 = vpop.f32.mrb[0].mxu0
    %v1740 = vadd.f32 %v1627, %v1739
    %v1741 = vpop.f32.mrb[0].mxu0
    %v1742 = vadd.f32 %v1629, %v1741
    %v1743 = vpop.f32.mrb[0].mxu0
    %v1744 = vadd.f32 %v1631, %v1743
    %1745 = vmatprep.mubr.bf16.mxu0 %v201
    %1746 = vmatmul.mubr.bf16.gmra.mrb[0].mxu0 %v200
    %v1747 = vpop.f32.mrb[0].mxu0
    %v1748 = vadd.f32 %v1635, %v1747
    %v1749 = vpop.f32.mrb[0].mxu0
    %v1750 = vadd.f32 %v1637, %v1749
    %v1751 = vpop.f32.mrb[0].mxu0
    %v1752 = vadd.f32 %v1639, %v1751
    %v1753 = vpop.f32.mrb[0].mxu0
    %v1754 = vadd.f32 %v1641, %v1753
    %1755 = vmatprep.mubr.bf16.mxu0 %v208
    %1756 = vmatmul.mubr.bf16.gmra.mrb[0].mxu0 %v207
    %v1757 = vpop.f32.mrb[0].mxu0
    %v1758 = vadd.f32 %v1645, %v1757
    %v1759 = vpop.f32.mrb[0].mxu0
    %v1760 = vadd.f32 %v1647, %v1759
    %v1761 = vpop.f32.mrb[0].mxu0
    %v1762 = vadd.f32 %v1649, %v1761
    %v1763 = vpop.f32.mrb[0].mxu0
    %v1764 = vadd.f32 %v1651, %v1763
    %1765 = vmatprep.mubr.bf16.mxu0 %v215
    %1766 = vmatmul.mubr.bf16.gmra.mrb[0].mxu0 %v214
    %v1767 = vpop.f32.mrb[0].mxu0
    %v1768 = vadd.f32 %v1655, %v1767
    %v1769 = vpop.f32.mrb[0].mxu0
    %v1770 = vadd.f32 %v1657, %v1769
    %v1771 = vpop.f32.mrb[0].mxu0
    %v1772 = vadd.f32 %v1659, %v1771
    %v1773 = vpop.f32.mrb[0].mxu0
    %v1774 = vadd.f32 %v1661, %v1773
    %1775 = vmatprep.mubr.bf16.mxu0 %v222
    %1776 = vmatmul.mubr.bf16.gmra.mrb[0].mxu0 %v221
    %v1777 = vpop.f32.mrb[0].mxu0
    %v1778 = vadd.f32 %v1665, %v1777
    %v1779 = vpop.f32.mrb[0].mxu0
    %v1780 = vadd.f32 %v1667, %v1779
    %v1781 = vpop.f32.mrb[0].mxu0
    %v1782 = vadd.f32 %v1669, %v1781
    %v1783 = vpop.f32.mrb[0].mxu0
    %v1784 = vadd.f32 %v1671, %v1783
    %1785 = vdwg.mxu0
    %1786 = vmatprep.subr.bf16.mxu0 %v1223
    %1787 = vmatpush1.bf16.msra.mxu0 %v1222
    %1788 = vmatprep.subr.bf16.mxu0 0
    %1789 = vmatpush1.bf16.msra.mxu0 0
    %1790 = vmatprep.subr.bf16.mxu0 0
    %1791 = vmatpush1.bf16.msra.mxu0 0
    %1792 = vmatprep.subr.bf16.mxu0 0
    %1793 = vmatpush1.bf16.msra.mxu0 0
    %1794 = vmatprep.subr.bf16.mxu0 0
    %1795 = vmatpush1.bf16.msra.mxu0 0
    %1796 = vmatprep.subr.bf16.mxu0 0
    %1797 = vmatpush1.bf16.msra.mxu0 0
    %1798 = vmatprep.subr.bf16.mxu0 0
    %1799 = vmatpush1.bf16.msra.mxu0 0
    %1800 = vmatprep.subr.bf16.mxu0 0
    %1801 = vmatpush1.bf16.msra.mxu0 0
    %1802 = vmatprep.subr.bf16.mxu0 0
    %1803 = vmatpush1.bf16.msra.mxu0 0
    %1804 = vmatprep.subr.bf16.mxu0 0
    %1805 = vmatpush1.bf16.msra.mxu0 0
    %1806 = vmatprep.subr.bf16.mxu0 0
    %1807 = vmatpush1.bf16.msra.mxu0 0
    %1808 = vmatprep.subr.bf16.mxu0 0
    %1809 = vmatpush1.bf16.msra.mxu0 0
    %1810 = vmatprep.subr.bf16.mxu0 0
    %1811 = vmatpush1.bf16.msra.mxu0 0
    %1812 = vmatprep.subr.bf16.mxu0 0
    %1813 = vmatpush1.bf16.msra.mxu0 0
    %1814 = vmatprep.subr.bf16.mxu0 0
    %1815 = vmatpush1.bf16.msra.mxu0 0
    %1816 = vmatprep.subr.bf16.mxu0 0
    %1817 = vmatpush1.bf16.msra.mxu0 0
    %1818 = vmatprep.mubr.bf16.mxu0 0
    %1819 = vmatmul.mubr.bf16.gmra.mrb[0].mxu0 %v1424
    %v1820 = vpop.f32.mrb[0].mxu0
    %v1821 = vadd.f32 %v1708, %v1820
    %v1822 = vpop.f32.mrb[0].mxu0
    %v1823 = vadd.f32 %v1710, %v1822
    %v1824 = vpop.f32.mrb[0].mxu0
    %v1825 = vadd.f32 %v1712, %v1824
    %v1826 = vpop.f32.mrb[0].mxu0
    %v1827 = vadd.f32 %v1714, %v1826
    %1828 = vmatprep.mubr.bf16.mxu0 0
    %1829 = vmatmul.mubr.bf16.gmra.mrb[0].mxu0 %v1427
    %v1830 = vpop.f32.mrb[0].mxu0
    %v1831 = vadd.f32 %v1718, %v1830
    %v1832 = vpop.f32.mrb[0].mxu0
    %v1833 = vadd.f32 %v1720, %v1832
    %v1834 = vpop.f32.mrb[0].mxu0
    %v1835 = vadd.f32 %v1722, %v1834
    %v1836 = vpop.f32.mrb[0].mxu0
    %v1837 = vadd.f32 %v1724, %v1836
    %1838 = vmatprep.mubr.bf16.mxu0 0
    %1839 = vmatmul.mubr.bf16.gmra.mrb[0].mxu0 %v1430
    %v1840 = vpop.f32.mrb[0].mxu0
    %v1841 = vadd.f32 %v1728, %v1840
    %v1842 = vpop.f32.mrb[0].mxu0
    %v1843 = vadd.f32 %v1730, %v1842
    %v1844 = vpop.f32.mrb[0].mxu0
    %v1845 = vadd.f32 %v1732, %v1844
    %v1846 = vpop.f32.mrb[0].mxu0
    %v1847 = vadd.f32 %v1734, %v1846
    %1848 = vmatprep.mubr.bf16.mxu0 0
    %1849 = vmatmul.mubr.bf16.gmra.mrb[0].mxu0 %v1433
    %v1850 = vpop.f32.mrb[0].mxu0
    %v1851 = vadd.f32 %v1738, %v1850
    %v1852 = vpop.f32.mrb[0].mxu0
    %v1853 = vadd.f32 %v1740, %v1852
    %v1854 = vpop.f32.mrb[0].mxu0
    %v1855 = vadd.f32 %v1742, %v1854
    %v1856 = vpop.f32.mrb[0].mxu0
    %v1857 = vadd.f32 %v1744, %v1856
    %1858 = vmatprep.mubr.bf16.mxu0 0
    %1859 = vmatmul.mubr.bf16.gmra.mrb[0].mxu0 %v1436
    %v1860 = vpop.f32.mrb[0].mxu0
    %v1861 = vadd.f32 %v1748, %v1860
    %v1862 = vpop.f32.mrb[0].mxu0
    %v1863 = vadd.f32 %v1750, %v1862
    %v1864 = vpop.f32.mrb[0].mxu0
    %v1865 = vadd.f32 %v1752, %v1864
    %v1866 = vpop.f32.mrb[0].mxu0
    %v1867 = vadd.f32 %v1754, %v1866
    %1868 = vmatprep.mubr.bf16.mxu0 0
    %1869 = vmatmul.mubr.bf16.gmra.mrb[0].mxu0 %v1439
    %v1870 = vpop.f32.mrb[0].mxu0
    %v1871 = vadd.f32 %v1758, %v1870
    %v1872 = vpop.f32.mrb[0].mxu0
    %v1873 = vadd.f32 %v1760, %v1872
    %v1874 = vpop.f32.mrb[0].mxu0
    %v1875 = vadd.f32 %v1762, %v1874
    %v1876 = vpop.f32.mrb[0].mxu0
    %v1877 = vadd.f32 %v1764, %v1876
    %1878 = vmatprep.mubr.bf16.mxu0 0
    %1879 = vmatmul.mubr.bf16.gmra.mrb[0].mxu0 %v1442
    %v1880 = vpop.f32.mrb[0].mxu0
    %v1881 = vadd.f32 %v1768, %v1880
    %v1882 = vpop.f32.mrb[0].mxu0
    %v1883 = vadd.f32 %v1770, %v1882
    %v1884 = vpop.f32.mrb[0].mxu0
    %v1885 = vadd.f32 %v1772, %v1884
    %v1886 = vpop.f32.mrb[0].mxu0
    %v1887 = vadd.f32 %v1774, %v1886
    %1888 = vmatprep.mubr.bf16.mxu0 0
    %1889 = vmatmul.mubr.bf16.gmra.mrb[0].mxu0 %v1445
    %v1890 = vpop.f32.mrb[0].mxu0
    %v1891 = vadd.f32 %v1778, %v1890
    %v1892 = vpop.f32.mrb[0].mxu0
    %v1893 = vadd.f32 %v1780, %v1892
    %v1894 = vpop.f32.mrb[0].mxu0
    %v1895 = vadd.f32 %v1782, %v1894
    %v1896 = vpop.f32.mrb[0].mxu0
    %v1897 = vadd.f32 %v1784, %v1896
    %1898 = vdwg.mxu0
    %1899 = vmatprep.subr.bf16.mxu0 %v1033
    %1900 = vmatpush1.bf16.msra.mxu0 %v1032
    %1901 = vmatprep.subr.bf16.mxu0 %v1037
    %1902 = vmatpush1.bf16.msra.mxu0 %v1036
    %1903 = vmatprep.subr.bf16.mxu0 %v1041
    %1904 = vmatpush1.bf16.msra.mxu0 %v1040
    %1905 = vmatprep.subr.bf16.mxu0 %v1045
    %1906 = vmatpush1.bf16.msra.mxu0 %v1044
    %1907 = vmatprep.subr.bf16.mxu0 %v1049
    %1908 = vmatpush1.bf16.msra.mxu0 %v1048
    %1909 = vmatprep.subr.bf16.mxu0 %v1053
    %1910 = vmatpush1.bf16.msra.mxu0 %v1052
    %1911 = vmatprep.subr.bf16.mxu0 %v1057
    %1912 = vmatpush1.bf16.msra.mxu0 %v1056
    %1913 = vmatprep.subr.bf16.mxu0 %v1061
    %1914 = vmatpush1.bf16.msra.mxu0 %v1060
    %1915 = vmatprep.subr.bf16.mxu0 %v1065
    %1916 = vmatpush1.bf16.msra.mxu0 %v1064
    %1917 = vmatprep.subr.bf16.mxu0 %v1069
    %1918 = vmatpush1.bf16.msra.mxu0 %v1068
    %1919 = vmatprep.subr.bf16.mxu0 %v1073
    %1920 = vmatpush1.bf16.msra.mxu0 %v1072
    %1921 = vmatprep.subr.bf16.mxu0 %v1077
    %1922 = vmatpush1.bf16.msra.mxu0 %v1076
    %1923 = vmatprep.subr.bf16.mxu0 %v1081
    %1924 = vmatpush1.bf16.msra.mxu0 %v1080
    %1925 = vmatprep.subr.bf16.mxu0 %v1085
    %1926 = vmatpush1.bf16.msra.mxu0 %v1084
    %1927 = vmatprep.subr.bf16.mxu0 %v1089
    %1928 = vmatpush1.bf16.msra.mxu0 %v1088
    %1929 = vmatprep.subr.bf16.mxu0 %v1093
    %1930 = vmatpush1.bf16.msra.mxu0 %v1092
    %1931 = vmatprep.mubr.bf16.mxu0 %v169
    %1932 = vmatmul.mubr.bf16.gmra.mrb[0].mxu0 %v168
    %v1933 = vpop.f32.mrb[0].mxu0
    %v1934 = vadd.f32 %v433, %v1933
    %v1935 = vpop.f32.mrb[0].mxu0
    %v1936 = vadd.f32 %v437, %v1935
    %v1937 = vpop.f32.mrb[0].mxu0
    %v1938 = vadd.f32 %v433, %v1937
    %v1939 = vpop.f32.mrb[0].mxu0
    %v1940 = vadd.f32 %v437, %v1939
    %1941 = vmatprep.mubr.bf16.mxu0 %v176
    %1942 = vmatmul.mubr.bf16.gmra.mrb[0].mxu0 %v175
    %v1943 = vpop.f32.mrb[0].mxu0
    %v1944 = vadd.f32 %v433, %v1943
    %v1945 = vpop.f32.mrb[0].mxu0
    %v1946 = vadd.f32 %v437, %v1945
    %v1947 = vpop.f32.mrb[0].mxu0
    %v1948 = vadd.f32 %v433, %v1947
    %v1949 = vpop.f32.mrb[0].mxu0
    %v1950 = vadd.f32 %v437, %v1949
    %1951 = vmatprep.mubr.bf16.mxu0 %v183
    %1952 = vmatmul.mubr.bf16.gmra.mrb[0].mxu0 %v182
    %v1953 = vpop.f32.mrb[0].mxu0
    %v1954 = vadd.f32 %v433, %v1953
    %v1955 = vpop.f32.mrb[0].mxu0
    %v1956 = vadd.f32 %v437, %v1955
    %v1957 = vpop.f32.mrb[0].mxu0
    %v1958 = vadd.f32 %v433, %v1957
    %v1959 = vpop.f32.mrb[0].mxu0
    %v1960 = vadd.f32 %v437, %v1959
    %1961 = vmatprep.mubr.bf16.mxu0 %v190
    %1962 = vmatmul.mubr.bf16.gmra.mrb[0].mxu0 %v189
    %v1963 = vpop.f32.mrb[0].mxu0
    %v1964 = vadd.f32 %v433, %v1963
    %v1965 = vpop.f32.mrb[0].mxu0
    %v1966 = vadd.f32 %v437, %v1965
    %v1967 = vpop.f32.mrb[0].mxu0
    %v1968 = vadd.f32 %v433, %v1967
    %v1969 = vpop.f32.mrb[0].mxu0
    %v1970 = vadd.f32 %v437, %v1969
    %1971 = vmatprep.mubr.bf16.mxu0 %v197
    %1972 = vmatmul.mubr.bf16.gmra.mrb[0].mxu0 %v196
    %v1973 = vpop.f32.mrb[0].mxu0
    %v1974 = vadd.f32 %v433, %v1973
    %v1975 = vpop.f32.mrb[0].mxu0
    %v1976 = vadd.f32 %v437, %v1975
    %v1977 = vpop.f32.mrb[0].mxu0
    %v1978 = vadd.f32 %v433, %v1977
    %v1979 = vpop.f32.mrb[0].mxu0
    %v1980 = vadd.f32 %v437, %v1979
    %1981 = vmatprep.mubr.bf16.mxu0 %v204
    %1982 = vmatmul.mubr.bf16.gmra.mrb[0].mxu0 %v203
    %v1983 = vpop.f32.mrb[0].mxu0
    %v1984 = vadd.f32 %v433, %v1983
    %v1985 = vpop.f32.mrb[0].mxu0
    %v1986 = vadd.f32 %v437, %v1985
    %v1987 = vpop.f32.mrb[0].mxu0
    %v1988 = vadd.f32 %v433, %v1987
    %v1989 = vpop.f32.mrb[0].mxu0
    %v1990 = vadd.f32 %v437, %v1989
    %1991 = vmatprep.mubr.bf16.mxu0 %v211
    %1992 = vmatmul.mubr.bf16.gmra.mrb[0].mxu0 %v210
    %v1993 = vpop.f32.mrb[0].mxu0
    %v1994 = vadd.f32 %v433, %v1993
    %v1995 = vpop.f32.mrb[0].mxu0
    %v1996 = vadd.f32 %v437, %v1995
    %v1997 = vpop.f32.mrb[0].mxu0
    %v1998 = vadd.f32 %v433, %v1997
    %v1999 = vpop.f32.mrb[0].mxu0
    %v2000 = vadd.f32 %v437, %v1999
    %2001 = vmatprep.mubr.bf16.mxu0 %v218
    %2002 = vmatmul.mubr.bf16.gmra.mrb[0].mxu0 %v217
    %v2003 = vpop.f32.mrb[0].mxu0
    %v2004 = vadd.f32 %v433, %v2003
    %v2005 = vpop.f32.mrb[0].mxu0
    %v2006 = vadd.f32 %v437, %v2005
    %v2007 = vpop.f32.mrb[0].mxu0
    %v2008 = vadd.f32 %v433, %v2007
    %v2009 = vpop.f32.mrb[0].mxu0
    %v2010 = vadd.f32 %v437, %v2009
    %2011 = vdwg.mxu0
    %2012 = vmatprep.subr.bf16.mxu0 %v1097
    %2013 = vmatpush1.bf16.msra.mxu0 %v1096
    %2014 = vmatprep.subr.bf16.mxu0 %v1101
    %2015 = vmatpush1.bf16.msra.mxu0 %v1100
    %2016 = vmatprep.subr.bf16.mxu0 %v1105
    %2017 = vmatpush1.bf16.msra.mxu0 %v1104
    %2018 = vmatprep.subr.bf16.mxu0 %v1109
    %2019 = vmatpush1.bf16.msra.mxu0 %v1108
    %2020 = vmatprep.subr.bf16.mxu0 %v1113
    %2021 = vmatpush1.bf16.msra.mxu0 %v1112
    %2022 = vmatprep.subr.bf16.mxu0 %v1117
    %2023 = vmatpush1.bf16.msra.mxu0 %v1116
    %2024 = vmatprep.subr.bf16.mxu0 %v1121
    %2025 = vmatpush1.bf16.msra.mxu0 %v1120
    %2026 = vmatprep.subr.bf16.mxu0 %v1125
    %2027 = vmatpush1.bf16.msra.mxu0 %v1124
    %2028 = vmatprep.subr.bf16.mxu0 %v1129
    %2029 = vmatpush1.bf16.msra.mxu0 %v1128
    %2030 = vmatprep.subr.bf16.mxu0 %v1133
    %2031 = vmatpush1.bf16.msra.mxu0 %v1132
    %2032 = vmatprep.subr.bf16.mxu0 %v1137
    %2033 = vmatpush1.bf16.msra.mxu0 %v1136
    %2034 = vmatprep.subr.bf16.mxu0 %v1141
    %2035 = vmatpush1.bf16.msra.mxu0 %v1140
    %2036 = vmatprep.subr.bf16.mxu0 %v1145
    %2037 = vmatpush1.bf16.msra.mxu0 %v1144
    %2038 = vmatprep.subr.bf16.mxu0 %v1149
    %2039 = vmatpush1.bf16.msra.mxu0 %v1148
    %2040 = vmatprep.subr.bf16.mxu0 %v1153
    %2041 = vmatpush1.bf16.msra.mxu0 %v1152
    %2042 = vmatprep.subr.bf16.mxu0 %v1157
    %2043 = vmatpush1.bf16.msra.mxu0 %v1156
    %2044 = vmatprep.mubr.bf16.mxu0 %v171
    %2045 = vmatmul.mubr.bf16.gmra.mrb[0].mxu0 %v170
    %v2046 = vpop.f32.mrb[0].mxu0
    %v2047 = vadd.f32 %v1934, %v2046
    %v2048 = vpop.f32.mrb[0].mxu0
    %v2049 = vadd.f32 %v1936, %v2048
    %v2050 = vpop.f32.mrb[0].mxu0
    %v2051 = vadd.f32 %v1938, %v2050
    %v2052 = vpop.f32.mrb[0].mxu0
    %v2053 = vadd.f32 %v1940, %v2052
    %2054 = vmatprep.mubr.bf16.mxu0 %v178
    %2055 = vmatmul.mubr.bf16.gmra.mrb[0].mxu0 %v177
    %v2056 = vpop.f32.mrb[0].mxu0
    %v2057 = vadd.f32 %v1944, %v2056
    %v2058 = vpop.f32.mrb[0].mxu0
    %v2059 = vadd.f32 %v1946, %v2058
    %v2060 = vpop.f32.mrb[0].mxu0
    %v2061 = vadd.f32 %v1948, %v2060
    %v2062 = vpop.f32.mrb[0].mxu0
    %v2063 = vadd.f32 %v1950, %v2062
    %2064 = vmatprep.mubr.bf16.mxu0 %v185
    %2065 = vmatmul.mubr.bf16.gmra.mrb[0].mxu0 %v184
    %v2066 = vpop.f32.mrb[0].mxu0
    %v2067 = vadd.f32 %v1954, %v2066
    %v2068 = vpop.f32.mrb[0].mxu0
    %v2069 = vadd.f32 %v1956, %v2068
    %v2070 = vpop.f32.mrb[0].mxu0
    %v2071 = vadd.f32 %v1958, %v2070
    %v2072 = vpop.f32.mrb[0].mxu0
    %v2073 = vadd.f32 %v1960, %v2072
    %2074 = vmatprep.mubr.bf16.mxu0 %v192
    %2075 = vmatmul.mubr.bf16.gmra.mrb[0].mxu0 %v191
    %v2076 = vpop.f32.mrb[0].mxu0
    %v2077 = vadd.f32 %v1964, %v2076
    %v2078 = vpop.f32.mrb[0].mxu0
    %v2079 = vadd.f32 %v1966, %v2078
    %v2080 = vpop.f32.mrb[0].mxu0
    %v2081 = vadd.f32 %v1968, %v2080
    %v2082 = vpop.f32.mrb[0].mxu0
    %v2083 = vadd.f32 %v1970, %v2082
    %2084 = vmatprep.mubr.bf16.mxu0 %v199
    %2085 = vmatmul.mubr.bf16.gmra.mrb[0].mxu0 %v198
    %v2086 = vpop.f32.mrb[0].mxu0
    %v2087 = vadd.f32 %v1974, %v2086
    %v2088 = vpop.f32.mrb[0].mxu0
    %v2089 = vadd.f32 %v1976, %v2088
    %v2090 = vpop.f32.mrb[0].mxu0
    %v2091 = vadd.f32 %v1978, %v2090
    %v2092 = vpop.f32.mrb[0].mxu0
    %v2093 = vadd.f32 %v1980, %v2092
    %2094 = vmatprep.mubr.bf16.mxu0 %v206
    %2095 = vmatmul.mubr.bf16.gmra.mrb[0].mxu0 %v205
    %v2096 = vpop.f32.mrb[0].mxu0
    %v2097 = vadd.f32 %v1984, %v2096
    %v2098 = vpop.f32.mrb[0].mxu0
    %v2099 = vadd.f32 %v1986, %v2098
    %v2100 = vpop.f32.mrb[0].mxu0
    %v2101 = vadd.f32 %v1988, %v2100
    %v2102 = vpop.f32.mrb[0].mxu0
    %v2103 = vadd.f32 %v1990, %v2102
    %2104 = vmatprep.mubr.bf16.mxu0 %v213
    %2105 = vmatmul.mubr.bf16.gmra.mrb[0].mxu0 %v212
    %v2106 = vpop.f32.mrb[0].mxu0
    %v2107 = vadd.f32 %v1994, %v2106
    %v2108 = vpop.f32.mrb[0].mxu0
    %v2109 = vadd.f32 %v1996, %v2108
    %v2110 = vpop.f32.mrb[0].mxu0
    %v2111 = vadd.f32 %v1998, %v2110
    %v2112 = vpop.f32.mrb[0].mxu0
    %v2113 = vadd.f32 %v2000, %v2112
    %2114 = vmatprep.mubr.bf16.mxu0 %v220
    %2115 = vmatmul.mubr.bf16.gmra.mrb[0].mxu0 %v219
    %v2116 = vpop.f32.mrb[0].mxu0
    %v2117 = vadd.f32 %v2004, %v2116
    %v2118 = vpop.f32.mrb[0].mxu0
    %v2119 = vadd.f32 %v2006, %v2118
    %v2120 = vpop.f32.mrb[0].mxu0
    %v2121 = vadd.f32 %v2008, %v2120
    %v2122 = vpop.f32.mrb[0].mxu0
    %v2123 = vadd.f32 %v2010, %v2122
    %2124 = vdwg.mxu0
    %2125 = vmatprep.subr.bf16.mxu0 %v1161
    %2126 = vmatpush1.bf16.msra.mxu0 %v1160
    %2127 = vmatprep.subr.bf16.mxu0 %v1165
    %2128 = vmatpush1.bf16.msra.mxu0 %v1164
    %2129 = vmatprep.subr.bf16.mxu0 %v1169
    %2130 = vmatpush1.bf16.msra.mxu0 %v1168
    %2131 = vmatprep.subr.bf16.mxu0 %v1173
    %2132 = vmatpush1.bf16.msra.mxu0 %v1172
    %2133 = vmatprep.subr.bf16.mxu0 %v1177
    %2134 = vmatpush1.bf16.msra.mxu0 %v1176
    %2135 = vmatprep.subr.bf16.mxu0 %v1181
    %2136 = vmatpush1.bf16.msra.mxu0 %v1180
    %2137 = vmatprep.subr.bf16.mxu0 %v1185
    %2138 = vmatpush1.bf16.msra.mxu0 %v1184
    %2139 = vmatprep.subr.bf16.mxu0 %v1189
    %2140 = vmatpush1.bf16.msra.mxu0 %v1188
    %2141 = vmatprep.subr.bf16.mxu0 %v1193
    %2142 = vmatpush1.bf16.msra.mxu0 %v1192
    %2143 = vmatprep.subr.bf16.mxu0 %v1197
    %2144 = vmatpush1.bf16.msra.mxu0 %v1196
    %2145 = vmatprep.subr.bf16.mxu0 %v1201
    %2146 = vmatpush1.bf16.msra.mxu0 %v1200
    %2147 = vmatprep.subr.bf16.mxu0 %v1205
    %2148 = vmatpush1.bf16.msra.mxu0 %v1204
    %2149 = vmatprep.subr.bf16.mxu0 %v1209
    %2150 = vmatpush1.bf16.msra.mxu0 %v1208
    %2151 = vmatprep.subr.bf16.mxu0 %v1213
    %2152 = vmatpush1.bf16.msra.mxu0 %v1212
    %2153 = vmatprep.subr.bf16.mxu0 %v1217
    %2154 = vmatpush1.bf16.msra.mxu0 %v1216
    %2155 = vmatprep.subr.bf16.mxu0 %v1221
    %2156 = vmatpush1.bf16.msra.mxu0 %v1220
    %2157 = vmatprep.mubr.bf16.mxu0 %v173
    %2158 = vmatmul.mubr.bf16.gmra.mrb[0].mxu0 %v172
    %v2159 = vpop.f32.mrb[0].mxu0
    %v2160 = vadd.f32 %v2047, %v2159
    %v2161 = vpop.f32.mrb[0].mxu0
    %v2162 = vadd.f32 %v2049, %v2161
    %v2163 = vpop.f32.mrb[0].mxu0
    %v2164 = vadd.f32 %v2051, %v2163
    %v2165 = vpop.f32.mrb[0].mxu0
    %v2166 = vadd.f32 %v2053, %v2165
    %2167 = vmatprep.mubr.bf16.mxu0 %v180
    %2168 = vmatmul.mubr.bf16.gmra.mrb[0].mxu0 %v179
    %v2169 = vpop.f32.mrb[0].mxu0
    %v2170 = vadd.f32 %v2057, %v2169
    %v2171 = vpop.f32.mrb[0].mxu0
    %v2172 = vadd.f32 %v2059, %v2171
    %v2173 = vpop.f32.mrb[0].mxu0
    %v2174 = vadd.f32 %v2061, %v2173
    %v2175 = vpop.f32.mrb[0].mxu0
    %v2176 = vadd.f32 %v2063, %v2175
    %2177 = vmatprep.mubr.bf16.mxu0 %v187
    %2178 = vmatmul.mubr.bf16.gmra.mrb[0].mxu0 %v186
    %v2179 = vpop.f32.mrb[0].mxu0
    %v2180 = vadd.f32 %v2067, %v2179
    %v2181 = vpop.f32.mrb[0].mxu0
    %v2182 = vadd.f32 %v2069, %v2181
    %v2183 = vpop.f32.mrb[0].mxu0
    %v2184 = vadd.f32 %v2071, %v2183
    %v2185 = vpop.f32.mrb[0].mxu0
    %v2186 = vadd.f32 %v2073, %v2185
    %2187 = vmatprep.mubr.bf16.mxu0 %v194
    %2188 = vmatmul.mubr.bf16.gmra.mrb[0].mxu0 %v193
    %v2189 = vpop.f32.mrb[0].mxu0
    %v2190 = vadd.f32 %v2077, %v2189
    %v2191 = vpop.f32.mrb[0].mxu0
    %v2192 = vadd.f32 %v2079, %v2191
    %v2193 = vpop.f32.mrb[0].mxu0
    %v2194 = vadd.f32 %v2081, %v2193
    %v2195 = vpop.f32.mrb[0].mxu0
    %v2196 = vadd.f32 %v2083, %v2195
    %2197 = vmatprep.mubr.bf16.mxu0 %v201
    %2198 = vmatmul.mubr.bf16.gmra.mrb[0].mxu0 %v200
    %v2199 = vpop.f32.mrb[0].mxu0
    %v2200 = vadd.f32 %v2087, %v2199
    %v2201 = vpop.f32.mrb[0].mxu0
    %v2202 = vadd.f32 %v2089, %v2201
    %v2203 = vpop.f32.mrb[0].mxu0
    %v2204 = vadd.f32 %v2091, %v2203
    %v2205 = vpop.f32.mrb[0].mxu0
    %v2206 = vadd.f32 %v2093, %v2205
    %2207 = vmatprep.mubr.bf16.mxu0 %v208
    %2208 = vmatmul.mubr.bf16.gmra.mrb[0].mxu0 %v207
    %v2209 = vpop.f32.mrb[0].mxu0
    %v2210 = vadd.f32 %v2097, %v2209
    %v2211 = vpop.f32.mrb[0].mxu0
    %v2212 = vadd.f32 %v2099, %v2211
    %v2213 = vpop.f32.mrb[0].mxu0
    %v2214 = vadd.f32 %v2101, %v2213
    %v2215 = vpop.f32.mrb[0].mxu0
    %v2216 = vadd.f32 %v2103, %v2215
    %2217 = vmatprep.mubr.bf16.mxu0 %v215
    %2218 = vmatmul.mubr.bf16.gmra.mrb[0].mxu0 %v214
    %v2219 = vpop.f32.mrb[0].mxu0
    %v2220 = vadd.f32 %v2107, %v2219
    %v2221 = vpop.f32.mrb[0].mxu0
    %v2222 = vadd.f32 %v2109, %v2221
    %v2223 = vpop.f32.mrb[0].mxu0
    %v2224 = vadd.f32 %v2111, %v2223
    %v2225 = vpop.f32.mrb[0].mxu0
    %v2226 = vadd.f32 %v2113, %v2225
    %2227 = vmatprep.mubr.bf16.mxu0 %v222
    %2228 = vmatmul.mubr.bf16.gmra.mrb[0].mxu0 %v221
    %v2229 = vpop.f32.mrb[0].mxu0
    %v2230 = vadd.f32 %v2117, %v2229
    %v2231 = vpop.f32.mrb[0].mxu0
    %v2232 = vadd.f32 %v2119, %v2231
    %v2233 = vpop.f32.mrb[0].mxu0
    %v2234 = vadd.f32 %v2121, %v2233
    %v2235 = vpop.f32.mrb[0].mxu0
    %v2236 = vadd.f32 %v2123, %v2235
    %2237 = vdwg.mxu0
    %2238 = vmatprep.subr.bf16.mxu0 %v1225
    %2239 = vmatpush1.bf16.msra.mxu0 %v1224
    %2240 = vmatprep.subr.bf16.mxu0 0
    %2241 = vmatpush1.bf16.msra.mxu0 0
    %2242 = vmatprep.subr.bf16.mxu0 0
    %2243 = vmatpush1.bf16.msra.mxu0 0
    %2244 = vmatprep.subr.bf16.mxu0 0
    %2245 = vmatpush1.bf16.msra.mxu0 0
    %2246 = vmatprep.subr.bf16.mxu0 0
    %2247 = vmatpush1.bf16.msra.mxu0 0
    %2248 = vmatprep.subr.bf16.mxu0 0
    %2249 = vmatpush1.bf16.msra.mxu0 0
    %2250 = vmatprep.subr.bf16.mxu0 0
    %2251 = vmatpush1.bf16.msra.mxu0 0
    %2252 = vmatprep.subr.bf16.mxu0 0
    %2253 = vmatpush1.bf16.msra.mxu0 0
    %2254 = vmatprep.subr.bf16.mxu0 0
    %2255 = vmatpush1.bf16.msra.mxu0 0
    %2256 = vmatprep.subr.bf16.mxu0 0
    %2257 = vmatpush1.bf16.msra.mxu0 0
    %2258 = vmatprep.subr.bf16.mxu0 0
    %2259 = vmatpush1.bf16.msra.mxu0 0
    %2260 = vmatprep.subr.bf16.mxu0 0
    %2261 = vmatpush1.bf16.msra.mxu0 0
    %2262 = vmatprep.subr.bf16.mxu0 0
    %2263 = vmatpush1.bf16.msra.mxu0 0
    %2264 = vmatprep.subr.bf16.mxu0 0
    %2265 = vmatpush1.bf16.msra.mxu0 0
    %2266 = vmatprep.subr.bf16.mxu0 0
    %2267 = vmatpush1.bf16.msra.mxu0 0
    %2268 = vmatprep.subr.bf16.mxu0 0
    %2269 = vmatpush1.bf16.msra.mxu0 0
    %2270 = vmatprep.mubr.bf16.mxu0 0
    %2271 = vmatmul.mubr.bf16.gmra.mrb[0].mxu0 %v1424
    %v2272 = vpop.f32.mrb[0].mxu0
    %v2273 = vadd.f32 %v2160, %v2272
    %v2274 = vpop.f32.mrb[0].mxu0
    %v2275 = vadd.f32 %v2162, %v2274
    %v2276 = vpop.f32.mrb[0].mxu0
    %v2277 = vadd.f32 %v2164, %v2276
    %v2278 = vpop.f32.mrb[0].mxu0
    %v2279 = vadd.f32 %v2166, %v2278
    %2280 = vmatprep.mubr.bf16.mxu0 0
    %2281 = vmatmul.mubr.bf16.gmra.mrb[0].mxu0 %v1427
    %v2282 = vpop.f32.mrb[0].mxu0
    %v2283 = vadd.f32 %v2170, %v2282
    %v2284 = vpop.f32.mrb[0].mxu0
    %v2285 = vadd.f32 %v2172, %v2284
    %v2286 = vpop.f32.mrb[0].mxu0
    %v2287 = vadd.f32 %v2174, %v2286
    %v2288 = vpop.f32.mrb[0].mxu0
    %v2289 = vadd.f32 %v2176, %v2288
    %2290 = vmatprep.mubr.bf16.mxu0 0
    %2291 = vmatmul.mubr.bf16.gmra.mrb[0].mxu0 %v1430
    %v2292 = vpop.f32.mrb[0].mxu0
    %v2293 = vadd.f32 %v2180, %v2292
    %v2294 = vpop.f32.mrb[0].mxu0
    %v2295 = vadd.f32 %v2182, %v2294
    %v2296 = vpop.f32.mrb[0].mxu0
    %v2297 = vadd.f32 %v2184, %v2296
    %v2298 = vpop.f32.mrb[0].mxu0
    %v2299 = vadd.f32 %v2186, %v2298
    %2300 = vmatprep.mubr.bf16.mxu0 0
    %2301 = vmatmul.mubr.bf16.gmra.mrb[0].mxu0 %v1433
    %v2302 = vpop.f32.mrb[0].mxu0
    %v2303 = vadd.f32 %v2190, %v2302
    %v2304 = vpop.f32.mrb[0].mxu0
    %v2305 = vadd.f32 %v2192, %v2304
    %v2306 = vpop.f32.mrb[0].mxu0
    %v2307 = vadd.f32 %v2194, %v2306
    %v2308 = vpop.f32.mrb[0].mxu0
    %v2309 = vadd.f32 %v2196, %v2308
    %2310 = vmatprep.mubr.bf16.mxu0 0
    %2311 = vmatmul.mubr.bf16.gmra.mrb[0].mxu0 %v1436
    %v2312 = vpop.f32.mrb[0].mxu0
    %v2313 = vadd.f32 %v2200, %v2312
    %v2314 = vpop.f32.mrb[0].mxu0
    %v2315 = vadd.f32 %v2202, %v2314
    %v2316 = vpop.f32.mrb[0].mxu0
    %v2317 = vadd.f32 %v2204, %v2316
    %v2318 = vpop.f32.mrb[0].mxu0
    %v2319 = vadd.f32 %v2206, %v2318
    %2320 = vmatprep.mubr.bf16.mxu0 0
    %2321 = vmatmul.mubr.bf16.gmra.mrb[0].mxu0 %v1439
    %v2322 = vpop.f32.mrb[0].mxu0
    %v2323 = vadd.f32 %v2210, %v2322
    %v2324 = vpop.f32.mrb[0].mxu0
    %v2325 = vadd.f32 %v2212, %v2324
    %v2326 = vpop.f32.mrb[0].mxu0
    %v2327 = vadd.f32 %v2214, %v2326
    %v2328 = vpop.f32.mrb[0].mxu0
    %v2329 = vadd.f32 %v2216, %v2328
    %2330 = vmatprep.mubr.bf16.mxu0 0
    %2331 = vmatmul.mubr.bf16.gmra.mrb[0].mxu0 %v1442
    %v2332 = vpop.f32.mrb[0].mxu0
    %v2333 = vadd.f32 %v2220, %v2332
    %v2334 = vpop.f32.mrb[0].mxu0
    %v2335 = vadd.f32 %v2222, %v2334
    %v2336 = vpop.f32.mrb[0].mxu0
    %v2337 = vadd.f32 %v2224, %v2336
    %v2338 = vpop.f32.mrb[0].mxu0
    %v2339 = vadd.f32 %v2226, %v2338
    %2340 = vmatprep.mubr.bf16.mxu0 0
    %2341 = vmatmul.mubr.bf16.gmra.mrb[0].mxu0 %v1445
    %v2342 = vpop.f32.mrb[0].mxu0
    %v2343 = vadd.f32 %v2230, %v2342
    %v2344 = vpop.f32.mrb[0].mxu0
    %v2345 = vadd.f32 %v2232, %v2344
    %v2346 = vpop.f32.mrb[0].mxu0
    %v2347 = vadd.f32 %v2234, %v2346
    %v2348 = vpop.f32.mrb[0].mxu0
    %v2349 = vadd.f32 %v2236, %v2348
    %2350 = vdwg.mxu0
    %v2351 = vmax.f32 %v1821, 0.0
    %v2352 = vmax.f32 %v1823, 0.0
    %v2353 = vmax.f32 %v2273, 0.0
    %v2354 = vmax.f32 %v2275, 0.0
    %v2355 = vmax.f32 %v1825, 0.0
    %v2356 = vmax.f32 %v1827, 0.0
    %v2357 = vmax.f32 %v2277, 0.0
    %v2358 = vmax.f32 %v2279, 0.0
    %v2359 = vmax.f32 %v1831, 0.0
    %v2360 = vmax.f32 %v1833, 0.0
    %v2361 = vmax.f32 %v2283, 0.0
    %v2362 = vmax.f32 %v2285, 0.0
    %v2363 = vmax.f32 %v1835, 0.0
    %v2364 = vmax.f32 %v1837, 0.0
    %v2365 = vmax.f32 %v2287, 0.0
    %v2366 = vmax.f32 %v2289, 0.0
    %v2367 = vmax.f32 %v1841, 0.0
    %v2368 = vmax.f32 %v1843, 0.0
    %v2369 = vmax.f32 %v2293, 0.0
    %v2370 = vmax.f32 %v2295, 0.0
    %v2371 = vmax.f32 %v1845, 0.0
    %v2372 = vmax.f32 %v1847, 0.0
    %v2373 = vmax.f32 %v2297, 0.0
    %v2374 = vmax.f32 %v2299, 0.0
    %v2375 = vmax.f32 %v1851, 0.0
    %v2376 = vmax.f32 %v1853, 0.0
    %v2377 = vmax.f32 %v2303, 0.0
    %v2378 = vmax.f32 %v2305, 0.0
    %v2379 = vmax.f32 %v1855, 0.0
    %v2380 = vmax.f32 %v1857, 0.0
    %v2381 = vmax.f32 %v2307, 0.0
    %v2382 = vmax.f32 %v2309, 0.0
    %v2383 = vmax.f32 %v1861, 0.0
    %v2384 = vmax.f32 %v1863, 0.0
    %v2385 = vmax.f32 %v2313, 0.0
    %v2386 = vmax.f32 %v2315, 0.0
    %v2387 = vmax.f32 %v1865, 0.0
    %v2388 = vmax.f32 %v1867, 0.0
    %v2389 = vmax.f32 %v2317, 0.0
    %v2390 = vmax.f32 %v2319, 0.0
    %v2391 = vmax.f32 %v1871, 0.0
    %v2392 = vmax.f32 %v1873, 0.0
    %v2393 = vmax.f32 %v2323, 0.0
    %v2394 = vmax.f32 %v2325, 0.0
    %v2395 = vmax.f32 %v1875, 0.0
    %v2396 = vmax.f32 %v1877, 0.0
    %v2397 = vmax.f32 %v2327, 0.0
    %v2398 = vmax.f32 %v2329, 0.0
    %v2399 = vmax.f32 %v1881, 0.0
    %v2400 = vmax.f32 %v1883, 0.0
    %v2401 = vmax.f32 %v2333, 0.0
    %v2402 = vmax.f32 %v2335, 0.0
    %v2403 = vmax.f32 %v1885, 0.0
    %v2404 = vmax.f32 %v1887, 0.0
    %v2405 = vmax.f32 %v2337, 0.0
    %v2406 = vmax.f32 %v2339, 0.0
    %v2407 = vmax.f32 %v1891, 0.0
    %v2408 = vmax.f32 %v1893, 0.0
    %v2409 = vmax.f32 %v2343, 0.0
    %v2410 = vmax.f32 %v2345, 0.0
    %v2411 = vmax.f32 %v1895, 0.0
    %v2412 = vmax.f32 %v1897, 0.0
    %v2413 = vmax.f32 %v2347, 0.0
    %v2414 = vmax.f32 %v2349, 0.0
    %v2415 = vpack.c.bf16 %v2355, %v2351
    %v2416 = vpack.c.bf16 %v2356, %v2352
    %v2417 = vpack.c.bf16 %v2357, %v2353
    %v2418 = vpack.c.bf16 %v2358, %v2354
    %v2419 = vpack.c.bf16 %v2363, %v2359
    %v2420 = vpack.c.bf16 %v2364, %v2360
    %v2421 = vpack.c.bf16 %v2365, %v2361
    %v2422 = vpack.c.bf16 %v2366, %v2362
    %v2423 = vpack.c.bf16 %v2371, %v2367
    %v2424 = vpack.c.bf16 %v2372, %v2368
    %v2425 = vpack.c.bf16 %v2373, %v2369
    %v2426 = vpack.c.bf16 %v2374, %v2370
    %v2427 = vpack.c.bf16 %v2379, %v2375
    %v2428 = vpack.c.bf16 %v2380, %v2376
    %v2429 = vpack.c.bf16 %v2381, %v2377
    %v2430 = vpack.c.bf16 %v2382, %v2378
    %v2431 = vpack.c.bf16 %v2387, %v2383
    %v2432 = vpack.c.bf16 %v2388, %v2384
    %v2433 = vpack.c.bf16 %v2389, %v2385
    %v2434 = vpack.c.bf16 %v2390, %v2386
    %v2435 = vpack.c.bf16 %v2395, %v2391
    %v2436 = vpack.c.bf16 %v2396, %v2392
    %v2437 = vpack.c.bf16 %v2397, %v2393
    %v2438 = vpack.c.bf16 %v2398, %v2394
    %v2439 = vpack.c.bf16 %v2403, %v2399
    %v2440 = vpack.c.bf16 %v2404, %v2400
    %v2441 = vpack.c.bf16 %v2405, %v2401
    %v2442 = vpack.c.bf16 %v2406, %v2402
    %v2443 = vpack.c.bf16 %v2411, %v2407
    %v2444 = vpack.c.bf16 %v2412, %v2408
    %v2445 = vpack.c.bf16 %v2413, %v2409
    %v2446 = vpack.c.bf16 %v2414, %v2410
    %v2447 = vld [vmem:[#allocation2] sm:$0xff]
    %v2448 = vld [vmem:[#allocation2 + $0x8] sm:$0xff]
    %v2449 = vld [vmem:[#allocation2 + $0x10] sm:$0xff]
    %v2450 = vld [vmem:[#allocation2 + $0x18] sm:$0xff]
    %v2451 = vld [vmem:[#allocation2 + $0x20] sm:$0xff]
    %v2452 = vld [vmem:[#allocation2 + $0x28] sm:$0xff]
    %v2453 = vld [vmem:[#allocation2 + $0x30] sm:$0xff]
    %v2454 = vld [vmem:[#allocation2 + $0x38] sm:$0xff]
    %v2455 = vld [vmem:[#allocation2 + $0x40] sm:$0xff]
    %v2456 = vld [vmem:[#allocation2 + $0x48] sm:$0xff]
    %v2457 = vld [vmem:[#allocation2 + $0x50] sm:$0xff]
    %v2458 = vld [vmem:[#allocation2 + $0x58] sm:$0xff]
    %v2459 = vld [vmem:[#allocation2 + $0x60] sm:$0xff]
    %v2460 = vld [vmem:[#allocation2 + $0x68] sm:$0xff]
    %v2461 = vld [vmem:[#allocation2 + $0x70] sm:$0xff]
    %v2462 = vld [vmem:[#allocation2 + $0x78] sm:$0xff]
    %v2463 = vld [vmem:[#allocation2 + $0x80] sm:$0xff]
    %v2464 = vld [vmem:[#allocation2 + $0x88] sm:$0xff]
    %v2465 = vld [vmem:[#allocation2 + $0x90] sm:$0xff]
    %v2466 = vld [vmem:[#allocation2 + $0x98] sm:$0xff]
    %v2467 = vld [vmem:[#allocation2 + $0xa0] sm:$0xff]
    %v2468 = vld [vmem:[#allocation2 + $0xa8] sm:$0xff]
    %v2469 = vld [vmem:[#allocation2 + $0xb0] sm:$0xff]
    %v2470 = vld [vmem:[#allocation2 + $0xb8] sm:$0xff]
    %v2471 = vld [vmem:[#allocation2 + $0xc0] sm:$0xff]
    %v2472 = vld [vmem:[#allocation2 + $0xc8] sm:$0xff]
    %v2473 = vld [vmem:[#allocation2 + $0xd0] sm:$0xff]
    %v2474 = vld [vmem:[#allocation2 + $0xd8] sm:$0xff]
    %v2475 = vld [vmem:[#allocation2 + $0xe0] sm:$0xff]
    %v2476 = vld [vmem:[#allocation2 + $0xe8] sm:$0xff]
    %v2477 = vld [vmem:[#allocation2 + $0xf0] sm:$0xff]
    %v2478 = vld [vmem:[#allocation2 + $0xf8] sm:$0xff]
    %v2479 = vld [vmem:[#allocation2 + $0x100] sm:$0xff]
    %v2480 = vld [vmem:[#allocation2 + $0x108] sm:$0xff]
    %v2481 = vld [vmem:[#allocation2 + $0x110] sm:$0xff]
    %v2482 = vld [vmem:[#allocation2 + $0x118] sm:$0xff]
    %v2483 = vld [vmem:[#allocation2 + $0x120] sm:$0xff]
    %v2484 = vld [vmem:[#allocation2 + $0x128] sm:$0xff]
    %v2485 = vld [vmem:[#allocation2 + $0x130] sm:$0xff]
    %v2486 = vld [vmem:[#allocation2 + $0x138] sm:$0xff]
    %v2487 = vld [vmem:[#allocation2 + $0x140] sm:$0xff]
    %v2488 = vld [vmem:[#allocation2 + $0x148] sm:$0xff]
    %v2489 = vld [vmem:[#allocation2 + $0x150] sm:$0xff]
    %v2490 = vld [vmem:[#allocation2 + $0x158] sm:$0xff]
    %v2491 = vld [vmem:[#allocation2 + $0x160] sm:$0xff]
    %v2492 = vld [vmem:[#allocation2 + $0x168] sm:$0xff]
    %v2493 = vld [vmem:[#allocation2 + $0x170] sm:$0xff]
    %v2494 = vld [vmem:[#allocation2 + $0x178] sm:$0xff]
    %v2495 = vld [vmem:[#allocation2 + $0x180] sm:$0xff]
    %v2496 = vld [vmem:[#allocation2 + $0x188] sm:$0xff]
    %v2497 = vld [vmem:[#allocation2 + $0x190] sm:$0xff]
    %v2498 = vld [vmem:[#allocation2 + $0x198] sm:$0xff]
    %v2499 = vld [vmem:[#allocation2 + $0x1a0] sm:$0xff]
    %v2500 = vld [vmem:[#allocation2 + $0x1a8] sm:$0xff]
    %v2501 = vld [vmem:[#allocation2 + $0x1b0] sm:$0xff]
    %v2502 = vld [vmem:[#allocation2 + $0x1b8] sm:$0xff]
    %v2503 = vld [vmem:[#allocation2 + $0x1c0] sm:$0xff]
    %v2504 = vld [vmem:[#allocation2 + $0x1c8] sm:$0xff]
    %v2505 = vld [vmem:[#allocation2 + $0x1d0] sm:$0xff]
    %v2506 = vld [vmem:[#allocation2 + $0x1d8] sm:$0xff]
    %v2507 = vld [vmem:[#allocation2 + $0x1e0] sm:$0xff]
    %v2508 = vld [vmem:[#allocation2 + $0x1e8] sm:$0xff]
    %v2509 = vld [vmem:[#allocation2 + $0x1f0] sm:$0xff]
    %v2510 = vld [vmem:[#allocation2 + $0x1f8] sm:$0xff]
    %v2511 = vld [vmem:[#allocation2 + $0x200] sm:$0xff]
    %v2512 = vld [vmem:[#allocation2 + $0x208] sm:$0xff]
    %v2513 = vld [vmem:[#allocation2 + $0x210] sm:$0xff]
    %v2514 = vld [vmem:[#allocation2 + $0x218] sm:$0xff]
    %v2515 = vld [vmem:[#allocation2 + $0x220] sm:$0xff]
    %v2516 = vld [vmem:[#allocation2 + $0x228] sm:$0xff]
    %v2517 = vld [vmem:[#allocation2 + $0x230] sm:$0xff]
    %v2518 = vld [vmem:[#allocation2 + $0x238] sm:$0xff]
    %v2519 = vld [vmem:[#allocation2 + $0x240] sm:$0xff]
    %v2520 = vld [vmem:[#allocation2 + $0x248] sm:$0xff]
    %v2521 = vld [vmem:[#allocation2 + $0x250] sm:$0xff]
    %v2522 = vld [vmem:[#allocation2 + $0x258] sm:$0xff]
    %v2523 = vld [vmem:[#allocation2 + $0x260] sm:$0xff]
    %v2524 = vld [vmem:[#allocation2 + $0x268] sm:$0xff]
    %v2525 = vld [vmem:[#allocation2 + $0x270] sm:$0xff]
    %v2526 = vld [vmem:[#allocation2 + $0x278] sm:$0xff]
    %v2527 = vld [vmem:[#allocation2 + $0x280] sm:$0xff]
    %v2528 = vld [vmem:[#allocation2 + $0x288] sm:$0xff]
    %v2529 = vld [vmem:[#allocation2 + $0x290] sm:$0xff]
    %v2530 = vld [vmem:[#allocation2 + $0x298] sm:$0xff]
    %v2531 = vld [vmem:[#allocation2 + $0x2a0] sm:$0xff]
    %v2532 = vld [vmem:[#allocation2 + $0x2a8] sm:$0xff]
    %v2533 = vld [vmem:[#allocation2 + $0x2b0] sm:$0xff]
    %v2534 = vld [vmem:[#allocation2 + $0x2b8] sm:$0xff]
    %v2535 = vld [vmem:[#allocation2 + $0x2c0] sm:$0xff]
    %v2536 = vld [vmem:[#allocation2 + $0x2c8] sm:$0xff]
    %v2537 = vld [vmem:[#allocation2 + $0x2d0] sm:$0xff]
    %v2538 = vld [vmem:[#allocation2 + $0x2d8] sm:$0xff]
    %v2539 = vld [vmem:[#allocation2 + $0x2e0] sm:$0xff]
    %v2540 = vld [vmem:[#allocation2 + $0x2e8] sm:$0xff]
    %v2541 = vld [vmem:[#allocation2 + $0x2f0] sm:$0xff]
    %v2542 = vld [vmem:[#allocation2 + $0x2f8] sm:$0xff]
    %v2543 = vld [vmem:[#allocation2 + $0x300] sm:$0xff]
    %v2544 = vld [vmem:[#allocation2 + $0x308] sm:$0xff]
    %v2545 = vld [vmem:[#allocation2 + $0x310] sm:$0xff]
    %v2546 = vld [vmem:[#allocation2 + $0x318] sm:$0xff]
    %v2547 = vld [vmem:[#allocation2 + $0x320] sm:$0xff]
    %v2548 = vld [vmem:[#allocation2 + $0x328] sm:$0xff]
    %v2549 = vld [vmem:[#allocation2 + $0x330] sm:$0xff]
    %v2550 = vld [vmem:[#allocation2 + $0x338] sm:$0xff]
    %v2551 = vld [vmem:[#allocation2 + $0x340] sm:$0xff]
    %v2552 = vld [vmem:[#allocation2 + $0x348] sm:$0xff]
    %v2553 = vld [vmem:[#allocation2 + $0x350] sm:$0xff]
    %v2554 = vld [vmem:[#allocation2 + $0x358] sm:$0xff]
    %v2555 = vld [vmem:[#allocation2 + $0x360] sm:$0xff]
    %v2556 = vld [vmem:[#allocation2 + $0x368] sm:$0xff]
    %v2557 = vld [vmem:[#allocation2 + $0x370] sm:$0xff]
    %v2558 = vld [vmem:[#allocation2 + $0x378] sm:$0xff]
    %v2559 = vld [vmem:[#allocation2 + $0x380] sm:$0xff]
    %v2560 = vld [vmem:[#allocation2 + $0x388] sm:$0xff]
    %v2561 = vld [vmem:[#allocation2 + $0x390] sm:$0xff]
    %v2562 = vld [vmem:[#allocation2 + $0x398] sm:$0xff]
    %v2563 = vld [vmem:[#allocation2 + $0x3a0] sm:$0xff]
    %v2564 = vld [vmem:[#allocation2 + $0x3a8] sm:$0xff]
    %v2565 = vld [vmem:[#allocation2 + $0x3b0] sm:$0xff]
    %v2566 = vld [vmem:[#allocation2 + $0x3b8] sm:$0xff]
    %v2567 = vld [vmem:[#allocation2 + $0x3c0] sm:$0xff]
    %v2568 = vld [vmem:[#allocation2 + $0x3c8] sm:$0xff]
    %v2569 = vld [vmem:[#allocation2 + $0x3d0] sm:$0xff]
    %v2570 = vld [vmem:[#allocation2 + $0x3d8] sm:$0xff]
    %v2571 = vld [vmem:[#allocation2 + $0x3e0] sm:$0xff]
    %v2572 = vld [vmem:[#allocation2 + $0x3e8] sm:$0xff]
    %v2573 = vld [vmem:[#allocation2 + $0x3f0] sm:$0xff]
    %v2574 = vld [vmem:[#allocation2 + $0x3f8] sm:$0xff]
    %v2575 = vld [vmem:[%s4] sm:$0xf]
    %v2577 = vlaneseq
    %v2578 = vshrl.u32 %v2577, 7
    %v2579 = vsub.s32 0, %v2578
    %v2580 = vrot.slane %v2575, %v2579
    %v2581 = vlaneseq
    %v2582 = vshrl.u32 %v2581, 7
    %v2583 = vsub.s32 1, %v2582
    %v2584 = vrot.slane %v2575, %v2583
    %v2585 = vlaneseq
    %v2586 = vshrl.u32 %v2585, 7
    %v2587 = vsub.s32 2, %v2586
    %v2588 = vrot.slane %v2575, %v2587
    %v2589 = vlaneseq
    %v2590 = vshrl.u32 %v2589, 7
    %v2591 = vsub.s32 3, %v2590
    %v2592 = vrot.slane %v2575, %v2591
    %v2725 = vunpack.c.l.b16 %v2447
    %v2726 = vunpack.c.h.b16 %v2447
    %v2727 = vunpack.c.l.b16 %v2448
    %v2728 = vunpack.c.h.b16 %v2448
    %v2729 = vunpack.c.l.b16 %v2449
    %v2730 = vunpack.c.h.b16 %v2449
    %v2731 = vunpack.c.l.b16 %v2450
    %v2732 = vunpack.c.h.b16 %v2450
    %v2733 = vunpack.c.l.b16 %v2451
    %v2734 = vunpack.c.h.b16 %v2451
    %v2735 = vunpack.c.l.b16 %v2452
    %v2736 = vunpack.c.h.b16 %v2452
    %v2737 = vunpack.c.l.b16 %v2453
    %v2738 = vunpack.c.h.b16 %v2453
    %v2739 = vunpack.c.l.b16 %v2454
    %v2740 = vunpack.c.h.b16 %v2454
    %v2741 = vunpack.c.l.b16 %v2455
    %v2742 = vunpack.c.h.b16 %v2455
    %v2743 = vunpack.c.l.b16 %v2456
    %v2744 = vunpack.c.h.b16 %v2456
    %v2745 = vunpack.c.l.b16 %v2457
    %v2746 = vunpack.c.h.b16 %v2457
    %v2747 = vunpack.c.l.b16 %v2458
    %v2748 = vunpack.c.h.b16 %v2458
    %v2749 = vunpack.c.l.b16 %v2459
    %v2750 = vunpack.c.h.b16 %v2459
    %v2751 = vunpack.c.l.b16 %v2460
    %v2752 = vunpack.c.h.b16 %v2460
    %v2753 = vunpack.c.l.b16 %v2461
    %v2754 = vunpack.c.h.b16 %v2461
    %v2755 = vunpack.c.l.b16 %v2462
    %v2756 = vunpack.c.h.b16 %v2462
    %v2757 = vunpack.c.l.b16 %v2463
    %v2758 = vunpack.c.h.b16 %v2463
    %v2759 = vunpack.c.l.b16 %v2464
    %v2760 = vunpack.c.h.b16 %v2464
    %v2761 = vunpack.c.l.b16 %v2465
    %v2762 = vunpack.c.h.b16 %v2465
    %v2763 = vunpack.c.l.b16 %v2466
    %v2764 = vunpack.c.h.b16 %v2466
    %v2765 = vunpack.c.l.b16 %v2467
    %v2766 = vunpack.c.h.b16 %v2467
    %v2767 = vunpack.c.l.b16 %v2468
    %v2768 = vunpack.c.h.b16 %v2468
    %v2769 = vunpack.c.l.b16 %v2469
    %v2770 = vunpack.c.h.b16 %v2469
    %v2771 = vunpack.c.l.b16 %v2470
    %v2772 = vunpack.c.h.b16 %v2470
    %v2773 = vunpack.c.l.b16 %v2471
    %v2774 = vunpack.c.h.b16 %v2471
    %v2775 = vunpack.c.l.b16 %v2472
    %v2776 = vunpack.c.h.b16 %v2472
    %v2777 = vunpack.c.l.b16 %v2473
    %v2778 = vunpack.c.h.b16 %v2473
    %v2779 = vunpack.c.l.b16 %v2474
    %v2780 = vunpack.c.h.b16 %v2474
    %v2781 = vunpack.c.l.b16 %v2475
    %v2782 = vunpack.c.h.b16 %v2475
    %v2783 = vunpack.c.l.b16 %v2476
    %v2784 = vunpack.c.h.b16 %v2476
    %v2785 = vunpack.c.l.b16 %v2477
    %v2786 = vunpack.c.h.b16 %v2477
    %v2787 = vunpack.c.l.b16 %v2478
    %v2788 = vunpack.c.h.b16 %v2478
    %v2789 = vunpack.c.l.b16 %v2479
    %v2790 = vunpack.c.h.b16 %v2479
    %v2791 = vunpack.c.l.b16 %v2480
    %v2792 = vunpack.c.h.b16 %v2480
    %v2793 = vunpack.c.l.b16 %v2481
    %v2794 = vunpack.c.h.b16 %v2481
    %v2795 = vunpack.c.l.b16 %v2482
    %v2796 = vunpack.c.h.b16 %v2482
    %v2797 = vunpack.c.l.b16 %v2483
    %v2798 = vunpack.c.h.b16 %v2483
    %v2799 = vunpack.c.l.b16 %v2484
    %v2800 = vunpack.c.h.b16 %v2484
    %v2801 = vunpack.c.l.b16 %v2485
    %v2802 = vunpack.c.h.b16 %v2485
    %v2803 = vunpack.c.l.b16 %v2486
    %v2804 = vunpack.c.h.b16 %v2486
    %v2805 = vunpack.c.l.b16 %v2487
    %v2806 = vunpack.c.h.b16 %v2487
    %v2807 = vunpack.c.l.b16 %v2488
    %v2808 = vunpack.c.h.b16 %v2488
    %v2809 = vunpack.c.l.b16 %v2489
    %v2810 = vunpack.c.h.b16 %v2489
    %v2811 = vunpack.c.l.b16 %v2490
    %v2812 = vunpack.c.h.b16 %v2490
    %v2813 = vunpack.c.l.b16 %v2491
    %v2814 = vunpack.c.h.b16 %v2491
    %v2815 = vunpack.c.l.b16 %v2492
    %v2816 = vunpack.c.h.b16 %v2492
    %v2817 = vunpack.c.l.b16 %v2493
    %v2818 = vunpack.c.h.b16 %v2493
    %v2819 = vunpack.c.l.b16 %v2494
    %v2820 = vunpack.c.h.b16 %v2494
    %v2821 = vunpack.c.l.b16 %v2495
    %v2822 = vunpack.c.h.b16 %v2495
    %v2823 = vunpack.c.l.b16 %v2496
    %v2824 = vunpack.c.h.b16 %v2496
    %v2825 = vunpack.c.l.b16 %v2497
    %v2826 = vunpack.c.h.b16 %v2497
    %v2827 = vunpack.c.l.b16 %v2498
    %v2828 = vunpack.c.h.b16 %v2498
    %v2829 = vunpack.c.l.b16 %v2499
    %v2830 = vunpack.c.h.b16 %v2499
    %v2831 = vunpack.c.l.b16 %v2500
    %v2832 = vunpack.c.h.b16 %v2500
    %v2833 = vunpack.c.l.b16 %v2501
    %v2834 = vunpack.c.h.b16 %v2501
    %v2835 = vunpack.c.l.b16 %v2502
    %v2836 = vunpack.c.h.b16 %v2502
    %v2837 = vunpack.c.l.b16 %v2503
    %v2838 = vunpack.c.h.b16 %v2503
    %v2839 = vunpack.c.l.b16 %v2504
    %v2840 = vunpack.c.h.b16 %v2504
    %v2841 = vunpack.c.l.b16 %v2505
    %v2842 = vunpack.c.h.b16 %v2505
    %v2843 = vunpack.c.l.b16 %v2506
    %v2844 = vunpack.c.h.b16 %v2506
    %v2845 = vunpack.c.l.b16 %v2507
    %v2846 = vunpack.c.h.b16 %v2507
    %v2847 = vunpack.c.l.b16 %v2508
    %v2848 = vunpack.c.h.b16 %v2508
    %v2849 = vunpack.c.l.b16 %v2509
    %v2850 = vunpack.c.h.b16 %v2509
    %v2851 = vunpack.c.l.b16 %v2510
    %v2852 = vunpack.c.h.b16 %v2510
    %v2853 = vunpack.c.l.b16 %v2511
    %v2854 = vunpack.c.h.b16 %v2511
    %v2855 = vunpack.c.l.b16 %v2512
    %v2856 = vunpack.c.h.b16 %v2512
    %v2857 = vunpack.c.l.b16 %v2513
    %v2858 = vunpack.c.h.b16 %v2513
    %v2859 = vunpack.c.l.b16 %v2514
    %v2860 = vunpack.c.h.b16 %v2514
    %v2861 = vunpack.c.l.b16 %v2515
    %v2862 = vunpack.c.h.b16 %v2515
    %v2863 = vunpack.c.l.b16 %v2516
    %v2864 = vunpack.c.h.b16 %v2516
    %v2865 = vunpack.c.l.b16 %v2517
    %v2866 = vunpack.c.h.b16 %v2517
    %v2867 = vunpack.c.l.b16 %v2518
    %v2868 = vunpack.c.h.b16 %v2518
    %v2869 = vunpack.c.l.b16 %v2519
    %v2870 = vunpack.c.h.b16 %v2519
    %v2871 = vunpack.c.l.b16 %v2520
    %v2872 = vunpack.c.h.b16 %v2520
    %v2873 = vunpack.c.l.b16 %v2521
    %v2874 = vunpack.c.h.b16 %v2521
    %v2875 = vunpack.c.l.b16 %v2522
    %v2876 = vunpack.c.h.b16 %v2522
    %v2877 = vunpack.c.l.b16 %v2523
    %v2878 = vunpack.c.h.b16 %v2523
    %v2879 = vunpack.c.l.b16 %v2524
    %v2880 = vunpack.c.h.b16 %v2524
    %v2881 = vunpack.c.l.b16 %v2525
    %v2882 = vunpack.c.h.b16 %v2525
    %v2883 = vunpack.c.l.b16 %v2526
    %v2884 = vunpack.c.h.b16 %v2526
    %v2885 = vunpack.c.l.b16 %v2527
    %v2886 = vunpack.c.h.b16 %v2527
    %v2887 = vunpack.c.l.b16 %v2528
    %v2888 = vunpack.c.h.b16 %v2528
    %v2889 = vunpack.c.l.b16 %v2529
    %v2890 = vunpack.c.h.b16 %v2529
    %v2891 = vunpack.c.l.b16 %v2530
    %v2892 = vunpack.c.h.b16 %v2530
    %v2893 = vunpack.c.l.b16 %v2531
    %v2894 = vunpack.c.h.b16 %v2531
    %v2895 = vunpack.c.l.b16 %v2532
    %v2896 = vunpack.c.h.b16 %v2532
    %v2897 = vunpack.c.l.b16 %v2533
    %v2898 = vunpack.c.h.b16 %v2533
    %v2899 = vunpack.c.l.b16 %v2534
    %v2900 = vunpack.c.h.b16 %v2534
    %v2901 = vunpack.c.l.b16 %v2535
    %v2902 = vunpack.c.h.b16 %v2535
    %v2903 = vunpack.c.l.b16 %v2536
    %v2904 = vunpack.c.h.b16 %v2536
    %v2905 = vunpack.c.l.b16 %v2537
    %v2906 = vunpack.c.h.b16 %v2537
    %v2907 = vunpack.c.l.b16 %v2538
    %v2908 = vunpack.c.h.b16 %v2538
    %v2909 = vunpack.c.l.b16 %v2539
    %v2910 = vunpack.c.h.b16 %v2539
    %v2911 = vunpack.c.l.b16 %v2540
    %v2912 = vunpack.c.h.b16 %v2540
    %v2913 = vunpack.c.l.b16 %v2541
    %v2914 = vunpack.c.h.b16 %v2541
    %v2915 = vunpack.c.l.b16 %v2542
    %v2916 = vunpack.c.h.b16 %v2542
    %v2917 = vunpack.c.l.b16 %v2543
    %v2918 = vunpack.c.h.b16 %v2543
    %v2919 = vunpack.c.l.b16 %v2544
    %v2920 = vunpack.c.h.b16 %v2544
    %v2921 = vunpack.c.l.b16 %v2545
    %v2922 = vunpack.c.h.b16 %v2545
    %v2923 = vunpack.c.l.b16 %v2546
    %v2924 = vunpack.c.h.b16 %v2546
    %v2925 = vunpack.c.l.b16 %v2547
    %v2926 = vunpack.c.h.b16 %v2547
    %v2927 = vunpack.c.l.b16 %v2548
    %v2928 = vunpack.c.h.b16 %v2548
    %v2929 = vunpack.c.l.b16 %v2549
    %v2930 = vunpack.c.h.b16 %v2549
    %v2931 = vunpack.c.l.b16 %v2550
    %v2932 = vunpack.c.h.b16 %v2550
    %v2933 = vunpack.c.l.b16 %v2551
    %v2934 = vunpack.c.h.b16 %v2551
    %v2935 = vunpack.c.l.b16 %v2552
    %v2936 = vunpack.c.h.b16 %v2552
    %v2937 = vunpack.c.l.b16 %v2553
    %v2938 = vunpack.c.h.b16 %v2553
    %v2939 = vunpack.c.l.b16 %v2554
    %v2940 = vunpack.c.h.b16 %v2554
    %v2941 = vunpack.c.l.b16 %v2555
    %v2942 = vunpack.c.h.b16 %v2555
    %v2943 = vunpack.c.l.b16 %v2556
    %v2944 = vunpack.c.h.b16 %v2556
    %v2945 = vunpack.c.l.b16 %v2557
    %v2946 = vunpack.c.h.b16 %v2557
    %v2947 = vunpack.c.l.b16 %v2558
    %v2948 = vunpack.c.h.b16 %v2558
    %v2949 = vunpack.c.l.b16 %v2559
    %v2950 = vunpack.c.h.b16 %v2559
    %v2951 = vunpack.c.l.b16 %v2560
    %v2952 = vunpack.c.h.b16 %v2560
    %v2953 = vunpack.c.l.b16 %v2561
    %v2954 = vunpack.c.h.b16 %v2561
    %v2955 = vunpack.c.l.b16 %v2562
    %v2956 = vunpack.c.h.b16 %v2562
    %v2957 = vunpack.c.l.b16 %v2563
    %v2958 = vunpack.c.h.b16 %v2563
    %v2959 = vunpack.c.l.b16 %v2564
    %v2960 = vunpack.c.h.b16 %v2564
    %v2961 = vunpack.c.l.b16 %v2565
    %v2962 = vunpack.c.h.b16 %v2565
    %v2963 = vunpack.c.l.b16 %v2566
    %v2964 = vunpack.c.h.b16 %v2566
    %v2965 = vunpack.c.l.b16 %v2567
    %v2966 = vunpack.c.h.b16 %v2567
    %v2967 = vunpack.c.l.b16 %v2568
    %v2968 = vunpack.c.h.b16 %v2568
    %v2969 = vunpack.c.l.b16 %v2569
    %v2970 = vunpack.c.h.b16 %v2569
    %v2971 = vunpack.c.l.b16 %v2570
    %v2972 = vunpack.c.h.b16 %v2570
    %v2973 = vunpack.c.l.b16 %v2571
    %v2974 = vunpack.c.h.b16 %v2571
    %v2975 = vunpack.c.l.b16 %v2572
    %v2976 = vunpack.c.h.b16 %v2572
    %v2977 = vunpack.c.l.b16 %v2573
    %v2978 = vunpack.c.h.b16 %v2573
    %v2979 = vunpack.c.l.b16 %v2574
    %v2980 = vunpack.c.h.b16 %v2574
    %v2981 = vpack.c.b16 %v2729, %v2725
    %v2982 = vpack.c.b16 %v2730, %v2726
    %v2983 = vpack.c.b16 %v2731, %v2727
    %v2984 = vpack.c.b16 %v2732, %v2728
    %v2985 = vpack.c.b16 %v2737, %v2733
    %v2986 = vpack.c.b16 %v2738, %v2734
    %v2987 = vpack.c.b16 %v2739, %v2735
    %v2988 = vpack.c.b16 %v2740, %v2736
    %v2989 = vpack.c.b16 %v2745, %v2741
    %v2990 = vpack.c.b16 %v2746, %v2742
    %v2991 = vpack.c.b16 %v2747, %v2743
    %v2992 = vpack.c.b16 %v2748, %v2744
    %v2993 = vpack.c.b16 %v2753, %v2749
    %v2994 = vpack.c.b16 %v2754, %v2750
    %v2995 = vpack.c.b16 %v2755, %v2751
    %v2996 = vpack.c.b16 %v2756, %v2752
    %v2997 = vpack.c.b16 %v2761, %v2757
    %v2998 = vpack.c.b16 %v2762, %v2758
    %v2999 = vpack.c.b16 %v2763, %v2759
    %v3000 = vpack.c.b16 %v2764, %v2760
    %v3001 = vpack.c.b16 %v2769, %v2765
    %v3002 = vpack.c.b16 %v2770, %v2766
    %v3003 = vpack.c.b16 %v2771, %v2767
    %v3004 = vpack.c.b16 %v2772, %v2768
    %v3005 = vpack.c.b16 %v2777, %v2773
    %v3006 = vpack.c.b16 %v2778, %v2774
    %v3007 = vpack.c.b16 %v2779, %v2775
    %v3008 = vpack.c.b16 %v2780, %v2776
    %v3009 = vpack.c.b16 %v2785, %v2781
    %v3010 = vpack.c.b16 %v2786, %v2782
    %v3011 = vpack.c.b16 %v2787, %v2783
    %v3012 = vpack.c.b16 %v2788, %v2784
    %v3013 = vpack.c.b16 %v2793, %v2789
    %v3014 = vpack.c.b16 %v2794, %v2790
    %v3015 = vpack.c.b16 %v2795, %v2791
    %v3016 = vpack.c.b16 %v2796, %v2792
    %v3017 = vpack.c.b16 %v2801, %v2797
    %v3018 = vpack.c.b16 %v2802, %v2798
    %v3019 = vpack.c.b16 %v2803, %v2799
    %v3020 = vpack.c.b16 %v2804, %v2800
    %v3021 = vpack.c.b16 %v2809, %v2805
    %v3022 = vpack.c.b16 %v2810, %v2806
    %v3023 = vpack.c.b16 %v2811, %v2807
    %v3024 = vpack.c.b16 %v2812, %v2808
    %v3025 = vpack.c.b16 %v2817, %v2813
    %v3026 = vpack.c.b16 %v2818, %v2814
    %v3027 = vpack.c.b16 %v2819, %v2815
    %v3028 = vpack.c.b16 %v2820, %v2816
    %v3029 = vpack.c.b16 %v2825, %v2821
    %v3030 = vpack.c.b16 %v2826, %v2822
    %v3031 = vpack.c.b16 %v2827, %v2823
    %v3032 = vpack.c.b16 %v2828, %v2824
    %v3033 = vpack.c.b16 %v2833, %v2829
    %v3034 = vpack.c.b16 %v2834, %v2830
    %v3035 = vpack.c.b16 %v2835, %v2831
    %v3036 = vpack.c.b16 %v2836, %v2832
    %v3037 = vpack.c.b16 %v2841, %v2837
    %v3038 = vpack.c.b16 %v2842, %v2838
    %v3039 = vpack.c.b16 %v2843, %v2839
    %v3040 = vpack.c.b16 %v2844, %v2840
    %v3041 = vpack.c.b16 %v2849, %v2845
    %v3042 = vpack.c.b16 %v2850, %v2846
    %v3043 = vpack.c.b16 %v2851, %v2847
    %v3044 = vpack.c.b16 %v2852, %v2848
    %v3045 = vpack.c.b16 %v2857, %v2853
    %v3046 = vpack.c.b16 %v2858, %v2854
    %v3047 = vpack.c.b16 %v2859, %v2855
    %v3048 = vpack.c.b16 %v2860, %v2856
    %v3049 = vpack.c.b16 %v2865, %v2861
    %v3050 = vpack.c.b16 %v2866, %v2862
    %v3051 = vpack.c.b16 %v2867, %v2863
    %v3052 = vpack.c.b16 %v2868, %v2864
    %v3053 = vpack.c.b16 %v2873, %v2869
    %v3054 = vpack.c.b16 %v2874, %v2870
    %v3055 = vpack.c.b16 %v2875, %v2871
    %v3056 = vpack.c.b16 %v2876, %v2872
    %v3057 = vpack.c.b16 %v2881, %v2877
    %v3058 = vpack.c.b16 %v2882, %v2878
    %v3059 = vpack.c.b16 %v2883, %v2879
    %v3060 = vpack.c.b16 %v2884, %v2880
    %v3061 = vpack.c.b16 %v2889, %v2885
    %v3062 = vpack.c.b16 %v2890, %v2886
    %v3063 = vpack.c.b16 %v2891, %v2887
    %v3064 = vpack.c.b16 %v2892, %v2888
    %v3065 = vpack.c.b16 %v2897, %v2893
    %v3066 = vpack.c.b16 %v2898, %v2894
    %v3067 = vpack.c.b16 %v2899, %v2895
    %v3068 = vpack.c.b16 %v2900, %v2896
    %v3069 = vpack.c.b16 %v2905, %v2901
    %v3070 = vpack.c.b16 %v2906, %v2902
    %v3071 = vpack.c.b16 %v2907, %v2903
    %v3072 = vpack.c.b16 %v2908, %v2904
    %v3073 = vpack.c.b16 %v2913, %v2909
    %v3074 = vpack.c.b16 %v2914, %v2910
    %v3075 = vpack.c.b16 %v2915, %v2911
    %v3076 = vpack.c.b16 %v2916, %v2912
    %v3077 = vpack.c.b16 %v2921, %v2917
    %v3078 = vpack.c.b16 %v2922, %v2918
    %v3079 = vpack.c.b16 %v2923, %v2919
    %v3080 = vpack.c.b16 %v2924, %v2920
    %v3081 = vpack.c.b16 %v2929, %v2925
    %v3082 = vpack.c.b16 %v2930, %v2926
    %v3083 = vpack.c.b16 %v2931, %v2927
    %v3084 = vpack.c.b16 %v2932, %v2928
    %v3085 = vpack.c.b16 %v2937, %v2933
    %v3086 = vpack.c.b16 %v2938, %v2934
    %v3087 = vpack.c.b16 %v2939, %v2935
    %v3088 = vpack.c.b16 %v2940, %v2936
    %v3089 = vpack.c.b16 %v2945, %v2941
    %v3090 = vpack.c.b16 %v2946, %v2942
    %v3091 = vpack.c.b16 %v2947, %v2943
    %v3092 = vpack.c.b16 %v2948, %v2944
    %v3093 = vpack.c.b16 %v2953, %v2949
    %v3094 = vpack.c.b16 %v2954, %v2950
    %v3095 = vpack.c.b16 %v2955, %v2951
    %v3096 = vpack.c.b16 %v2956, %v2952
    %v3097 = vpack.c.b16 %v2961, %v2957
    %v3098 = vpack.c.b16 %v2962, %v2958
    %v3099 = vpack.c.b16 %v2963, %v2959
    %v3100 = vpack.c.b16 %v2964, %v2960
    %v3101 = vpack.c.b16 %v2969, %v2965
    %v3102 = vpack.c.b16 %v2970, %v2966
    %v3103 = vpack.c.b16 %v2971, %v2967
    %v3104 = vpack.c.b16 %v2972, %v2968
    %v3105 = vpack.c.b16 %v2977, %v2973
    %v3106 = vpack.c.b16 %v2978, %v2974
    %v3107 = vpack.c.b16 %v2979, %v2975
    %v3108 = vpack.c.b16 %v2980, %v2976
    %3237 = vmatprep.subr.bf16.mxu0 %v2982
    %3238 = vmatpush1.bf16.msra.mxu0 %v2981
    %3239 = vmatprep.subr.bf16.mxu0 %v2986
    %3240 = vmatpush1.bf16.msra.mxu0 %v2985
    %3241 = vmatprep.subr.bf16.mxu0 %v2990
    %3242 = vmatpush1.bf16.msra.mxu0 %v2989
    %3243 = vmatprep.subr.bf16.mxu0 %v2994
    %3244 = vmatpush1.bf16.msra.mxu0 %v2993
    %3245 = vmatprep.subr.bf16.mxu0 %v2998
    %3246 = vmatpush1.bf16.msra.mxu0 %v2997
    %3247 = vmatprep.subr.bf16.mxu0 %v3002
    %3248 = vmatpush1.bf16.msra.mxu0 %v3001
    %3249 = vmatprep.subr.bf16.mxu0 %v3006
    %3250 = vmatpush1.bf16.msra.mxu0 %v3005
    %3251 = vmatprep.subr.bf16.mxu0 %v3010
    %3252 = vmatpush1.bf16.msra.mxu0 %v3009
    %3253 = vmatprep.subr.bf16.mxu0 %v3014
    %3254 = vmatpush1.bf16.msra.mxu0 %v3013
    %3255 = vmatprep.subr.bf16.mxu0 %v3018
    %3256 = vmatpush1.bf16.msra.mxu0 %v3017
    %3257 = vmatprep.subr.bf16.mxu0 %v3022
    %3258 = vmatpush1.bf16.msra.mxu0 %v3021
    %3259 = vmatprep.subr.bf16.mxu0 %v3026
    %3260 = vmatpush1.bf16.msra.mxu0 %v3025
    %3261 = vmatprep.subr.bf16.mxu0 %v3030
    %3262 = vmatpush1.bf16.msra.mxu0 %v3029
    %3263 = vmatprep.subr.bf16.mxu0 %v3034
    %3264 = vmatpush1.bf16.msra.mxu0 %v3033
    %3265 = vmatprep.subr.bf16.mxu0 %v3038
    %3266 = vmatpush1.bf16.msra.mxu0 %v3037
    %3267 = vmatprep.subr.bf16.mxu0 %v3042
    %3268 = vmatpush1.bf16.msra.mxu0 %v3041
    %3269 = vmatprep.mubr.bf16.mxu0 %v2416
    %3270 = vmatmul.mubr.bf16.gmra.mrb[0].mxu0 %v2415
    %v3271 = vpop.f32.mrb[0].mxu0
    %v3272 = vadd.f32 %v2580, %v3271
    %v3273 = vpop.f32.mrb[0].mxu0
    %v3274 = vadd.f32 %v2584, %v3273
    %v3275 = vpop.f32.mrb[0].mxu0
    %v3276 = vadd.f32 %v2580, %v3275
    %v3277 = vpop.f32.mrb[0].mxu0
    %v3278 = vadd.f32 %v2584, %v3277
    %3279 = vmatprep.mubr.bf16.mxu0 %v2420
    %3280 = vmatmul.mubr.bf16.gmra.mrb[0].mxu0 %v2419
    %v3281 = vpop.f32.mrb[0].mxu0
    %v3282 = vadd.f32 %v2580, %v3281
    %v3283 = vpop.f32.mrb[0].mxu0
    %v3284 = vadd.f32 %v2584, %v3283
    %v3285 = vpop.f32.mrb[0].mxu0
    %v3286 = vadd.f32 %v2580, %v3285
    %v3287 = vpop.f32.mrb[0].mxu0
    %v3288 = vadd.f32 %v2584, %v3287
    %3289 = vmatprep.mubr.bf16.mxu0 %v2424
    %3290 = vmatmul.mubr.bf16.gmra.mrb[0].mxu0 %v2423
    %v3291 = vpop.f32.mrb[0].mxu0
    %v3292 = vadd.f32 %v2580, %v3291
    %v3293 = vpop.f32.mrb[0].mxu0
    %v3294 = vadd.f32 %v2584, %v3293
    %v3295 = vpop.f32.mrb[0].mxu0
    %v3296 = vadd.f32 %v2580, %v3295
    %v3297 = vpop.f32.mrb[0].mxu0
    %v3298 = vadd.f32 %v2584, %v3297
    %3299 = vmatprep.mubr.bf16.mxu0 %v2428
    %3300 = vmatmul.mubr.bf16.gmra.mrb[0].mxu0 %v2427
    %v3301 = vpop.f32.mrb[0].mxu0
    %v3302 = vadd.f32 %v2580, %v3301
    %v3303 = vpop.f32.mrb[0].mxu0
    %v3304 = vadd.f32 %v2584, %v3303
    %v3305 = vpop.f32.mrb[0].mxu0
    %v3306 = vadd.f32 %v2580, %v3305
    %v3307 = vpop.f32.mrb[0].mxu0
    %v3308 = vadd.f32 %v2584, %v3307
    %3309 = vmatprep.mubr.bf16.mxu0 %v2432
    %3310 = vmatmul.mubr.bf16.gmra.mrb[0].mxu0 %v2431
    %v3311 = vpop.f32.mrb[0].mxu0
    %v3312 = vadd.f32 %v2580, %v3311
    %v3313 = vpop.f32.mrb[0].mxu0
    %v3314 = vadd.f32 %v2584, %v3313
    %v3315 = vpop.f32.mrb[0].mxu0
    %v3316 = vadd.f32 %v2580, %v3315
    %v3317 = vpop.f32.mrb[0].mxu0
    %v3318 = vadd.f32 %v2584, %v3317
    %3319 = vmatprep.mubr.bf16.mxu0 %v2436
    %3320 = vmatmul.mubr.bf16.gmra.mrb[0].mxu0 %v2435
    %v3321 = vpop.f32.mrb[0].mxu0
    %v3322 = vadd.f32 %v2580, %v3321
    %v3323 = vpop.f32.mrb[0].mxu0
    %v3324 = vadd.f32 %v2584, %v3323
    %v3325 = vpop.f32.mrb[0].mxu0
    %v3326 = vadd.f32 %v2580, %v3325
    %v3327 = vpop.f32.mrb[0].mxu0
    %v3328 = vadd.f32 %v2584, %v3327
    %3329 = vmatprep.mubr.bf16.mxu0 %v2440
    %3330 = vmatmul.mubr.bf16.gmra.mrb[0].mxu0 %v2439
    %v3331 = vpop.f32.mrb[0].mxu0
    %v3332 = vadd.f32 %v2580, %v3331
    %v3333 = vpop.f32.mrb[0].mxu0
    %v3334 = vadd.f32 %v2584, %v3333
    %v3335 = vpop.f32.mrb[0].mxu0
    %v3336 = vadd.f32 %v2580, %v3335
    %v3337 = vpop.f32.mrb[0].mxu0
    %v3338 = vadd.f32 %v2584, %v3337
    %3339 = vmatprep.mubr.bf16.mxu0 %v2444
    %3340 = vmatmul.mubr.bf16.gmra.mrb[0].mxu0 %v2443
    %v3341 = vpop.f32.mrb[0].mxu0
    %v3342 = vadd.f32 %v2580, %v3341
    %v3343 = vpop.f32.mrb[0].mxu0
    %v3344 = vadd.f32 %v2584, %v3343
    %v3345 = vpop.f32.mrb[0].mxu0
    %v3346 = vadd.f32 %v2580, %v3345
    %v3347 = vpop.f32.mrb[0].mxu0
    %v3348 = vadd.f32 %v2584, %v3347
    %3349 = vdwg.mxu0
    %3350 = vmatprep.subr.bf16.mxu0 %v3046
    %3351 = vmatpush1.bf16.msra.mxu0 %v3045
    %3352 = vmatprep.subr.bf16.mxu0 %v3050
    %3353 = vmatpush1.bf16.msra.mxu0 %v3049
    %3354 = vmatprep.subr.bf16.mxu0 %v3054
    %3355 = vmatpush1.bf16.msra.mxu0 %v3053
    %3356 = vmatprep.subr.bf16.mxu0 %v3058
    %3357 = vmatpush1.bf16.msra.mxu0 %v3057
    %3358 = vmatprep.subr.bf16.mxu0 %v3062
    %3359 = vmatpush1.bf16.msra.mxu0 %v3061
    %3360 = vmatprep.subr.bf16.mxu0 %v3066
    %3361 = vmatpush1.bf16.msra.mxu0 %v3065
    %3362 = vmatprep.subr.bf16.mxu0 %v3070
    %3363 = vmatpush1.bf16.msra.mxu0 %v3069
    %3364 = vmatprep.subr.bf16.mxu0 %v3074
    %3365 = vmatpush1.bf16.msra.mxu0 %v3073
    %3366 = vmatprep.subr.bf16.mxu0 %v3078
    %3367 = vmatpush1.bf16.msra.mxu0 %v3077
    %3368 = vmatprep.subr.bf16.mxu0 %v3082
    %3369 = vmatpush1.bf16.msra.mxu0 %v3081
    %3370 = vmatprep.subr.bf16.mxu0 %v3086
    %3371 = vmatpush1.bf16.msra.mxu0 %v3085
    %3372 = vmatprep.subr.bf16.mxu0 %v3090
    %3373 = vmatpush1.bf16.msra.mxu0 %v3089
    %3374 = vmatprep.subr.bf16.mxu0 %v3094
    %3375 = vmatpush1.bf16.msra.mxu0 %v3093
    %3376 = vmatprep.subr.bf16.mxu0 %v3098
    %3377 = vmatpush1.bf16.msra.mxu0 %v3097
    %3378 = vmatprep.subr.bf16.mxu0 %v3102
    %3379 = vmatpush1.bf16.msra.mxu0 %v3101
    %3380 = vmatprep.subr.bf16.mxu0 %v3106
    %3381 = vmatpush1.bf16.msra.mxu0 %v3105
    %3382 = vmatprep.mubr.bf16.mxu0 %v2418
    %3383 = vmatmul.mubr.bf16.gmra.mrb[0].mxu0 %v2417
    %v3384 = vpop.f32.mrb[0].mxu0
    %v3385 = vadd.f32 %v3272, %v3384
    %v3386 = vpop.f32.mrb[0].mxu0
    %v3387 = vadd.f32 %v3274, %v3386
    %v3388 = vpop.f32.mrb[0].mxu0
    %v3389 = vadd.f32 %v3276, %v3388
    %v3390 = vpop.f32.mrb[0].mxu0
    %v3391 = vadd.f32 %v3278, %v3390
    %3392 = vmatprep.mubr.bf16.mxu0 %v2422
    %3393 = vmatmul.mubr.bf16.gmra.mrb[0].mxu0 %v2421
    %v3394 = vpop.f32.mrb[0].mxu0
    %v3395 = vadd.f32 %v3282, %v3394
    %v3396 = vpop.f32.mrb[0].mxu0
    %v3397 = vadd.f32 %v3284, %v3396
    %v3398 = vpop.f32.mrb[0].mxu0
    %v3399 = vadd.f32 %v3286, %v3398
    %v3400 = vpop.f32.mrb[0].mxu0
    %v3401 = vadd.f32 %v3288, %v3400
    %3402 = vmatprep.mubr.bf16.mxu0 %v2426
    %3403 = vmatmul.mubr.bf16.gmra.mrb[0].mxu0 %v2425
    %v3404 = vpop.f32.mrb[0].mxu0
    %v3405 = vadd.f32 %v3292, %v3404
    %v3406 = vpop.f32.mrb[0].mxu0
    %v3407 = vadd.f32 %v3294, %v3406
    %v3408 = vpop.f32.mrb[0].mxu0
    %v3409 = vadd.f32 %v3296, %v3408
    %v3410 = vpop.f32.mrb[0].mxu0
    %v3411 = vadd.f32 %v3298, %v3410
    %3412 = vmatprep.mubr.bf16.mxu0 %v2430
    %3413 = vmatmul.mubr.bf16.gmra.mrb[0].mxu0 %v2429
    %v3414 = vpop.f32.mrb[0].mxu0
    %v3415 = vadd.f32 %v3302, %v3414
    %v3416 = vpop.f32.mrb[0].mxu0
    %v3417 = vadd.f32 %v3304, %v3416
    %v3418 = vpop.f32.mrb[0].mxu0
    %v3419 = vadd.f32 %v3306, %v3418
    %v3420 = vpop.f32.mrb[0].mxu0
    %v3421 = vadd.f32 %v3308, %v3420
    %3422 = vmatprep.mubr.bf16.mxu0 %v2434
    %3423 = vmatmul.mubr.bf16.gmra.mrb[0].mxu0 %v2433
    %v3424 = vpop.f32.mrb[0].mxu0
    %v3425 = vadd.f32 %v3312, %v3424
    %v3426 = vpop.f32.mrb[0].mxu0
    %v3427 = vadd.f32 %v3314, %v3426
    %v3428 = vpop.f32.mrb[0].mxu0
    %v3429 = vadd.f32 %v3316, %v3428
    %v3430 = vpop.f32.mrb[0].mxu0
    %v3431 = vadd.f32 %v3318, %v3430
    %3432 = vmatprep.mubr.bf16.mxu0 %v2438
    %3433 = vmatmul.mubr.bf16.gmra.mrb[0].mxu0 %v2437
    %v3434 = vpop.f32.mrb[0].mxu0
    %v3435 = vadd.f32 %v3322, %v3434
    %v3436 = vpop.f32.mrb[0].mxu0
    %v3437 = vadd.f32 %v3324, %v3436
    %v3438 = vpop.f32.mrb[0].mxu0
    %v3439 = vadd.f32 %v3326, %v3438
    %v3440 = vpop.f32.mrb[0].mxu0
    %v3441 = vadd.f32 %v3328, %v3440
    %3442 = vmatprep.mubr.bf16.mxu0 %v2442
    %3443 = vmatmul.mubr.bf16.gmra.mrb[0].mxu0 %v2441
    %v3444 = vpop.f32.mrb[0].mxu0
    %v3445 = vadd.f32 %v3332, %v3444
    %v3446 = vpop.f32.mrb[0].mxu0
    %v3447 = vadd.f32 %v3334, %v3446
    %v3448 = vpop.f32.mrb[0].mxu0
    %v3449 = vadd.f32 %v3336, %v3448
    %v3450 = vpop.f32.mrb[0].mxu0
    %v3451 = vadd.f32 %v3338, %v3450
    %3452 = vmatprep.mubr.bf16.mxu0 %v2446
    %3453 = vmatmul.mubr.bf16.gmra.mrb[0].mxu0 %v2445
    %v3454 = vpop.f32.mrb[0].mxu0
    %v3455 = vadd.f32 %v3342, %v3454
    %v3456 = vpop.f32.mrb[0].mxu0
    %v3457 = vadd.f32 %v3344, %v3456
    %v3458 = vpop.f32.mrb[0].mxu0
    %v3459 = vadd.f32 %v3346, %v3458
    %v3460 = vpop.f32.mrb[0].mxu0
    %v3461 = vadd.f32 %v3348, %v3460
    %3462 = vdwg.mxu0
    %3463 = vmatprep.subr.bf16.mxu0 %v2984
    %3464 = vmatpush1.bf16.msra.mxu0 %v2983
    %3465 = vmatprep.subr.bf16.mxu0 %v2988
    %3466 = vmatpush1.bf16.msra.mxu0 %v2987
    %3467 = vmatprep.subr.bf16.mxu0 %v2992
    %3468 = vmatpush1.bf16.msra.mxu0 %v2991
    %3469 = vmatprep.subr.bf16.mxu0 %v2996
    %3470 = vmatpush1.bf16.msra.mxu0 %v2995
    %3471 = vmatprep.subr.bf16.mxu0 %v3000
    %3472 = vmatpush1.bf16.msra.mxu0 %v2999
    %3473 = vmatprep.subr.bf16.mxu0 %v3004
    %3474 = vmatpush1.bf16.msra.mxu0 %v3003
    %3475 = vmatprep.subr.bf16.mxu0 %v3008
    %3476 = vmatpush1.bf16.msra.mxu0 %v3007
    %3477 = vmatprep.subr.bf16.mxu0 %v3012
    %3478 = vmatpush1.bf16.msra.mxu0 %v3011
    %3479 = vmatprep.subr.bf16.mxu0 %v3016
    %3480 = vmatpush1.bf16.msra.mxu0 %v3015
    %3481 = vmatprep.subr.bf16.mxu0 %v3020
    %3482 = vmatpush1.bf16.msra.mxu0 %v3019
    %3483 = vmatprep.subr.bf16.mxu0 %v3024
    %3484 = vmatpush1.bf16.msra.mxu0 %v3023
    %3485 = vmatprep.subr.bf16.mxu0 %v3028
    %3486 = vmatpush1.bf16.msra.mxu0 %v3027
    %3487 = vmatprep.subr.bf16.mxu0 %v3032
    %3488 = vmatpush1.bf16.msra.mxu0 %v3031
    %3489 = vmatprep.subr.bf16.mxu0 %v3036
    %3490 = vmatpush1.bf16.msra.mxu0 %v3035
    %3491 = vmatprep.subr.bf16.mxu0 %v3040
    %3492 = vmatpush1.bf16.msra.mxu0 %v3039
    %3493 = vmatprep.subr.bf16.mxu0 %v3044
    %3494 = vmatpush1.bf16.msra.mxu0 %v3043
    %3495 = vmatprep.mubr.bf16.mxu0 %v2416
    %3496 = vmatmul.mubr.bf16.gmra.mrb[0].mxu0 %v2415
    %v3497 = vpop.f32.mrb[0].mxu0
    %v3498 = vadd.f32 %v2588, %v3497
    %v3499 = vpop.f32.mrb[0].mxu0
    %v3500 = vadd.f32 %v2592, %v3499
    %v3501 = vpop.f32.mrb[0].mxu0
    %v3502 = vadd.f32 %v2588, %v3501
    %v3503 = vpop.f32.mrb[0].mxu0
    %v3504 = vadd.f32 %v2592, %v3503
    %3505 = vmatprep.mubr.bf16.mxu0 %v2420
    %3506 = vmatmul.mubr.bf16.gmra.mrb[0].mxu0 %v2419
    %v3507 = vpop.f32.mrb[0].mxu0
    %v3508 = vadd.f32 %v2588, %v3507
    %v3509 = vpop.f32.mrb[0].mxu0
    %v3510 = vadd.f32 %v2592, %v3509
    %v3511 = vpop.f32.mrb[0].mxu0
    %v3512 = vadd.f32 %v2588, %v3511
    %v3513 = vpop.f32.mrb[0].mxu0
    %v3514 = vadd.f32 %v2592, %v3513
    %3515 = vmatprep.mubr.bf16.mxu0 %v2424
    %3516 = vmatmul.mubr.bf16.gmra.mrb[0].mxu0 %v2423
    %v3517 = vpop.f32.mrb[0].mxu0
    %v3518 = vadd.f32 %v2588, %v3517
    %v3519 = vpop.f32.mrb[0].mxu0
    %v3520 = vadd.f32 %v2592, %v3519
    %v3521 = vpop.f32.mrb[0].mxu0
    %v3522 = vadd.f32 %v2588, %v3521
    %v3523 = vpop.f32.mrb[0].mxu0
    %v3524 = vadd.f32 %v2592, %v3523
    %3525 = vmatprep.mubr.bf16.mxu0 %v2428
    %3526 = vmatmul.mubr.bf16.gmra.mrb[0].mxu0 %v2427
    %v3527 = vpop.f32.mrb[0].mxu0
    %v3528 = vadd.f32 %v2588, %v3527
    %v3529 = vpop.f32.mrb[0].mxu0
    %v3530 = vadd.f32 %v2592, %v3529
    %v3531 = vpop.f32.mrb[0].mxu0
    %v3532 = vadd.f32 %v2588, %v3531
    %v3533 = vpop.f32.mrb[0].mxu0
    %v3534 = vadd.f32 %v2592, %v3533
    %3535 = vmatprep.mubr.bf16.mxu0 %v2432
    %3536 = vmatmul.mubr.bf16.gmra.mrb[0].mxu0 %v2431
    %v3537 = vpop.f32.mrb[0].mxu0
    %v3538 = vadd.f32 %v2588, %v3537
    %v3539 = vpop.f32.mrb[0].mxu0
    %v3540 = vadd.f32 %v2592, %v3539
    %v3541 = vpop.f32.mrb[0].mxu0
    %v3542 = vadd.f32 %v2588, %v3541
    %v3543 = vpop.f32.mrb[0].mxu0
    %v3544 = vadd.f32 %v2592, %v3543
    %3545 = vmatprep.mubr.bf16.mxu0 %v2436
    %3546 = vmatmul.mubr.bf16.gmra.mrb[0].mxu0 %v2435
    %v3547 = vpop.f32.mrb[0].mxu0
    %v3548 = vadd.f32 %v2588, %v3547
    %v3549 = vpop.f32.mrb[0].mxu0
    %v3550 = vadd.f32 %v2592, %v3549
    %v3551 = vpop.f32.mrb[0].mxu0
    %v3552 = vadd.f32 %v2588, %v3551
    %v3553 = vpop.f32.mrb[0].mxu0
    %v3554 = vadd.f32 %v2592, %v3553
    %3555 = vmatprep.mubr.bf16.mxu0 %v2440
    %3556 = vmatmul.mubr.bf16.gmra.mrb[0].mxu0 %v2439
    %v3557 = vpop.f32.mrb[0].mxu0
    %v3558 = vadd.f32 %v2588, %v3557
    %v3559 = vpop.f32.mrb[0].mxu0
    %v3560 = vadd.f32 %v2592, %v3559
    %v3561 = vpop.f32.mrb[0].mxu0
    %v3562 = vadd.f32 %v2588, %v3561
    %v3563 = vpop.f32.mrb[0].mxu0
    %v3564 = vadd.f32 %v2592, %v3563
    %3565 = vmatprep.mubr.bf16.mxu0 %v2444
    %3566 = vmatmul.mubr.bf16.gmra.mrb[0].mxu0 %v2443
    %v3567 = vpop.f32.mrb[0].mxu0
    %v3568 = vadd.f32 %v2588, %v3567
    %v3569 = vpop.f32.mrb[0].mxu0
    %v3570 = vadd.f32 %v2592, %v3569
    %v3571 = vpop.f32.mrb[0].mxu0
    %v3572 = vadd.f32 %v2588, %v3571
    %v3573 = vpop.f32.mrb[0].mxu0
    %v3574 = vadd.f32 %v2592, %v3573
    %3575 = vdwg.mxu0
    %3576 = vmatprep.subr.bf16.mxu0 %v3048
    %3577 = vmatpush1.bf16.msra.mxu0 %v3047
    %3578 = vmatprep.subr.bf16.mxu0 %v3052
    %3579 = vmatpush1.bf16.msra.mxu0 %v3051
    %3580 = vmatprep.subr.bf16.mxu0 %v3056
    %3581 = vmatpush1.bf16.msra.mxu0 %v3055
    %3582 = vmatprep.subr.bf16.mxu0 %v3060
    %3583 = vmatpush1.bf16.msra.mxu0 %v3059
    %3584 = vmatprep.subr.bf16.mxu0 %v3064
    %3585 = vmatpush1.bf16.msra.mxu0 %v3063
    %3586 = vmatprep.subr.bf16.mxu0 %v3068
    %3587 = vmatpush1.bf16.msra.mxu0 %v3067
    %3588 = vmatprep.subr.bf16.mxu0 %v3072
    %3589 = vmatpush1.bf16.msra.mxu0 %v3071
    %3590 = vmatprep.subr.bf16.mxu0 %v3076
    %3591 = vmatpush1.bf16.msra.mxu0 %v3075
    %3592 = vmatprep.subr.bf16.mxu0 %v3080
    %3593 = vmatpush1.bf16.msra.mxu0 %v3079
    %3594 = vmatprep.subr.bf16.mxu0 %v3084
    %3595 = vmatpush1.bf16.msra.mxu0 %v3083
    %3596 = vmatprep.subr.bf16.mxu0 %v3088
    %3597 = vmatpush1.bf16.msra.mxu0 %v3087
    %3598 = vmatprep.subr.bf16.mxu0 %v3092
    %3599 = vmatpush1.bf16.msra.mxu0 %v3091
    %3600 = vmatprep.subr.bf16.mxu0 %v3096
    %3601 = vmatpush1.bf16.msra.mxu0 %v3095
    %3602 = vmatprep.subr.bf16.mxu0 %v3100
    %3603 = vmatpush1.bf16.msra.mxu0 %v3099
    %3604 = vmatprep.subr.bf16.mxu0 %v3104
    %3605 = vmatpush1.bf16.msra.mxu0 %v3103
    %3606 = vmatprep.subr.bf16.mxu0 %v3108
    %3607 = vmatpush1.bf16.msra.mxu0 %v3107
    %3608 = vmatprep.mubr.bf16.mxu0 %v2418
    %3609 = vmatmul.mubr.bf16.gmra.mrb[0].mxu0 %v2417
    %v3610 = vpop.f32.mrb[0].mxu0
    %v3611 = vadd.f32 %v3498, %v3610
    %v3612 = vpop.f32.mrb[0].mxu0
    %v3613 = vadd.f32 %v3500, %v3612
    %v3614 = vpop.f32.mrb[0].mxu0
    %v3615 = vadd.f32 %v3502, %v3614
    %v3616 = vpop.f32.mrb[0].mxu0
    %v3617 = vadd.f32 %v3504, %v3616
    %3618 = vmatprep.mubr.bf16.mxu0 %v2422
    %3619 = vmatmul.mubr.bf16.gmra.mrb[0].mxu0 %v2421
    %v3620 = vpop.f32.mrb[0].mxu0
    %v3621 = vadd.f32 %v3508, %v3620
    %v3622 = vpop.f32.mrb[0].mxu0
    %v3623 = vadd.f32 %v3510, %v3622
    %v3624 = vpop.f32.mrb[0].mxu0
    %v3625 = vadd.f32 %v3512, %v3624
    %v3626 = vpop.f32.mrb[0].mxu0
    %v3627 = vadd.f32 %v3514, %v3626
    %3628 = vmatprep.mubr.bf16.mxu0 %v2426
    %3629 = vmatmul.mubr.bf16.gmra.mrb[0].mxu0 %v2425
    %v3630 = vpop.f32.mrb[0].mxu0
    %v3631 = vadd.f32 %v3518, %v3630
    %v3632 = vpop.f32.mrb[0].mxu0
    %v3633 = vadd.f32 %v3520, %v3632
    %v3634 = vpop.f32.mrb[0].mxu0
    %v3635 = vadd.f32 %v3522, %v3634
    %v3636 = vpop.f32.mrb[0].mxu0
    %v3637 = vadd.f32 %v3524, %v3636
    %3638 = vmatprep.mubr.bf16.mxu0 %v2430
    %3639 = vmatmul.mubr.bf16.gmra.mrb[0].mxu0 %v2429
    %v3640 = vpop.f32.mrb[0].mxu0
    %v3641 = vadd.f32 %v3528, %v3640
    %v3642 = vpop.f32.mrb[0].mxu0
    %v3643 = vadd.f32 %v3530, %v3642
    %v3644 = vpop.f32.mrb[0].mxu0
    %v3645 = vadd.f32 %v3532, %v3644
    %v3646 = vpop.f32.mrb[0].mxu0
    %v3647 = vadd.f32 %v3534, %v3646
    %3648 = vmatprep.mubr.bf16.mxu0 %v2434
    %3649 = vmatmul.mubr.bf16.gmra.mrb[0].mxu0 %v2433
    %v3650 = vpop.f32.mrb[0].mxu0
    %v3651 = vadd.f32 %v3538, %v3650
    %v3652 = vpop.f32.mrb[0].mxu0
    %v3653 = vadd.f32 %v3540, %v3652
    %v3654 = vpop.f32.mrb[0].mxu0
    %v3655 = vadd.f32 %v3542, %v3654
    %v3656 = vpop.f32.mrb[0].mxu0
    %v3657 = vadd.f32 %v3544, %v3656
    %3658 = vmatprep.mubr.bf16.mxu0 %v2438
    %3659 = vmatmul.mubr.bf16.gmra.mrb[0].mxu0 %v2437
    %v3660 = vpop.f32.mrb[0].mxu0
    %v3661 = vadd.f32 %v3548, %v3660
    %v3662 = vpop.f32.mrb[0].mxu0
    %v3663 = vadd.f32 %v3550, %v3662
    %v3664 = vpop.f32.mrb[0].mxu0
    %v3665 = vadd.f32 %v3552, %v3664
    %v3666 = vpop.f32.mrb[0].mxu0
    %v3667 = vadd.f32 %v3554, %v3666
    %3668 = vmatprep.mubr.bf16.mxu0 %v2442
    %3669 = vmatmul.mubr.bf16.gmra.mrb[0].mxu0 %v2441
    %v3670 = vpop.f32.mrb[0].mxu0
    %v3671 = vadd.f32 %v3558, %v3670
    %v3672 = vpop.f32.mrb[0].mxu0
    %v3673 = vadd.f32 %v3560, %v3672
    %v3674 = vpop.f32.mrb[0].mxu0
    %v3675 = vadd.f32 %v3562, %v3674
    %v3676 = vpop.f32.mrb[0].mxu0
    %v3677 = vadd.f32 %v3564, %v3676
    %3678 = vmatprep.mubr.bf16.mxu0 %v2446
    %3679 = vmatmul.mubr.bf16.gmra.mrb[0].mxu0 %v2445
    %v3680 = vpop.f32.mrb[0].mxu0
    %v3681 = vadd.f32 %v3568, %v3680
    %v3682 = vpop.f32.mrb[0].mxu0
    %v3683 = vadd.f32 %v3570, %v3682
    %v3684 = vpop.f32.mrb[0].mxu0
    %v3685 = vadd.f32 %v3572, %v3684
    %v3686 = vpop.f32.mrb[0].mxu0
    %v3687 = vadd.f32 %v3574, %v3686
    %3688 = vdwg.mxu0
    %v3689 = vmax.f32 %v3385, 0.0
    %v3690 = vmax.f32 %v3387, 0.0
    %v3691 = vmax.f32 %v3611, 0.0
    %v3692 = vmax.f32 %v3613, 0.0
    %v3693 = vmax.f32 %v3389, 0.0
    %v3694 = vmax.f32 %v3391, 0.0
    %v3695 = vmax.f32 %v3615, 0.0
    %v3696 = vmax.f32 %v3617, 0.0
    %v3697 = vmax.f32 %v3395, 0.0
    %v3698 = vmax.f32 %v3397, 0.0
    %v3699 = vmax.f32 %v3621, 0.0
    %v3700 = vmax.f32 %v3623, 0.0
    %v3701 = vmax.f32 %v3399, 0.0
    %v3702 = vmax.f32 %v3401, 0.0
    %v3703 = vmax.f32 %v3625, 0.0
    %v3704 = vmax.f32 %v3627, 0.0
    %v3705 = vmax.f32 %v3405, 0.0
    %v3706 = vmax.f32 %v3407, 0.0
    %v3707 = vmax.f32 %v3631, 0.0
    %v3708 = vmax.f32 %v3633, 0.0
    %v3709 = vmax.f32 %v3409, 0.0
    %v3710 = vmax.f32 %v3411, 0.0
    %v3711 = vmax.f32 %v3635, 0.0
    %v3712 = vmax.f32 %v3637, 0.0
    %v3713 = vmax.f32 %v3415, 0.0
    %v3714 = vmax.f32 %v3417, 0.0
    %v3715 = vmax.f32 %v3641, 0.0
    %v3716 = vmax.f32 %v3643, 0.0
    %v3717 = vmax.f32 %v3419, 0.0
    %v3718 = vmax.f32 %v3421, 0.0
    %v3719 = vmax.f32 %v3645, 0.0
    %v3720 = vmax.f32 %v3647, 0.0
    %v3721 = vmax.f32 %v3425, 0.0
    %v3722 = vmax.f32 %v3427, 0.0
    %v3723 = vmax.f32 %v3651, 0.0
    %v3724 = vmax.f32 %v3653, 0.0
    %v3725 = vmax.f32 %v3429, 0.0
    %v3726 = vmax.f32 %v3431, 0.0
    %v3727 = vmax.f32 %v3655, 0.0
    %v3728 = vmax.f32 %v3657, 0.0
    %v3729 = vmax.f32 %v3435, 0.0
    %v3730 = vmax.f32 %v3437, 0.0
    %v3731 = vmax.f32 %v3661, 0.0
    %v3732 = vmax.f32 %v3663, 0.0
    %v3733 = vmax.f32 %v3439, 0.0
    %v3734 = vmax.f32 %v3441, 0.0
    %v3735 = vmax.f32 %v3665, 0.0
    %v3736 = vmax.f32 %v3667, 0.0
    %v3737 = vmax.f32 %v3445, 0.0
    %v3738 = vmax.f32 %v3447, 0.0
    %v3739 = vmax.f32 %v3671, 0.0
    %v3740 = vmax.f32 %v3673, 0.0
    %v3741 = vmax.f32 %v3449, 0.0
    %v3742 = vmax.f32 %v3451, 0.0
    %v3743 = vmax.f32 %v3675, 0.0
    %v3744 = vmax.f32 %v3677, 0.0
    %v3745 = vmax.f32 %v3455, 0.0
    %v3746 = vmax.f32 %v3457, 0.0
    %v3747 = vmax.f32 %v3681, 0.0
    %v3748 = vmax.f32 %v3683, 0.0
    %v3749 = vmax.f32 %v3459, 0.0
    %v3750 = vmax.f32 %v3461, 0.0
    %v3751 = vmax.f32 %v3685, 0.0
    %v3752 = vmax.f32 %v3687, 0.0
    %v3753 = vpack.c.bf16 %v3693, %v3689
    %v3754 = vpack.c.bf16 %v3694, %v3690
    %v3755 = vpack.c.bf16 %v3695, %v3691
    %v3756 = vpack.c.bf16 %v3696, %v3692
    %v3757 = vpack.c.bf16 %v3701, %v3697
    %v3758 = vpack.c.bf16 %v3702, %v3698
    %v3759 = vpack.c.bf16 %v3703, %v3699
    %v3760 = vpack.c.bf16 %v3704, %v3700
    %v3761 = vpack.c.bf16 %v3709, %v3705
    %v3762 = vpack.c.bf16 %v3710, %v3706
    %v3763 = vpack.c.bf16 %v3711, %v3707
    %v3764 = vpack.c.bf16 %v3712, %v3708
    %v3765 = vpack.c.bf16 %v3717, %v3713
    %v3766 = vpack.c.bf16 %v3718, %v3714
    %v3767 = vpack.c.bf16 %v3719, %v3715
    %v3768 = vpack.c.bf16 %v3720, %v3716
    %v3769 = vpack.c.bf16 %v3725, %v3721
    %v3770 = vpack.c.bf16 %v3726, %v3722
    %v3771 = vpack.c.bf16 %v3727, %v3723
    %v3772 = vpack.c.bf16 %v3728, %v3724
    %v3773 = vpack.c.bf16 %v3733, %v3729
    %v3774 = vpack.c.bf16 %v3734, %v3730
    %v3775 = vpack.c.bf16 %v3735, %v3731
    %v3776 = vpack.c.bf16 %v3736, %v3732
    %v3777 = vpack.c.bf16 %v3741, %v3737
    %v3778 = vpack.c.bf16 %v3742, %v3738
    %v3779 = vpack.c.bf16 %v3743, %v3739
    %v3780 = vpack.c.bf16 %v3744, %v3740
    %v3781 = vpack.c.bf16 %v3749, %v3745
    %v3782 = vpack.c.bf16 %v3750, %v3746
    %v3783 = vpack.c.bf16 %v3751, %v3747
    %v3784 = vpack.c.bf16 %v3752, %v3748
    %v3785 = vld [vmem:[#allocation5] sm:$0xf]
    %v3786 = vld [vmem:[#allocation5 + $0x4] sm:$0xf]
    %v3787 = vld [vmem:[#allocation5 + $0x8] sm:$0xf]
    %v3788 = vld [vmem:[#allocation5 + $0xc] sm:$0xf]
    %v3789 = vld [vmem:[#allocation5 + $0x10] sm:$0xf]
    %v3790 = vld [vmem:[#allocation5 + $0x14] sm:$0xf]
    %v3791 = vld [vmem:[#allocation5 + $0x18] sm:$0xf]
    %v3792 = vld [vmem:[#allocation5 + $0x1c] sm:$0xf]
    %v3793 = vld [vmem:[#allocation5 + $0x20] sm:$0xf]
    %v3794 = vld [vmem:[#allocation5 + $0x24] sm:$0xf]
    %v3795 = vld [vmem:[#allocation5 + $0x28] sm:$0xf]
    %v3796 = vld [vmem:[#allocation5 + $0x2c] sm:$0xf]
    %v3797 = vld [vmem:[#allocation5 + $0x30] sm:$0xf]
    %v3798 = vld [vmem:[#allocation5 + $0x34] sm:$0xf]
    %v3799 = vld [vmem:[#allocation5 + $0x38] sm:$0xf]
    %v3800 = vld [vmem:[#allocation5 + $0x3c] sm:$0xf]
    %v3801 = vld [vmem:[#allocation5 + $0x40] sm:$0xf]
    %v3802 = vld [vmem:[#allocation5 + $0x44] sm:$0xf]
    %v3803 = vld [vmem:[#allocation5 + $0x48] sm:$0xf]
    %v3804 = vld [vmem:[#allocation5 + $0x4c] sm:$0xf]
    %v3805 = vld [vmem:[#allocation5 + $0x50] sm:$0xf]
    %v3806 = vld [vmem:[#allocation5 + $0x54] sm:$0xf]
    %v3807 = vld [vmem:[#allocation5 + $0x58] sm:$0xf]
    %v3808 = vld [vmem:[#allocation5 + $0x5c] sm:$0xf]
    %v3809 = vld [vmem:[#allocation5 + $0x60] sm:$0xf]
    %v3810 = vld [vmem:[#allocation5 + $0x64] sm:$0xf]
    %v3811 = vld [vmem:[#allocation5 + $0x68] sm:$0xf]
    %v3812 = vld [vmem:[#allocation5 + $0x6c] sm:$0xf]
    %v3813 = vld [vmem:[#allocation5 + $0x70] sm:$0xf]
    %v3814 = vld [vmem:[#allocation5 + $0x74] sm:$0xf]
    %v3815 = vld [vmem:[#allocation5 + $0x78] sm:$0xf]
    %v3816 = vld [vmem:[#allocation5 + $0x7c] sm:$0xf]
    %v3817 = vld [vmem:[#allocation5 + $0x80] sm:$0xf]
    %v3818 = vld [vmem:[#allocation5 + $0x84] sm:$0xf]
    %v3819 = vld [vmem:[#allocation5 + $0x88] sm:$0xf]
    %v3820 = vld [vmem:[#allocation5 + $0x8c] sm:$0xf]
    %v3821 = vld [vmem:[#allocation5 + $0x90] sm:$0xf]
    %v3822 = vld [vmem:[#allocation5 + $0x94] sm:$0xf]
    %v3823 = vld [vmem:[#allocation5 + $0x98] sm:$0xf]
    %v3824 = vld [vmem:[#allocation5 + $0x9c] sm:$0xf]
    %v3825 = vld [vmem:[#allocation5 + $0xa0] sm:$0xf]
    %v3826 = vld [vmem:[#allocation5 + $0xa4] sm:$0xf]
    %v3827 = vld [vmem:[#allocation5 + $0xa8] sm:$0xf]
    %v3828 = vld [vmem:[#allocation5 + $0xac] sm:$0xf]
    %v3829 = vld [vmem:[#allocation5 + $0xb0] sm:$0xf]
    %v3830 = vld [vmem:[#allocation5 + $0xb4] sm:$0xf]
    %v3831 = vld [vmem:[#allocation5 + $0xb8] sm:$0xf]
    %v3832 = vld [vmem:[#allocation5 + $0xbc] sm:$0xf]
    %v3833 = vld [vmem:[#allocation5 + $0xc0] sm:$0xf]
    %v3834 = vld [vmem:[#allocation5 + $0xc4] sm:$0xf]
    %v3835 = vld [vmem:[#allocation5 + $0xc8] sm:$0xf]
    %v3836 = vld [vmem:[#allocation5 + $0xcc] sm:$0xf]
    %v3837 = vld [vmem:[#allocation5 + $0xd0] sm:$0xf]
    %v3838 = vld [vmem:[#allocation5 + $0xd4] sm:$0xf]
    %v3839 = vld [vmem:[#allocation5 + $0xd8] sm:$0xf]
    %v3840 = vld [vmem:[#allocation5 + $0xdc] sm:$0xf]
    %v3841 = vld [vmem:[#allocation5 + $0xe0] sm:$0xf]
    %v3842 = vld [vmem:[#allocation5 + $0xe4] sm:$0xf]
    %v3843 = vld [vmem:[#allocation5 + $0xe8] sm:$0xf]
    %v3844 = vld [vmem:[#allocation5 + $0xec] sm:$0xf]
    %v3845 = vld [vmem:[#allocation5 + $0xf0] sm:$0xf]
    %v3846 = vld [vmem:[#allocation5 + $0xf4] sm:$0xf]
    %v3847 = vld [vmem:[#allocation5 + $0xf8] sm:$0xf]
    %v3848 = vld [vmem:[#allocation5 + $0xfc] sm:$0xf]
    %v3849 = vld [vmem:[%s6] sm:$0x1]
    %v3851 = vlaneseq
    %v3852 = vshrl.u32 %v3851, 7
    %v3853 = vsub.s32 0, %v3852
    %v3854 = vrot.slane %v3849, %v3853
    %v3920 = vunpack.c.l.b16 %v3785
    %v3921 = vunpack.c.l.b16 %v3786
    %v3922 = vunpack.c.l.b16 %v3787
    %v3923 = vunpack.c.l.b16 %v3788
    %v3924 = vunpack.c.l.b16 %v3789
    %v3925 = vunpack.c.l.b16 %v3790
    %v3926 = vunpack.c.l.b16 %v3791
    %v3927 = vunpack.c.l.b16 %v3792
    %v3928 = vunpack.c.l.b16 %v3793
    %v3929 = vunpack.c.l.b16 %v3794
    %v3930 = vunpack.c.l.b16 %v3795
    %v3931 = vunpack.c.l.b16 %v3796
    %v3932 = vunpack.c.l.b16 %v3797
    %v3933 = vunpack.c.l.b16 %v3798
    %v3934 = vunpack.c.l.b16 %v3799
    %v3935 = vunpack.c.l.b16 %v3800
    %v3936 = vunpack.c.l.b16 %v3801
    %v3937 = vunpack.c.l.b16 %v3802
    %v3938 = vunpack.c.l.b16 %v3803
    %v3939 = vunpack.c.l.b16 %v3804
    %v3940 = vunpack.c.l.b16 %v3805
    %v3941 = vunpack.c.l.b16 %v3806
    %v3942 = vunpack.c.l.b16 %v3807
    %v3943 = vunpack.c.l.b16 %v3808
    %v3944 = vunpack.c.l.b16 %v3809
    %v3945 = vunpack.c.l.b16 %v3810
    %v3946 = vunpack.c.l.b16 %v3811
    %v3947 = vunpack.c.l.b16 %v3812
    %v3948 = vunpack.c.l.b16 %v3813
    %v3949 = vunpack.c.l.b16 %v3814
    %v3950 = vunpack.c.l.b16 %v3815
    %v3951 = vunpack.c.l.b16 %v3816
    %v3952 = vunpack.c.l.b16 %v3817
    %v3953 = vunpack.c.l.b16 %v3818
    %v3954 = vunpack.c.l.b16 %v3819
    %v3955 = vunpack.c.l.b16 %v3820
    %v3956 = vunpack.c.l.b16 %v3821
    %v3957 = vunpack.c.l.b16 %v3822
    %v3958 = vunpack.c.l.b16 %v3823
    %v3959 = vunpack.c.l.b16 %v3824
    %v3960 = vunpack.c.l.b16 %v3825
    %v3961 = vunpack.c.l.b16 %v3826
    %v3962 = vunpack.c.l.b16 %v3827
    %v3963 = vunpack.c.l.b16 %v3828
    %v3964 = vunpack.c.l.b16 %v3829
    %v3965 = vunpack.c.l.b16 %v3830
    %v3966 = vunpack.c.l.b16 %v3831
    %v3967 = vunpack.c.l.b16 %v3832
    %v3968 = vunpack.c.l.b16 %v3833
    %v3969 = vunpack.c.l.b16 %v3834
    %v3970 = vunpack.c.l.b16 %v3835
    %v3971 = vunpack.c.l.b16 %v3836
    %v3972 = vunpack.c.l.b16 %v3837
    %v3973 = vunpack.c.l.b16 %v3838
    %v3974 = vunpack.c.l.b16 %v3839
    %v3975 = vunpack.c.l.b16 %v3840
    %v3976 = vunpack.c.l.b16 %v3841
    %v3977 = vunpack.c.l.b16 %v3842
    %v3978 = vunpack.c.l.b16 %v3843
    %v3979 = vunpack.c.l.b16 %v3844
    %v3980 = vunpack.c.l.b16 %v3845
    %v3981 = vunpack.c.l.b16 %v3846
    %v3982 = vunpack.c.l.b16 %v3847
    %v3983 = vunpack.c.l.b16 %v3848
    %v3984 = vpack.c.b16 %v3921, %v3920
    %v3985 = vpack.c.b16 %v3923, %v3922
    %v3986 = vpack.c.b16 %v3925, %v3924
    %v3987 = vpack.c.b16 %v3927, %v3926
    %v3988 = vpack.c.b16 %v3929, %v3928
    %v3989 = vpack.c.b16 %v3931, %v3930
    %v3990 = vpack.c.b16 %v3933, %v3932
    %v3991 = vpack.c.b16 %v3935, %v3934
    %v3992 = vpack.c.b16 %v3937, %v3936
    %v3993 = vpack.c.b16 %v3939, %v3938
    %v3994 = vpack.c.b16 %v3941, %v3940
    %v3995 = vpack.c.b16 %v3943, %v3942
    %v3996 = vpack.c.b16 %v3945, %v3944
    %v3997 = vpack.c.b16 %v3947, %v3946
    %v3998 = vpack.c.b16 %v3949, %v3948
    %v3999 = vpack.c.b16 %v3951, %v3950
    %v4000 = vpack.c.b16 %v3953, %v3952
    %v4001 = vpack.c.b16 %v3955, %v3954
    %v4002 = vpack.c.b16 %v3957, %v3956
    %v4003 = vpack.c.b16 %v3959, %v3958
    %v4004 = vpack.c.b16 %v3961, %v3960
    %v4005 = vpack.c.b16 %v3963, %v3962
    %v4006 = vpack.c.b16 %v3965, %v3964
    %v4007 = vpack.c.b16 %v3967, %v3966
    %v4008 = vpack.c.b16 %v3969, %v3968
    %v4009 = vpack.c.b16 %v3971, %v3970
    %v4010 = vpack.c.b16 %v3973, %v3972
    %v4011 = vpack.c.b16 %v3975, %v3974
    %v4012 = vpack.c.b16 %v3977, %v3976
    %v4013 = vpack.c.b16 %v3979, %v3978
    %v4014 = vpack.c.b16 %v3981, %v3980
    %v4015 = vpack.c.b16 %v3983, %v3982
    %4048 = vmatprep.subr.bf16.mxu0 0
    %4049 = vmatpush1.bf16.msra.mxu0 %v3984
    %4050 = vmatprep.subr.bf16.mxu0 0
    %4051 = vmatpush1.bf16.msra.mxu0 %v3985
    %4052 = vmatprep.subr.bf16.mxu0 0
    %4053 = vmatpush1.bf16.msra.mxu0 %v3986
    %4054 = vmatprep.subr.bf16.mxu0 0
    %4055 = vmatpush1.bf16.msra.mxu0 %v3987
    %4056 = vmatprep.subr.bf16.mxu0 0
    %4057 = vmatpush1.bf16.msra.mxu0 %v3988
    %4058 = vmatprep.subr.bf16.mxu0 0
    %4059 = vmatpush1.bf16.msra.mxu0 %v3989
    %4060 = vmatprep.subr.bf16.mxu0 0
    %4061 = vmatpush1.bf16.msra.mxu0 %v3990
    %4062 = vmatprep.subr.bf16.mxu0 0
    %4063 = vmatpush1.bf16.msra.mxu0 %v3991
    %4064 = vmatprep.subr.bf16.mxu0 0
    %4065 = vmatpush1.bf16.msra.mxu0 %v3992
    %4066 = vmatprep.subr.bf16.mxu0 0
    %4067 = vmatpush1.bf16.msra.mxu0 %v3993
    %4068 = vmatprep.subr.bf16.mxu0 0
    %4069 = vmatpush1.bf16.msra.mxu0 %v3994
    %4070 = vmatprep.subr.bf16.mxu0 0
    %4071 = vmatpush1.bf16.msra.mxu0 %v3995
    %4072 = vmatprep.subr.bf16.mxu0 0
    %4073 = vmatpush1.bf16.msra.mxu0 %v3996
    %4074 = vmatprep.subr.bf16.mxu0 0
    %4075 = vmatpush1.bf16.msra.mxu0 %v3997
    %4076 = vmatprep.subr.bf16.mxu0 0
    %4077 = vmatpush1.bf16.msra.mxu0 %v3998
    %4078 = vmatprep.subr.bf16.mxu0 0
    %4079 = vmatpush1.bf16.msra.mxu0 %v3999
    %4080 = vmatprep.mubr.bf16.mxu0 %v3754
    %4081 = vmatmul.mubr.bf16.gmra.mrb[0].mxu0 %v3753
    %v4082 = vpop.f32.mrb[0].mxu0
    %v4083 = vadd.f32 %v3854, %v4082
    %v4084 = vpop.f32.mrb[0].mxu0
    %v4085 = vpop.f32.mrb[0].mxu0
    %v4086 = vadd.f32 %v3854, %v4085
    %v4087 = vpop.f32.mrb[0].mxu0
    %4088 = vmatprep.mubr.bf16.mxu0 %v3758
    %4089 = vmatmul.mubr.bf16.gmra.mrb[0].mxu0 %v3757
    %v4090 = vpop.f32.mrb[0].mxu0
    %v4091 = vadd.f32 %v3854, %v4090
    %v4092 = vpop.f32.mrb[0].mxu0
    %v4093 = vpop.f32.mrb[0].mxu0
    %v4094 = vadd.f32 %v3854, %v4093
    %v4095 = vpop.f32.mrb[0].mxu0
    %4096 = vmatprep.mubr.bf16.mxu0 %v3762
    %4097 = vmatmul.mubr.bf16.gmra.mrb[0].mxu0 %v3761
    %v4098 = vpop.f32.mrb[0].mxu0
    %v4099 = vadd.f32 %v3854, %v4098
    %v4100 = vpop.f32.mrb[0].mxu0
    %v4101 = vpop.f32.mrb[0].mxu0
    %v4102 = vadd.f32 %v3854, %v4101
    %v4103 = vpop.f32.mrb[0].mxu0
    %4104 = vmatprep.mubr.bf16.mxu0 %v3766
    %4105 = vmatmul.mubr.bf16.gmra.mrb[0].mxu0 %v3765
    %v4106 = vpop.f32.mrb[0].mxu0
    %v4107 = vadd.f32 %v3854, %v4106
    %v4108 = vpop.f32.mrb[0].mxu0
    %v4109 = vpop.f32.mrb[0].mxu0
    %v4110 = vadd.f32 %v3854, %v4109
    %v4111 = vpop.f32.mrb[0].mxu0
    %4112 = vmatprep.mubr.bf16.mxu0 %v3770
    %4113 = vmatmul.mubr.bf16.gmra.mrb[0].mxu0 %v3769
    %v4114 = vpop.f32.mrb[0].mxu0
    %v4115 = vadd.f32 %v3854, %v4114
    %v4116 = vpop.f32.mrb[0].mxu0
    %v4117 = vpop.f32.mrb[0].mxu0
    %v4118 = vadd.f32 %v3854, %v4117
    %v4119 = vpop.f32.mrb[0].mxu0
    %4120 = vmatprep.mubr.bf16.mxu0 %v3774
    %4121 = vmatmul.mubr.bf16.gmra.mrb[0].mxu0 %v3773
    %v4122 = vpop.f32.mrb[0].mxu0
    %v4123 = vadd.f32 %v3854, %v4122
    %v4124 = vpop.f32.mrb[0].mxu0
    %v4125 = vpop.f32.mrb[0].mxu0
    %v4126 = vadd.f32 %v3854, %v4125
    %v4127 = vpop.f32.mrb[0].mxu0
    %4128 = vmatprep.mubr.bf16.mxu0 %v3778
    %4129 = vmatmul.mubr.bf16.gmra.mrb[0].mxu0 %v3777
    %v4130 = vpop.f32.mrb[0].mxu0
    %v4131 = vadd.f32 %v3854, %v4130
    %v4132 = vpop.f32.mrb[0].mxu0
    %v4133 = vpop.f32.mrb[0].mxu0
    %v4134 = vadd.f32 %v3854, %v4133
    %v4135 = vpop.f32.mrb[0].mxu0
    %4136 = vmatprep.mubr.bf16.mxu0 %v3782
    %4137 = vmatmul.mubr.bf16.gmra.mrb[0].mxu0 %v3781
    %v4138 = vpop.f32.mrb[0].mxu0
    %v4139 = vadd.f32 %v3854, %v4138
    %v4140 = vpop.f32.mrb[0].mxu0
    %v4141 = vpop.f32.mrb[0].mxu0
    %v4142 = vadd.f32 %v3854, %v4141
    %v4143 = vpop.f32.mrb[0].mxu0
    %4144 = vdwg.mxu0
    %4145 = vmatprep.subr.bf16.mxu0 0
    %4146 = vmatpush1.bf16.msra.mxu0 %v4000
    %4147 = vmatprep.subr.bf16.mxu0 0
    %4148 = vmatpush1.bf16.msra.mxu0 %v4001
    %4149 = vmatprep.subr.bf16.mxu0 0
    %4150 = vmatpush1.bf16.msra.mxu0 %v4002
    %4151 = vmatprep.subr.bf16.mxu0 0
    %4152 = vmatpush1.bf16.msra.mxu0 %v4003
    %4153 = vmatprep.subr.bf16.mxu0 0
    %4154 = vmatpush1.bf16.msra.mxu0 %v4004
    %4155 = vmatprep.subr.bf16.mxu0 0
    %4156 = vmatpush1.bf16.msra.mxu0 %v4005
    %4157 = vmatprep.subr.bf16.mxu0 0
    %4158 = vmatpush1.bf16.msra.mxu0 %v4006
    %4159 = vmatprep.subr.bf16.mxu0 0
    %4160 = vmatpush1.bf16.msra.mxu0 %v4007
    %4161 = vmatprep.subr.bf16.mxu0 0
    %4162 = vmatpush1.bf16.msra.mxu0 %v4008
    %4163 = vmatprep.subr.bf16.mxu0 0
    %4164 = vmatpush1.bf16.msra.mxu0 %v4009
    %4165 = vmatprep.subr.bf16.mxu0 0
    %4166 = vmatpush1.bf16.msra.mxu0 %v4010
    %4167 = vmatprep.subr.bf16.mxu0 0
    %4168 = vmatpush1.bf16.msra.mxu0 %v4011
    %4169 = vmatprep.subr.bf16.mxu0 0
    %4170 = vmatpush1.bf16.msra.mxu0 %v4012
    %4171 = vmatprep.subr.bf16.mxu0 0
    %4172 = vmatpush1.bf16.msra.mxu0 %v4013
    %4173 = vmatprep.subr.bf16.mxu0 0
    %4174 = vmatpush1.bf16.msra.mxu0 %v4014
    %4175 = vmatprep.subr.bf16.mxu0 0
    %4176 = vmatpush1.bf16.msra.mxu0 %v4015
    %4177 = vmatprep.mubr.bf16.mxu0 %v3756
    %4178 = vmatmul.mubr.bf16.gmra.mrb[0].mxu0 %v3755
    %v4179 = vpop.f32.mrb[0].mxu0
    %v4180 = vadd.f32 %v4083, %v4179
    %v4181 = vpop.f32.mrb[0].mxu0
    %v4182 = vpop.f32.mrb[0].mxu0
    %v4183 = vadd.f32 %v4086, %v4182
    %v4184 = vpop.f32.mrb[0].mxu0
    %4185 = vmatprep.mubr.bf16.mxu0 %v3760
    %4186 = vmatmul.mubr.bf16.gmra.mrb[0].mxu0 %v3759
    %v4187 = vpop.f32.mrb[0].mxu0
    %v4188 = vadd.f32 %v4091, %v4187
    %v4189 = vpop.f32.mrb[0].mxu0
    %v4190 = vpop.f32.mrb[0].mxu0
    %v4191 = vadd.f32 %v4094, %v4190
    %v4192 = vpop.f32.mrb[0].mxu0
    %4193 = vmatprep.mubr.bf16.mxu0 %v3764
    %4194 = vmatmul.mubr.bf16.gmra.mrb[0].mxu0 %v3763
    %v4195 = vpop.f32.mrb[0].mxu0
    %v4196 = vadd.f32 %v4099, %v4195
    %v4197 = vpop.f32.mrb[0].mxu0
    %v4198 = vpop.f32.mrb[0].mxu0
    %v4199 = vadd.f32 %v4102, %v4198
    %v4200 = vpop.f32.mrb[0].mxu0
    %4201 = vmatprep.mubr.bf16.mxu0 %v3768
    %4202 = vmatmul.mubr.bf16.gmra.mrb[0].mxu0 %v3767
    %v4203 = vpop.f32.mrb[0].mxu0
    %v4204 = vadd.f32 %v4107, %v4203
    %v4205 = vpop.f32.mrb[0].mxu0
    %v4206 = vpop.f32.mrb[0].mxu0
    %v4207 = vadd.f32 %v4110, %v4206
    %v4208 = vpop.f32.mrb[0].mxu0
    %4209 = vmatprep.mubr.bf16.mxu0 %v3772
    %4210 = vmatmul.mubr.bf16.gmra.mrb[0].mxu0 %v3771
    %v4211 = vpop.f32.mrb[0].mxu0
    %v4212 = vadd.f32 %v4115, %v4211
    %v4213 = vpop.f32.mrb[0].mxu0
    %v4214 = vpop.f32.mrb[0].mxu0
    %v4215 = vadd.f32 %v4118, %v4214
    %v4216 = vpop.f32.mrb[0].mxu0
    %4217 = vmatprep.mubr.bf16.mxu0 %v3776
    %4218 = vmatmul.mubr.bf16.gmra.mrb[0].mxu0 %v3775
    %v4219 = vpop.f32.mrb[0].mxu0
    %v4220 = vadd.f32 %v4123, %v4219
    %v4221 = vpop.f32.mrb[0].mxu0
    %v4222 = vpop.f32.mrb[0].mxu0
    %v4223 = vadd.f32 %v4126, %v4222
    %v4224 = vpop.f32.mrb[0].mxu0
    %4225 = vmatprep.mubr.bf16.mxu0 %v3780
    %4226 = vmatmul.mubr.bf16.gmra.mrb[0].mxu0 %v3779
    %v4227 = vpop.f32.mrb[0].mxu0
    %v4228 = vadd.f32 %v4131, %v4227
    %v4229 = vpop.f32.mrb[0].mxu0
    %v4230 = vpop.f32.mrb[0].mxu0
    %v4231 = vadd.f32 %v4134, %v4230
    %v4232 = vpop.f32.mrb[0].mxu0
    %4233 = vmatprep.mubr.bf16.mxu0 %v3784
    %4234 = vmatmul.mubr.bf16.gmra.mrb[0].mxu0 %v3783
    %v4235 = vpop.f32.mrb[0].mxu0
    %v4236 = vadd.f32 %v4139, %v4235
    %v4237 = vpop.f32.mrb[0].mxu0
    %v4238 = vpop.f32.mrb[0].mxu0
    %v4239 = vadd.f32 %v4142, %v4238
    %v4240 = vpop.f32.mrb[0].mxu0
    %4241 = vdwg.mxu0
    %4242 = vst [vmem:[#allocation7] sm:$0xff] %v4180
    %4243 = vst [vmem:[#allocation7 + $0x8] sm:$0xff] %v4183
    %4244 = vst [vmem:[#allocation7 + $0x10] sm:$0xff] %v4188
    %4245 = vst [vmem:[#allocation7 + $0x18] sm:$0xff] %v4191
    %4246 = vst [vmem:[#allocation7 + $0x20] sm:$0xff] %v4196
    %4247 = vst [vmem:[#allocation7 + $0x28] sm:$0xff] %v4199
    %4248 = vst [vmem:[#allocation7 + $0x30] sm:$0xff] %v4204
    %4249 = vst [vmem:[#allocation7 + $0x38] sm:$0xff] %v4207
    %4250 = vst [vmem:[#allocation7 + $0x40] sm:$0xff] %v4212
    %4251 = vst [vmem:[#allocation7 + $0x48] sm:$0xff] %v4215
    %4252 = vst [vmem:[#allocation7 + $0x50] sm:$0xff] %v4220
    %4253 = vst [vmem:[#allocation7 + $0x58] sm:$0xff] %v4223
    %4254 = vst [vmem:[#allocation7 + $0x60] sm:$0xff] %v4228
    %4255 = vst [vmem:[#allocation7 + $0x68] sm:$0xff] %v4231
    %4256 = vst [vmem:[#allocation7 + $0x70] sm:$0xff] %v4236
    %4257 = vst [vmem:[#allocation7 + $0x78] sm:$0xff] %v4239
    // Predicated region
    $region38: #{tpu_custom_call.1} parent=1 // pred_check
      _
    $region39: #{tpu_custom_call.1} parent=1 // pred_check_branch
      %4259 = sbr.rel (0) target = $region41
    $region40: #{tpu_custom_call.1} parent=1 // pred_region
      %s4261 = ssub.s32 2048, 2048
      %4262 = vsyncadd [#allocation4], %s4261
      %s4263 = sshll.u32 [#allocation7], 4
      %s4264 = int_to_ptr.vmem [resolvable:$true] %s4263
      %4269 = dma.vmem_to_hbm [thread:$0]  %s4264, 2048, %s7, [#allocation4], 128, 128, 8
    $region41: #{tpu_custom_call.1} parent=1 // pred_fallthru
      _
    // Predicated region
    $region42: #{tpu_custom_call.1} parent=1 // pred_check
      _
    $region43: #{tpu_custom_call.1} parent=1 // pred_check_branch
      %4271 = sbr.rel (0) target = $region45
    $region44: #{tpu_custom_call.1} parent=1 // pred_region
      %4272 = dma.done [#allocation4], 2048
    $region45: #{tpu_custom_call.1} parent=1 // pred_fallthru
      _
    %4273 = vsyncpa [#allocation3], 1
    %4274 = vsyncpa [#allocation6], 1
    %4275 = vsyncpa [#allocation4], 1

</llo_original>
